<compile_context>
chip_gen: v7x
topology: tpu7x:2x2x1
jax: 0.10.0
libtpu: 0.0.40
codegen_flags: <defaults>
</compile_context>

<pallas_src>
import jax
import jax.numpy as jnp
from jax.experimental import pallas as pl
from jax.experimental.pallas import tpu as pltpu


def _round_up(x, m):
    return (x + m - 1) // m * m


def _vmem_cap_bytes():
    """Generation-aware VMEM budget (80% of physical, 64 MiB fallback)."""
    phys = 64 * 1024 * 1024
    try:
        info = pltpu.get_tpu_info()
        phys = int(getattr(info, "vmem_capacity_bytes", phys))
    except Exception:
        pass
    return int(phys * 0.8)


# --------------------------------------------------------------------------
# Kernel. grid = (num_layers, num_row_tiles); rows is the fast (inner) axis.
#   alpha_ref : SMEM (L+1,) f32
#   x_ref     : VMEM (Np, Dp) bf16, constant block index (read once at (0,0))
#   a_ref     : VMEM (tm, Np) bf16 row tile of A_hat (resident when tm == Np)
#   out_ref   : VMEM (Np, Dp) f32 resident accumulator (written to HBM once)
#   h0/h1     : VMEM (Np, Dp) bf16 ping-pong embedding buffers
# --------------------------------------------------------------------------
def lightgcn_kernel(alpha_ref, x_ref, a_ref, out_ref, h0_ref, h1_ref):
    l = pl.program_id(0)                       # layer index (sequential)
    i = pl.program_id(1)                       # node row-tile index
    tm = a_ref.shape[0]
    row0 = pl.multiple_of(i * tm, tm)
    rows = pl.ds(row0, tm)

    # ---- layer-0 / tile-0 init: h_0 := x, out := alpha[0] * x (resident) ----
    @pl.when(jnp.logical_and(l == 0, i == 0))
    def _():
        xv = x_ref[...]                                    # bf16
        h0_ref[...] = xv
        out_ref[...] = alpha_ref[0] * xv.astype(jnp.float32)

    # ---- one row tile of h_{l+1} = A_hat @ h_l  (bf16 MXU, f32 accumulate) ----
    def _step(h_src_ref, h_dst_ref):
        h_new = jnp.dot(a_ref[...], h_src_ref[...],
                        preferred_element_type=jnp.float32)     # (tm, Dp) f32
        h_dst_ref[rows, :] = h_new.astype(h_dst_ref.dtype)      # bf16 for next layer
        out_ref[rows, :] += alpha_ref[l + 1] * h_new            # f32 VPU math

    # Ping-pong by layer parity (no dynamic slot index, no end-of-layer copy).
    @pl.when(l % 2 == 0)
    def _():
        _step(h0_ref, h1_ref)

    @pl.when(l % 2 == 1)
    def _():
        _step(h1_ref, h0_ref)


# --------------------------------------------------------------------------
# Dense propagation wrapper.
# --------------------------------------------------------------------------
def lightgcn_propagate(x, a_hat, alpha, num_layers, *, force_tm=None):
    n, d = x.shape
    alpha = jnp.asarray(alpha, jnp.float32)
    if num_layers == 0:
        return alpha[0] * x.astype(jnp.float32)

    # Lane-dense padding (multiples of 128 on node and feature axes).
    np_ = _round_up(n, 128)
    dp_ = _round_up(d, 128)
    xp = jnp.zeros((np_, dp_), jnp.bfloat16).at[:n, :d].set(x.astype(jnp.bfloat16))
    ap = jnp.zeros((np_, np_), jnp.bfloat16).at[:n, :n].set(a_hat.astype(jnp.bfloat16))

    cap = _vmem_cap_bytes()
    margin = 4 * 1024 * 1024

    def need_bytes(tm):
        return (2 * tm * np_ * 2        # A_hat row tiles (bf16, double buffered)
                + 2 * np_ * dp_ * 2     # x (bf16)
                + 2 * np_ * dp_ * 4     # resident f32 output accumulator
                + 2 * np_ * dp_ * 2     # h ping-pong scratch (bf16)
                + margin)

    if force_tm is not None:
        assert np_ % force_tm == 0
        tm = force_tm
    else:
        tm = None
        # Prefer full residency of A_hat (tm == Np), then the largest row tile.
        for cand in (np_, 512, 256, 128):
            if cand <= np_ and np_ % cand == 0 and need_bytes(cand) <= cap:
                tm = cand
                break
        if tm is None:
            # TODO(synk): add a K-tiled path (third grid axis over Np chunks of
            # A_hat) for graphs whose (128, Np) row tiles no longer fit VMEM.
            raise ValueError(
                f"LightGCN Pallas kernel: padded graph ({np_} nodes) exceeds the "
                f"VMEM budget ({cap} bytes); K-tiling is not implemented.")

    grid = (num_layers, np_ // tm)

    out = pl.pallas_call(
        lightgcn_kernel,
        out_shape=jax.ShapeDtypeStruct((np_, dp_), jnp.float32),
        grid_spec=pltpu.PrefetchScalarGridSpec(
            num_scalar_prefetch=0,
            grid=grid,
            in_specs=[
                # alpha coefficients: tiny scalar table in SMEM.
                pl.BlockSpec(memory_space=pltpu.MemorySpace.SMEM),
                # x: small bf16 block, constant index (only read at step (0,0)).
                pl.BlockSpec((np_, dp_), lambda l, i: (0, 0)),
                # A_hat: (tm, Np) row tiles; constant index (resident) if tm==Np.
                pl.BlockSpec((tm, np_), lambda l, i: (i, 0)),
            ],
            # Output is the resident f32 accumulator: constant block index, so
            # it stays in VMEM across the whole grid and is written back once.
            out_specs=pl.BlockSpec((np_, dp_), lambda l, i: (0, 0)),
            scratch_shapes=[
                pltpu.VMEM((np_, dp_), jnp.bfloat16),   # h ping-pong slot 0
                pltpu.VMEM((np_, dp_), jnp.bfloat16),   # h ping-pong slot 1
            ],
        ),
        # Both axes sequential: layer l+1 depends on every row tile of layer l
        # (shared h scratch + shared resident output accumulator).
        # TODO(synk): on v7x, shard row tiles across the 2 TensorCores with
        # per-core A row blocks and a per-layer h exchange (core_map + barrier).
        compiler_params=pltpu.CompilerParams(
            dimension_semantics=("arbitrary", "arbitrary"),
            vmem_limit_bytes=int(cap)),
    )(alpha, xp, ap)

    return out[:n, :d]


# --------------------------------------------------------------------------
# Host-side graph preprocessing (gcn_norm densified) + full forward.
# --------------------------------------------------------------------------
def build_norm_adj(edge_index, num_nodes, edge_weight=None):
    """Dense D^-1/2 A D^-1/2 from a COO edge list (src -> dst messages)."""
    # TODO(synk): sparse scatter/gather message passing has no clean Pallas
    # equivalent; the normalized adjacency is densified on the host instead.
    src, dst = edge_index[0], edge_index[1]
    if edge_weight is None:
        edge_weight = jnp.ones(src.shape, dtype=jnp.float32)
    a = jnp.zeros((num_nodes, num_nodes), jnp.float32)
    a = a.at[dst, src].add(edge_weight.astype(jnp.float32))
    deg = a.sum(axis=1)
    dis = jnp.where(deg > 0, 1.0 / jnp.sqrt(jnp.maximum(deg, 1e-12)), 0.0)
    return a * dis[:, None] * dis[None, :]


def lightgcn_forward(x, edge_index, alpha=None, *, num_layers, edge_weight=None,
                     force_tm=None):
    n = x.shape[0]
    if alpha is None:
        alpha = jnp.full((num_layers + 1,), 1.0 / (num_layers + 1), jnp.float32)
    a_hat = build_norm_adj(edge_index, n, edge_weight)
    return lightgcn_propagate(x, a_hat, alpha, num_layers, force_tm=force_tm)


# --------------------------------------------------------------------------
# References.
# --------------------------------------------------------------------------
def lightgcn_reference(x, a_hat, alpha, num_layers):
    out = alpha[0] * x
    h = x
    for i in range(num_layers):
        h = a_hat @ h
        out = out + alpha[i + 1] * h
    return out


def lightgcn_reference_bf16(x, a_hat, alpha, num_layers):
    # Same bf16-operand / f32-accumulate recipe the kernel uses.
    a_b = a_hat.astype(jnp.bfloat16)
    h_b = x.astype(jnp.bfloat16)
    out = alpha[0] * h_b.astype(jnp.float32)
    for i in range(num_layers):
        h = jnp.dot(a_b, h_b, preferred_element_type=jnp.float32)
        out = out + alpha[i + 1] * h
        h_b = h.astype(jnp.bfloat16)
    return out


if __name__ == "__main__":
    # Small-but-realistic LightGCN shapes: 500 nodes (padded to 512),
    # 64-dim embeddings (padded to 128), 3 propagation layers.
    num_nodes, dim, num_layers, num_edges = 500, 64, 3, 2000

    key = jax.random.PRNGKey(0)
    k_x, k_e = jax.random.split(key)
    x = jax.random.normal(k_x, (num_nodes, dim), dtype=jnp.float32)
    e = jax.random.randint(k_e, (2, num_edges), 0, num_nodes, dtype=jnp.int32)
    edge_index = jnp.concatenate([e, e[::-1]], axis=1)      # undirected graph
    alpha = jnp.full((num_layers + 1,), 1.0 / (num_layers + 1), jnp.float32)

    a_hat = build_norm_adj(edge_index, num_nodes)
    y_bf16 = lightgcn_reference_bf16(x, a_hat, alpha, num_layers)
    y_f32 = lightgcn_reference(x, a_hat, alpha, num_layers)

    # Auto path: A_hat fits VMEM -> fully resident, grid = (num_layers, 1).
    y = lightgcn_forward(x, edge_index, alpha, num_layers=num_layers)
    jax.block_until_ready(y)
    assert y.shape == (num_nodes, dim)
    assert jnp.allclose(y, y_bf16, atol=2e-3, rtol=2e-3)
    assert jnp.allclose(y, y_f32, atol=5e-2, rtol=5e-2)

    # Streamed path (forced tm=128): exercises row tiling + partial-row stores.
    y_tiled = lightgcn_forward(x, edge_index, alpha, num_layers=num_layers,
                               force_tm=128)
    jax.block_until_ready(y_tiled)
    assert jnp.allclose(y_tiled, y_bf16, atol=2e-3, rtol=2e-3)
    assert jnp.allclose(y_tiled, y_f32, atol=5e-2, rtol=5e-2)

    print("KERNEL_OK")
</pallas_src>

<mosaic_0001>
module attributes {stable_mosaic.version = 11 : i64} {
  func.func @lightgcn_kernel(%arg0: i32, %arg1: i32, %arg2: memref<4xf32, #tpu.memory_space<smem>>, %arg3: memref<512x128xbf16, #tpu.memory_space<vmem>>, %arg4: memref<512x512xbf16, #tpu.memory_space<vmem>>, %arg5: memref<512x128xf32, #tpu.memory_space<vmem>>, %arg6: memref<512x128xbf16, #tpu.memory_space<vmem>>, %arg7: memref<512x128xbf16, #tpu.memory_space<vmem>>) attributes {dimension_semantics = [#tpu.dimension_semantics<arbitrary>, #tpu.dimension_semantics<arbitrary>], iteration_bounds = array<i64: 3, 1>, scalar_prefetch = 0 : i64, scratch_operands = 2 : i64, tpu.core_type = #tpu.core_type<tc>, window_params = [{transform_indices = @transform_0, window_bounds = array<i64: 4>}, {pipeline_mode = #tpu.pipeline_mode<synchronous>, transform_indices = @transform_1, window_bounds = array<i64: 512, 128>}, {transform_indices = @transform_2, window_bounds = array<i64: 512, 512>}, {pipeline_mode = #tpu.pipeline_mode<synchronous>, transform_indices = @transform_3, window_bounds = array<i64: 512, 128>}]} {
    %c512_i32 = arith.constant 512 : i32
    %0 = arith.muli %arg1, %c512_i32 : i32
    %1 = tpu.assume_multiple %0, 512 : i32
    %c0_i32 = arith.constant 0 : i32
    %2 = arith.cmpi eq, %arg0, %c0_i32 : i32
    %c0_i32_0 = arith.constant 0 : i32
    %3 = arith.cmpi eq, %arg1, %c0_i32_0 : i32
    %4 = arith.andi %2, %3 : i1
    %5 = arith.extui %4 : i1 to i32
    %c0_i32_1 = arith.constant 0 : i32
    %6 = arith.cmpi ne, %5, %c0_i32_1 : i32
    scf.if %6 {
      %c0 = arith.constant 0 : index
      %c0_16 = arith.constant 0 : index
      %33 = vector.load %arg3[%c0, %c0_16] : memref<512x128xbf16, #tpu.memory_space<vmem>>, vector<512x128xbf16>
      %c0_17 = arith.constant 0 : index
      %c0_18 = arith.constant 0 : index
      %34 = vector.load %arg6[%c0_17, %c0_18] : memref<512x128xbf16, #tpu.memory_space<vmem>>, vector<512x128xbf16>
      tpu.vector_store %arg6[%c0_17, %c0_18], %33 {strides = array<i32>} : memref<512x128xbf16, #tpu.memory_space<vmem>>, vector<512x128xbf16>,
      %c0_19 = arith.constant 0 : index
      %35 = memref.load %arg2[%c0_19] : memref<4xf32, #tpu.memory_space<smem>>
      %36 = arith.extf %33 : vector<512x128xbf16> to vector<512x128xf32>
      %37 = vector.broadcast %35 : f32 to vector<512x128xf32>
      %38 = arith.mulf %37, %36 : vector<512x128xf32>
      %c0_20 = arith.constant 0 : index
      %c0_21 = arith.constant 0 : index
      %39 = vector.load %arg5[%c0_20, %c0_21] : memref<512x128xf32, #tpu.memory_space<vmem>>, vector<512x128xf32>
      tpu.vector_store %arg5[%c0_20, %c0_21], %38 {strides = array<i32>} : memref<512x128xf32, #tpu.memory_space<vmem>>, vector<512x128xf32>,
    } else {
    }
    %c2_i32 = arith.constant 2 : i32
    %c0_i32_2 = arith.constant 0 : i32
    %7 = arith.cmpi eq, %c2_i32, %c0_i32_2 : i32
    %c1_i32 = arith.constant 1 : i32
    %8 = arith.select %7, %c1_i32, %c2_i32 : i32
    %9 = arith.remsi %arg0, %8 : i32
    %c0_i32_3 = arith.constant 0 : i32
    %10 = arith.cmpi ne, %9, %c0_i32_3 : i32
    %c0_i32_4 = arith.constant 0 : i32
    %11 = arith.cmpi slt, %9, %c0_i32_4 : i32
    %c0_i32_5 = arith.constant 0 : i32
    %12 = arith.cmpi slt, %8, %c0_i32_5 : i32
    %13 = arith.xori %11, %12 : i1
    %14 = arith.andi %13, %10 : i1
    %15 = arith.addi %9, %8 : i32
    %16 = arith.select %14, %15, %9 : i32
    %c0_i32_6 = arith.constant 0 : i32
    %17 = arith.cmpi eq, %16, %c0_i32_6 : i32
    %18 = arith.extui %17 : i1 to i32
    %c0_i32_7 = arith.constant 0 : i32
    %19 = arith.cmpi ne, %18, %c0_i32_7 : i32
    scf.if %19 {
      %c0 = arith.constant 0 : index
      %c0_16 = arith.constant 0 : index
      %33 = vector.load %arg4[%c0, %c0_16] : memref<512x512xbf16, #tpu.memory_space<vmem>>, vector<512x512xbf16>
      %c0_17 = arith.constant 0 : index
      %c0_18 = arith.constant 0 : index
      %34 = vector.load %arg6[%c0_17, %c0_18] : memref<512x128xbf16, #tpu.memory_space<vmem>>, vector<512x128xbf16>
      %cst = arith.constant dense<0.000000e+00> : vector<512x128xf32>
      %35 = tpu.matmul %33, %34, %cst {dimension_numbers = #tpu.dot_dimension_numbers<[1], [0], [0], [1], [0, 0, 1, 1], [], []>} : vector<512x512xbf16>, vector<512x128xbf16>, vector<512x128xf32> -> vector<512x128xf32>
      %36 = arith.truncf %35 : vector<512x128xf32> to vector<512x128xbf16>
      %37 = arith.index_cast %1 : i32 to index
      %c0_19 = arith.constant 0 : index
      %38 = vector.load %arg7[%37, %c0_19] : memref<512x128xbf16, #tpu.memory_space<vmem>>, vector<512x128xbf16>
      tpu.vector_store %arg7[%37, %c0_19], %36 {strides = array<i32>} : memref<512x128xbf16, #tpu.memory_space<vmem>>, vector<512x128xbf16>,
      %39 = arith.index_cast %1 : i32 to index
      %c0_20 = arith.constant 0 : index
      %40 = vector.load %arg5[%39, %c0_20] : memref<512x128xf32, #tpu.memory_space<vmem>>, vector<512x128xf32>
      %c1_i32_21 = arith.constant 1 : i32
      %41 = arith.addi %arg0, %c1_i32_21 : i32
      %42 = arith.index_cast %41 : i32 to index
      %43 = memref.load %arg2[%42] : memref<4xf32, #tpu.memory_space<smem>>
      %44 = vector.broadcast %43 : f32 to vector<512x128xf32>
      %45 = arith.mulf %44, %35 : vector<512x128xf32>
      %46 = arith.addf %40, %45 : vector<512x128xf32>
      %47 = arith.index_cast %1 : i32 to index
      %c0_22 = arith.constant 0 : index
      %48 = vector.load %arg5[%47, %c0_22] : memref<512x128xf32, #tpu.memory_space<vmem>>, vector<512x128xf32>
      tpu.vector_store %arg5[%47, %c0_22], %46 {strides = array<i32>} : memref<512x128xf32, #tpu.memory_space<vmem>>, vector<512x128xf32>,
    } else {
    }
    %c2_i32_8 = arith.constant 2 : i32
    %c0_i32_9 = arith.constant 0 : i32
    %20 = arith.cmpi eq, %c2_i32_8, %c0_i32_9 : i32
    %c1_i32_10 = arith.constant 1 : i32
    %21 = arith.select %20, %c1_i32_10, %c2_i32_8 : i32
    %22 = arith.remsi %arg0, %21 : i32
    %c0_i32_11 = arith.constant 0 : i32
    %23 = arith.cmpi ne, %22, %c0_i32_11 : i32
    %c0_i32_12 = arith.constant 0 : i32
    %24 = arith.cmpi slt, %22, %c0_i32_12 : i32
    %c0_i32_13 = arith.constant 0 : i32
    %25 = arith.cmpi slt, %21, %c0_i32_13 : i32
    %26 = arith.xori %24, %25 : i1
    %27 = arith.andi %26, %23 : i1
    %28 = arith.addi %22, %21 : i32
    %29 = arith.select %27, %28, %22 : i32
    %c1_i32_14 = arith.constant 1 : i32
    %30 = arith.cmpi eq, %29, %c1_i32_14 : i32
    %31 = arith.extui %30 : i1 to i32
    %c0_i32_15 = arith.constant 0 : i32
    %32 = arith.cmpi ne, %31, %c0_i32_15 : i32
    scf.if %32 {
      %c0 = arith.constant 0 : index
      %c0_16 = arith.constant 0 : index
      %33 = vector.load %arg4[%c0, %c0_16] : memref<512x512xbf16, #tpu.memory_space<vmem>>, vector<512x512xbf16>
      %c0_17 = arith.constant 0 : index
      %c0_18 = arith.constant 0 : index
      %34 = vector.load %arg7[%c0_17, %c0_18] : memref<512x128xbf16, #tpu.memory_space<vmem>>, vector<512x128xbf16>
      %cst = arith.constant dense<0.000000e+00> : vector<512x128xf32>
      %35 = tpu.matmul %33, %34, %cst {dimension_numbers = #tpu.dot_dimension_numbers<[1], [0], [0], [1], [0, 0, 1, 1], [], []>} : vector<512x512xbf16>, vector<512x128xbf16>, vector<512x128xf32> -> vector<512x128xf32>
      %36 = arith.truncf %35 : vector<512x128xf32> to vector<512x128xbf16>
      %37 = arith.index_cast %1 : i32 to index
      %c0_19 = arith.constant 0 : index
      %38 = vector.load %arg6[%37, %c0_19] : memref<512x128xbf16, #tpu.memory_space<vmem>>, vector<512x128xbf16>
      tpu.vector_store %arg6[%37, %c0_19], %36 {strides = array<i32>} : memref<512x128xbf16, #tpu.memory_space<vmem>>, vector<512x128xbf16>,
      %39 = arith.index_cast %1 : i32 to index
      %c0_20 = arith.constant 0 : index
      %40 = vector.load %arg5[%39, %c0_20] : memref<512x128xf32, #tpu.memory_space<vmem>>, vector<512x128xf32>
      %c1_i32_21 = arith.constant 1 : i32
      %41 = arith.addi %arg0, %c1_i32_21 : i32
      %42 = arith.index_cast %41 : i32 to index
      %43 = memref.load %arg2[%42] : memref<4xf32, #tpu.memory_space<smem>>
      %44 = vector.broadcast %43 : f32 to vector<512x128xf32>
      %45 = arith.mulf %44, %35 : vector<512x128xf32>
      %46 = arith.addf %40, %45 : vector<512x128xf32>
      %47 = arith.index_cast %1 : i32 to index
      %c0_22 = arith.constant 0 : index
      %48 = vector.load %arg5[%47, %c0_22] : memref<512x128xf32, #tpu.memory_space<vmem>>, vector<512x128xf32>
      tpu.vector_store %arg5[%47, %c0_22], %46 {strides = array<i32>} : memref<512x128xf32, #tpu.memory_space<vmem>>, vector<512x128xf32>,
    } else {
    }
    return
  }
  func.func @transform_0(%arg0: i32, %arg1: i32) -> i32 {
    %c0_i32 = arith.constant 0 : i32
    %c0_i32_0 = arith.constant 0 : i32
    return %c0_i32 : i32
  }
  func.func @transform_1(%arg0: i32, %arg1: i32) -> (i32, i32) {
    %c0_i32 = arith.constant 0 : i32
    %c0_i32_0 = arith.constant 0 : i32
    %c0_i32_1 = arith.constant 0 : i32
    return %c0_i32, %c0_i32_0 : i32, i32
  }
  func.func @transform_2(%arg0: i32, %arg1: i32) -> (i32, i32) {
    %c0_i32 = arith.constant 0 : i32
    %c0_i32_0 = arith.constant 0 : i32
    return %arg1, %c0_i32 : i32, i32
  }
  func.func @transform_3(%arg0: i32, %arg1: i32) -> (i32, i32) {
    %c0_i32 = arith.constant 0 : i32
    %c0_i32_0 = arith.constant 0 : i32
    %c0_i32_1 = arith.constant 0 : i32
    return %c0_i32, %c0_i32_0 : i32, i32
  }
}

</mosaic_0001>

<llo_original>
// kernel: tpu_custom_call.1
$region0: #{tpu_custom_call.1}
  #allocation0 [shape = 'u32[]', space=smem, size = 0x4, offset = 0x4, fixed_abs, tag = 'smem constant byte address 0x4 - core index']
  #allocation1 [shape = 'u32[144,128]{1,0:T(1,128)}', space=vmem, size = 0x12000, scoped, tag = 'internal scratch']
  #allocation2 [shape = 'bf16[512,128]{1,0:T(16,128)(2,1)}', space=vmem, size = 0x20000, scoped, tag = 'scratch operand']
  #allocation3 [shape = 'bf16[512,128]{1,0:T(16,128)(2,1)}', space=vmem, size = 0x20000, scoped, tag = 'scratch operand']
  %s0 = inlined_call_operand.hbm [shape: f32[4], index: 0, kind: input, shape index: {}]
  %s1 = inlined_call_operand.hbm [shape: bf16[512,128], index: 1, kind: input, shape index: {}]
  %s2 = inlined_call_operand.hbm [shape: bf16[512,512], index: 2, kind: input, shape index: {}]
  %s3 = inlined_call_operand.hbm [shape: f32[512,128], index: 3, kind: output, shape index: {}]
  %s4 = sld [smem:[#allocation0]]
  $region69: #{tpu_custom_call.1} parent=0
    _
  %s6 = ssub.s32 1, %s4
  %s7 = scalar_select 0, %s6, %s4
  $region1: #{tpu_custom_call.1} parent=0
    #allocation4 [shape = 'u8[512]{0}', space=smem, size = 0x200, scoped, tag = 'input window, operand 0, single buffered']
    #allocation5 [shape = 's32[2]{0}', space=sflag, size = 0x8, scoped, tag = 'scoped memory for tpu_custom_call.1']
    #allocation6 [shape = 's32[2]{0}', space=sflag, size = 0x8, scoped, tag = 'scoped memory for tpu_custom_call.1']
    #allocation7 [shape = 's32[2]{0}', space=sflag, size = 0x8, scoped, tag = 'scoped memory for tpu_custom_call.1']
    #allocation8 [shape = 'u8[131072]{0}', space=vmem, size = 0x20000, scoped, tag = 'input window, operand 1, single buffered']
    #allocation9 [shape = 'u8[524288]{0}', space=vmem, size = 0x80000, scoped, tag = 'input window, operand 2, single buffered']
    #allocation10 [shape = 's32[1]{0}', space=sflag, size = 0x4, scoped, tag = 'scoped memory for tpu_custom_call.1']
    #allocation11 [shape = 'u8[262144]{0}', space=vmem, size = 0x40000, scoped, tag = 'output window, operand 0, single buffered']
    %8 = vsyncpa [#allocation7], 0
    %9 = vsyncpa [#allocation5], 0
    %10 = vsyncpa [#allocation10], 0
    %11 = vsyncpa [#allocation6], 0
    loop: start=0, step=1, limit=5
    $region2: #{tpu_custom_call.1} parent=1 // loop_pre_header
      _
    $region3: #{tpu_custom_call.1} parent=1 // loop_header
      %s13 = sphi 0, %s17
      %p14 = scmp.ge.s32.totalorder %s13, 5
      %s20 = sphi 0, %s32
      %s21 = sphi 0, %s28
      %s22 = sphi 0, %s20
      %s23 = sphi 0, %s21
      %s24 = sphi 0, %s22
      %s25 = sphi 0, %s23
      %s33 = sphi 0, %s33
      %s35 = sphi 0, %s33
      %s36 = sphi 0, %s35
      %s50 = sphi 0, %s36
      %s54 = sphi 0, %s54
      %s56 = sphi 0, %s54
      %s57 = sphi 0, %s56
      %s71 = sphi 0, %s57
      %s77 = sphi 0, %s79
      %s80 = sphi 0, %s77
      %s81 = sphi 0, %s80
      %s97 = sphi 0, %s81
      %s101 = sphi 0, %s101
      %s103 = sphi 0, %s101
      %s104 = sphi 0, %s103
      %s118 = sphi 0, %s104
    $region4: #{tpu_custom_call.1} parent=1 // loop_header_branch
      %16 = sbr.rel (%p14) target = $region8
    $region5: #{tpu_custom_call.1} parent=1 // loop_body
      %s18 = ssub.s32 %s13, 1
      %s19 = ssub.s32 %s13, 2
      %s26 = sadd.s32 1, %s21
      %p27 = scmp.ge.s32.totalorder %s26, 1
      %s28 = scalar_select %p27, 0, %s26
      %s29 = sadd.s32 1, %s20
      %s30 = scalar_select %p27, %s29, %s20
      %p31 = scmp.ge.s32.totalorder %s30, 3
      %s32 = scalar_select %p31, 0, %s30
      %s34 = sadd.s32 %s33, 1
      %p37 = scmp.eq.s32.totalorder %s13, 2
      %p38 = scmp.ne.s32.totalorder %s33, %s35
      %p39 = scmp.eq.s32.totalorder %s13, 0
      %p40 = por %p38, %p39
      %p41 = scmp.ne.s32.totalorder %s33, %s35
      %p42 = scmp.eq.s32.totalorder %s18, 2
      %p43 = por %p41, %p42
      %p44 = scmp.ne.s32.totalorder %s35, %s36
      %p45 = scmp.eq.s32.totalorder %s18, 0
      %p46 = por %p44, %p45
      %p47 = scmp.ne.s32.totalorder %s35, %s36
      %p48 = scmp.eq.s32.totalorder %s19, 2
      %p49 = por %p47, %p48
      %p51 = scmp.ne.s32.totalorder %s36, %s50
      %p52 = scmp.eq.s32.totalorder %s19, 0
      %p53 = por %p51, %p52
      %s55 = sadd.s32 %s54, 1
      %p58 = scmp.eq.s32.totalorder %s13, 2
      %p59 = scmp.ne.s32.totalorder %s54, %s56
      %p60 = scmp.eq.s32.totalorder %s13, 0
      %p61 = por %p59, %p60
      %p62 = scmp.ne.s32.totalorder %s54, %s56
      %p63 = scmp.eq.s32.totalorder %s18, 2
      %p64 = por %p62, %p63
      %p65 = scmp.ne.s32.totalorder %s56, %s57
      %p66 = scmp.eq.s32.totalorder %s18, 0
      %p67 = por %p65, %p66
      %p68 = scmp.ne.s32.totalorder %s56, %s57
      %p69 = scmp.eq.s32.totalorder %s19, 2
      %p70 = por %p68, %p69
      %p72 = scmp.ne.s32.totalorder %s57, %s71
      %p73 = scmp.eq.s32.totalorder %s19, 0
      %p74 = por %p72, %p73
      %s75 = ssub.s32 %s21, %s28
      %p76 = scmp.eq.s32.totalorder %s75, 0
      %s78 = sadd.s32 %s77, 1
      %s79 = scalar_select %p76, %s77, %s78
      %p82 = pneg %p76
      %p83 = scmp.eq.s32.totalorder %s13, 2
      %p84 = por %p82, %p83
      %p85 = scmp.ne.s32.totalorder %s77, %s80
      %p86 = scmp.eq.s32.totalorder %s13, 0
      %p87 = por %p85, %p86
      %p88 = scmp.ne.s32.totalorder %s77, %s80
      %p89 = scmp.eq.s32.totalorder %s18, 2
      %p90 = por %p88, %p89
      %p91 = scmp.ne.s32.totalorder %s80, %s81
      %p92 = scmp.eq.s32.totalorder %s18, 0
      %p93 = por %p91, %p92
      %p94 = scmp.ne.s32.totalorder %s80, %s81
      %p95 = scmp.eq.s32.totalorder %s19, 2
      %p96 = por %p94, %p95
      %p98 = scmp.ne.s32.totalorder %s81, %s97
      %p99 = scmp.eq.s32.totalorder %s19, 0
      %p100 = por %p98, %p99
      %s102 = sadd.s32 %s101, 1
      %p105 = scmp.eq.s32.totalorder %s13, 2
      %p106 = scmp.ne.s32.totalorder %s101, %s103
      %p107 = scmp.eq.s32.totalorder %s13, 0
      %p108 = por %p106, %p107
      %p109 = scmp.ne.s32.totalorder %s101, %s103
      %p110 = scmp.eq.s32.totalorder %s18, 2
      %p111 = por %p109, %p110
      %p112 = scmp.ne.s32.totalorder %s103, %s104
      %p113 = scmp.eq.s32.totalorder %s18, 0
      %p114 = por %p112, %p113
      %p115 = scmp.ne.s32.totalorder %s103, %s104
      %p116 = scmp.eq.s32.totalorder %s19, 2
      %p117 = por %p115, %p116
      %p119 = scmp.ne.s32.totalorder %s104, %s118
      %p120 = scmp.eq.s32.totalorder %s19, 0
      %p121 = por %p119, %p120
      %p122 = scmp.le.s32.totalorder 1, %s13
      %p123 = scmp.lt.s32.totalorder %s13, 4
      %p124 = pnand %p122, %p123
      %p125 = pneg %p124
      // Predicated region
      $region9: #{tpu_custom_call.1} parent=5 // pred_check
        _
      $region10: #{tpu_custom_call.1} parent=5 // pred_check_branch
        %127 = sbr.rel (%p124) target = $region12
      $region11: #{tpu_custom_call.1} parent=5 // pred_region
        %s128 = ssub.s32 %s13, 1
        // Predicated region
        $region13: #{tpu_custom_call.1} parent=11 // pred_check
          %p129 = pneg %p46
        $region14: #{tpu_custom_call.1} parent=11 // pred_check_branch
          %131 = sbr.rel (%p129) target = $region16
        $region15: #{tpu_custom_call.1} parent=11 // pred_region
          %s133 = ssub.s32 16, 16
          %134 = vsyncadd [#allocation7], %s133
          %137 = dma.hbm_to_smem %s0, 16, [#allocation4], [#allocation7]
        $region16: #{tpu_custom_call.1} parent=11 // pred_fallthru
          _
        // Predicated region
        $region17: #{tpu_custom_call.1} parent=11 // pred_check
          %p138 = pneg %p67
        $region18: #{tpu_custom_call.1} parent=11 // pred_check_branch
          %140 = sbr.rel (%p138) target = $region20
        $region19: #{tpu_custom_call.1} parent=11 // pred_region
          %s142 = ssub.s32 4096, 4096
          %143 = vsyncadd [#allocation5], %s142
          %s144 = sshll.u32 [#allocation8], 4
          %s145 = int_to_ptr.vmem [resolvable:$true] %s144
          %150 = dma.hbm_to_vmem [thread:$0]  %s1, 4096, %s145, [#allocation5], 64, 64, 4
        $region20: #{tpu_custom_call.1} parent=11 // pred_fallthru
          _
        // Predicated region
        $region21: #{tpu_custom_call.1} parent=11 // pred_check
          %p151 = pneg %p93
        $region22: #{tpu_custom_call.1} parent=11 // pred_check_branch
          %153 = sbr.rel (%p151) target = $region24
        $region23: #{tpu_custom_call.1} parent=11 // pred_region
          %s154 = smul.u32 64, %s23
          %s156 = ssub.s32 16384, 16384
          %157 = vsyncadd [#allocation10], %s156
          %s158 = smul.addr %s154, 4
          %s159 = smul.addr %s158, 64
          %s160 = scalar_lea.hbm %s2, %s159
          %s161 = sshll.u32 [#allocation9], 4
          %s162 = int_to_ptr.vmem [resolvable:$true] %s161
          %167 = dma.hbm_to_vmem [thread:$0]  %s160, 16384, %s162, [#allocation10], 256, 256, 16
        $region24: #{tpu_custom_call.1} parent=11 // pred_fallthru
          _
      $region12: #{tpu_custom_call.1} parent=5 // pred_fallthru
        _
      %p168 = scmp.lt.s32.totalorder %s13, 3
      // Predicated region
      $region25: #{tpu_custom_call.1} parent=5 // pred_check
        %p169 = pneg %p168
      $region26: #{tpu_custom_call.1} parent=5 // pred_check_branch
        %171 = sbr.rel (%p169) target = $region28
      $region27: #{tpu_custom_call.1} parent=5 // pred_region
        _
      $region28: #{tpu_custom_call.1} parent=5 // pred_fallthru
        _
      %p172 = scmp.le.s32.totalorder 1, %s13
      %p173 = scmp.lt.s32.totalorder %s13, 4
      %p174 = pnand %p172, %p173
      %p175 = pneg %p174
      // Predicated region
      $region29: #{tpu_custom_call.1} parent=5 // pred_check
        _
      $region30: #{tpu_custom_call.1} parent=5 // pred_check_branch
        %177 = sbr.rel (%p174) target = $region32
      $region31: #{tpu_custom_call.1} parent=5 // pred_region
        %s178 = ssub.s32 %s13, 1
        // Predicated region
        $region33: #{tpu_custom_call.1} parent=31 // pred_check
          %p179 = pneg %p46
        $region34: #{tpu_custom_call.1} parent=31 // pred_check_branch
          %181 = sbr.rel (%p179) target = $region36
        $region35: #{tpu_custom_call.1} parent=31 // pred_region
          %182 = dma.done [#allocation7], 16
        $region36: #{tpu_custom_call.1} parent=31 // pred_fallthru
          _
        // Predicated region
        $region37: #{tpu_custom_call.1} parent=31 // pred_check
          %p183 = pneg %p67
        $region38: #{tpu_custom_call.1} parent=31 // pred_check_branch
          %185 = sbr.rel (%p183) target = $region40
        $region39: #{tpu_custom_call.1} parent=31 // pred_region
          %186 = dma.done [#allocation5], 4096
        $region40: #{tpu_custom_call.1} parent=31 // pred_fallthru
          _
        // Predicated region
        $region41: #{tpu_custom_call.1} parent=31 // pred_check
          %p187 = pneg %p93
        $region42: #{tpu_custom_call.1} parent=31 // pred_check_branch
          %189 = sbr.rel (%p187) target = $region44
        $region43: #{tpu_custom_call.1} parent=31 // pred_region
          %190 = dma.done [#allocation10], 16384
        $region44: #{tpu_custom_call.1} parent=31 // pred_fallthru
          _
        %191 = sfence
        %p192 = pneg %p46
        %p193 = pneg %p43
        %p194 = pneg %p67
        %p195 = pneg %p64
        %p196 = pneg %p93
        %p197 = pneg %p90
        %p198 = pneg %p114
        %p199 = pneg %p111
        %s200 = smul.u32 64, %s23
        %s202 = smul.u32 %s23, 512
        %p203 = scmp.eq.s32.totalorder %s22, 0
        %p204 = scmp.eq.s32.totalorder %s23, 0
        %p205 = pnand %p203, %p204
        %p206 = pneg %p205
        // Predicated region
        $region45: #{tpu_custom_call.1} parent=31 // pred_check
          _
        $region46: #{tpu_custom_call.1} parent=31 // pred_check_branch
          %208 = sbr.rel (%p205) target = $region48
        $region47: #{tpu_custom_call.1} parent=31 // pred_region
          %v209 = vld [vmem:[#allocation8] sm:$0xf]
          %v210 = vld [vmem:[#allocation8 + $0x4] sm:$0xf]
          %v211 = vld [vmem:[#allocation8 + $0x8] sm:$0xf]
          %v212 = vld [vmem:[#allocation8 + $0xc] sm:$0xf]
          %v213 = vld [vmem:[#allocation8 + $0x10] sm:$0xf]
          %v214 = vld [vmem:[#allocation8 + $0x14] sm:$0xf]
          %v215 = vld [vmem:[#allocation8 + $0x18] sm:$0xf]
          %v216 = vld [vmem:[#allocation8 + $0x1c] sm:$0xf]
          %v217 = vld [vmem:[#allocation8 + $0x20] sm:$0xf]
          %v218 = vld [vmem:[#allocation8 + $0x24] sm:$0xf]
          %v219 = vld [vmem:[#allocation8 + $0x28] sm:$0xf]
          %v220 = vld [vmem:[#allocation8 + $0x2c] sm:$0xf]
          %v221 = vld [vmem:[#allocation8 + $0x30] sm:$0xf]
          %v222 = vld [vmem:[#allocation8 + $0x34] sm:$0xf]
          %v223 = vld [vmem:[#allocation8 + $0x38] sm:$0xf]
          %v224 = vld [vmem:[#allocation8 + $0x3c] sm:$0xf]
          %v225 = vld [vmem:[#allocation8 + $0x40] sm:$0xf]
          %v226 = vld [vmem:[#allocation8 + $0x44] sm:$0xf]
          %v227 = vld [vmem:[#allocation8 + $0x48] sm:$0xf]
          %v228 = vld [vmem:[#allocation8 + $0x4c] sm:$0xf]
          %v229 = vld [vmem:[#allocation8 + $0x50] sm:$0xf]
          %v230 = vld [vmem:[#allocation8 + $0x54] sm:$0xf]
          %v231 = vld [vmem:[#allocation8 + $0x58] sm:$0xf]
          %v232 = vld [vmem:[#allocation8 + $0x5c] sm:$0xf]
          %v233 = vld [vmem:[#allocation8 + $0x60] sm:$0xf]
          %v234 = vld [vmem:[#allocation8 + $0x64] sm:$0xf]
          %v235 = vld [vmem:[#allocation8 + $0x68] sm:$0xf]
          %v236 = vld [vmem:[#allocation8 + $0x6c] sm:$0xf]
          %v237 = vld [vmem:[#allocation8 + $0x70] sm:$0xf]
          %v238 = vld [vmem:[#allocation8 + $0x74] sm:$0xf]
          %v239 = vld [vmem:[#allocation8 + $0x78] sm:$0xf]
          %v240 = vld [vmem:[#allocation8 + $0x7c] sm:$0xf]
          %v241 = vld [vmem:[#allocation8 + $0x80] sm:$0xf]
          %v242 = vld [vmem:[#allocation8 + $0x84] sm:$0xf]
          %v243 = vld [vmem:[#allocation8 + $0x88] sm:$0xf]
          %v244 = vld [vmem:[#allocation8 + $0x8c] sm:$0xf]
          %v245 = vld [vmem:[#allocation8 + $0x90] sm:$0xf]
          %v246 = vld [vmem:[#allocation8 + $0x94] sm:$0xf]
          %v247 = vld [vmem:[#allocation8 + $0x98] sm:$0xf]
          %v248 = vld [vmem:[#allocation8 + $0x9c] sm:$0xf]
          %v249 = vld [vmem:[#allocation8 + $0xa0] sm:$0xf]
          %v250 = vld [vmem:[#allocation8 + $0xa4] sm:$0xf]
          %v251 = vld [vmem:[#allocation8 + $0xa8] sm:$0xf]
          %v252 = vld [vmem:[#allocation8 + $0xac] sm:$0xf]
          %v253 = vld [vmem:[#allocation8 + $0xb0] sm:$0xf]
          %v254 = vld [vmem:[#allocation8 + $0xb4] sm:$0xf]
          %v255 = vld [vmem:[#allocation8 + $0xb8] sm:$0xf]
          %v256 = vld [vmem:[#allocation8 + $0xbc] sm:$0xf]
          %v257 = vld [vmem:[#allocation8 + $0xc0] sm:$0xf]
          %v258 = vld [vmem:[#allocation8 + $0xc4] sm:$0xf]
          %v259 = vld [vmem:[#allocation8 + $0xc8] sm:$0xf]
          %v260 = vld [vmem:[#allocation8 + $0xcc] sm:$0xf]
          %v261 = vld [vmem:[#allocation8 + $0xd0] sm:$0xf]
          %v262 = vld [vmem:[#allocation8 + $0xd4] sm:$0xf]
          %v263 = vld [vmem:[#allocation8 + $0xd8] sm:$0xf]
          %v264 = vld [vmem:[#allocation8 + $0xdc] sm:$0xf]
          %v265 = vld [vmem:[#allocation8 + $0xe0] sm:$0xf]
          %v266 = vld [vmem:[#allocation8 + $0xe4] sm:$0xf]
          %v267 = vld [vmem:[#allocation8 + $0xe8] sm:$0xf]
          %v268 = vld [vmem:[#allocation8 + $0xec] sm:$0xf]
          %v269 = vld [vmem:[#allocation8 + $0xf0] sm:$0xf]
          %v270 = vld [vmem:[#allocation8 + $0xf4] sm:$0xf]
          %v271 = vld [vmem:[#allocation8 + $0xf8] sm:$0xf]
          %v272 = vld [vmem:[#allocation8 + $0xfc] sm:$0xf]
          %v337 = vunpack.c.l.b16 %v209
          %v338 = vunpack.c.l.b16 %v210
          %v339 = vunpack.c.l.b16 %v211
          %v340 = vunpack.c.l.b16 %v212
          %v341 = vunpack.c.l.b16 %v213
          %v342 = vunpack.c.l.b16 %v214
          %v343 = vunpack.c.l.b16 %v215
          %v344 = vunpack.c.l.b16 %v216
          %v345 = vunpack.c.l.b16 %v217
          %v346 = vunpack.c.l.b16 %v218
          %v347 = vunpack.c.l.b16 %v219
          %v348 = vunpack.c.l.b16 %v220
          %v349 = vunpack.c.l.b16 %v221
          %v350 = vunpack.c.l.b16 %v222
          %v351 = vunpack.c.l.b16 %v223
          %v352 = vunpack.c.l.b16 %v224
          %v353 = vunpack.c.l.b16 %v225
          %v354 = vunpack.c.l.b16 %v226
          %v355 = vunpack.c.l.b16 %v227
          %v356 = vunpack.c.l.b16 %v228
          %v357 = vunpack.c.l.b16 %v229
          %v358 = vunpack.c.l.b16 %v230
          %v359 = vunpack.c.l.b16 %v231
          %v360 = vunpack.c.l.b16 %v232
          %v361 = vunpack.c.l.b16 %v233
          %v362 = vunpack.c.l.b16 %v234
          %v363 = vunpack.c.l.b16 %v235
          %v364 = vunpack.c.l.b16 %v236
          %v365 = vunpack.c.l.b16 %v237
          %v366 = vunpack.c.l.b16 %v238
          %v367 = vunpack.c.l.b16 %v239
          %v368 = vunpack.c.l.b16 %v240
          %v369 = vunpack.c.l.b16 %v241
          %v370 = vunpack.c.l.b16 %v242
          %v371 = vunpack.c.l.b16 %v243
          %v372 = vunpack.c.l.b16 %v244
          %v373 = vunpack.c.l.b16 %v245
          %v374 = vunpack.c.l.b16 %v246
          %v375 = vunpack.c.l.b16 %v247
          %v376 = vunpack.c.l.b16 %v248
          %v377 = vunpack.c.l.b16 %v249
          %v378 = vunpack.c.l.b16 %v250
          %v379 = vunpack.c.l.b16 %v251
          %v380 = vunpack.c.l.b16 %v252
          %v381 = vunpack.c.l.b16 %v253
          %v382 = vunpack.c.l.b16 %v254
          %v383 = vunpack.c.l.b16 %v255
          %v384 = vunpack.c.l.b16 %v256
          %v385 = vunpack.c.l.b16 %v257
          %v386 = vunpack.c.l.b16 %v258
          %v387 = vunpack.c.l.b16 %v259
          %v388 = vunpack.c.l.b16 %v260
          %v389 = vunpack.c.l.b16 %v261
          %v390 = vunpack.c.l.b16 %v262
          %v391 = vunpack.c.l.b16 %v263
          %v392 = vunpack.c.l.b16 %v264
          %v393 = vunpack.c.l.b16 %v265
          %v394 = vunpack.c.l.b16 %v266
          %v395 = vunpack.c.l.b16 %v267
          %v396 = vunpack.c.l.b16 %v268
          %v397 = vunpack.c.l.b16 %v269
          %v398 = vunpack.c.l.b16 %v270
          %v399 = vunpack.c.l.b16 %v271
          %v400 = vunpack.c.l.b16 %v272
          %v401 = vpack.c.b16 %v338, %v337
          %v402 = vpack.c.b16 %v340, %v339
          %v403 = vpack.c.b16 %v342, %v341
          %v404 = vpack.c.b16 %v344, %v343
          %v405 = vpack.c.b16 %v346, %v345
          %v406 = vpack.c.b16 %v348, %v347
          %v407 = vpack.c.b16 %v350, %v349
          %v408 = vpack.c.b16 %v352, %v351
          %v409 = vpack.c.b16 %v354, %v353
          %v410 = vpack.c.b16 %v356, %v355
          %v411 = vpack.c.b16 %v358, %v357
          %v412 = vpack.c.b16 %v360, %v359
          %v413 = vpack.c.b16 %v362, %v361
          %v414 = vpack.c.b16 %v364, %v363
          %v415 = vpack.c.b16 %v366, %v365
          %v416 = vpack.c.b16 %v368, %v367
          %v417 = vpack.c.b16 %v370, %v369
          %v418 = vpack.c.b16 %v372, %v371
          %v419 = vpack.c.b16 %v374, %v373
          %v420 = vpack.c.b16 %v376, %v375
          %v421 = vpack.c.b16 %v378, %v377
          %v422 = vpack.c.b16 %v380, %v379
          %v423 = vpack.c.b16 %v382, %v381
          %v424 = vpack.c.b16 %v384, %v383
          %v425 = vpack.c.b16 %v386, %v385
          %v426 = vpack.c.b16 %v388, %v387
          %v427 = vpack.c.b16 %v390, %v389
          %v428 = vpack.c.b16 %v392, %v391
          %v429 = vpack.c.b16 %v394, %v393
          %v430 = vpack.c.b16 %v396, %v395
          %v431 = vpack.c.b16 %v398, %v397
          %v432 = vpack.c.b16 %v400, %v399
          %465 = vst [vmem:[#allocation2] sm:$0xff] %v401
          %466 = vst [vmem:[#allocation2 + $0x8] sm:$0xff] %v402
          %467 = vst [vmem:[#allocation2 + $0x10] sm:$0xff] %v403
          %468 = vst [vmem:[#allocation2 + $0x18] sm:$0xff] %v404
          %469 = vst [vmem:[#allocation2 + $0x20] sm:$0xff] %v405
          %470 = vst [vmem:[#allocation2 + $0x28] sm:$0xff] %v406
          %471 = vst [vmem:[#allocation2 + $0x30] sm:$0xff] %v407
          %472 = vst [vmem:[#allocation2 + $0x38] sm:$0xff] %v408
          %473 = vst [vmem:[#allocation2 + $0x40] sm:$0xff] %v409
          %474 = vst [vmem:[#allocation2 + $0x48] sm:$0xff] %v410
          %475 = vst [vmem:[#allocation2 + $0x50] sm:$0xff] %v411
          %476 = vst [vmem:[#allocation2 + $0x58] sm:$0xff] %v412
          %477 = vst [vmem:[#allocation2 + $0x60] sm:$0xff] %v413
          %478 = vst [vmem:[#allocation2 + $0x68] sm:$0xff] %v414
          %479 = vst [vmem:[#allocation2 + $0x70] sm:$0xff] %v415
          %480 = vst [vmem:[#allocation2 + $0x78] sm:$0xff] %v416
          %481 = vst [vmem:[#allocation2 + $0x80] sm:$0xff] %v417
          %482 = vst [vmem:[#allocation2 + $0x88] sm:$0xff] %v418
          %483 = vst [vmem:[#allocation2 + $0x90] sm:$0xff] %v419
          %484 = vst [vmem:[#allocation2 + $0x98] sm:$0xff] %v420
          %485 = vst [vmem:[#allocation2 + $0xa0] sm:$0xff] %v421
          %486 = vst [vmem:[#allocation2 + $0xa8] sm:$0xff] %v422
          %487 = vst [vmem:[#allocation2 + $0xb0] sm:$0xff] %v423
          %488 = vst [vmem:[#allocation2 + $0xb8] sm:$0xff] %v424
          %489 = vst [vmem:[#allocation2 + $0xc0] sm:$0xff] %v425
          %490 = vst [vmem:[#allocation2 + $0xc8] sm:$0xff] %v426
          %491 = vst [vmem:[#allocation2 + $0xd0] sm:$0xff] %v427
          %492 = vst [vmem:[#allocation2 + $0xd8] sm:$0xff] %v428
          %493 = vst [vmem:[#allocation2 + $0xe0] sm:$0xff] %v429
          %494 = vst [vmem:[#allocation2 + $0xe8] sm:$0xff] %v430
          %495 = vst [vmem:[#allocation2 + $0xf0] sm:$0xff] %v431
          %496 = vst [vmem:[#allocation2 + $0xf8] sm:$0xff] %v432
          %s497 = sld [smem:[#allocation4]]
          %v498 = vunpack.c.l.bf16 %v209
          %v499 = vunpack.c.l.bf16 %v210
          %v500 = vunpack.c.l.bf16 %v211
          %v501 = vunpack.c.l.bf16 %v212
          %v502 = vunpack.c.l.bf16 %v213
          %v503 = vunpack.c.l.bf16 %v214
          %v504 = vunpack.c.l.bf16 %v215
          %v505 = vunpack.c.l.bf16 %v216
          %v506 = vunpack.c.l.bf16 %v217
          %v507 = vunpack.c.l.bf16 %v218
          %v508 = vunpack.c.l.bf16 %v219
          %v509 = vunpack.c.l.bf16 %v220
          %v510 = vunpack.c.l.bf16 %v221
          %v511 = vunpack.c.l.bf16 %v222
          %v512 = vunpack.c.l.bf16 %v223
          %v513 = vunpack.c.l.bf16 %v224
          %v514 = vunpack.c.l.bf16 %v225
          %v515 = vunpack.c.l.bf16 %v226
          %v516 = vunpack.c.l.bf16 %v227
          %v517 = vunpack.c.l.bf16 %v228
          %v518 = vunpack.c.l.bf16 %v229
          %v519 = vunpack.c.l.bf16 %v230
          %v520 = vunpack.c.l.bf16 %v231
          %v521 = vunpack.c.l.bf16 %v232
          %v522 = vunpack.c.l.bf16 %v233
          %v523 = vunpack.c.l.bf16 %v234
          %v524 = vunpack.c.l.bf16 %v235
          %v525 = vunpack.c.l.bf16 %v236
          %v526 = vunpack.c.l.bf16 %v237
          %v527 = vunpack.c.l.bf16 %v238
          %v528 = vunpack.c.l.bf16 %v239
          %v529 = vunpack.c.l.bf16 %v240
          %v530 = vunpack.c.l.bf16 %v241
          %v531 = vunpack.c.l.bf16 %v242
          %v532 = vunpack.c.l.bf16 %v243
          %v533 = vunpack.c.l.bf16 %v244
          %v534 = vunpack.c.l.bf16 %v245
          %v535 = vunpack.c.l.bf16 %v246
          %v536 = vunpack.c.l.bf16 %v247
          %v537 = vunpack.c.l.bf16 %v248
          %v538 = vunpack.c.l.bf16 %v249
          %v539 = vunpack.c.l.bf16 %v250
          %v540 = vunpack.c.l.bf16 %v251
          %v541 = vunpack.c.l.bf16 %v252
          %v542 = vunpack.c.l.bf16 %v253
          %v543 = vunpack.c.l.bf16 %v254
          %v544 = vunpack.c.l.bf16 %v255
          %v545 = vunpack.c.l.bf16 %v256
          %v546 = vunpack.c.l.bf16 %v257
          %v547 = vunpack.c.l.bf16 %v258
          %v548 = vunpack.c.l.bf16 %v259
          %v549 = vunpack.c.l.bf16 %v260
          %v550 = vunpack.c.l.bf16 %v261
          %v551 = vunpack.c.l.bf16 %v262
          %v552 = vunpack.c.l.bf16 %v263
          %v553 = vunpack.c.l.bf16 %v264
          %v554 = vunpack.c.l.bf16 %v265
          %v555 = vunpack.c.l.bf16 %v266
          %v556 = vunpack.c.l.bf16 %v267
          %v557 = vunpack.c.l.bf16 %v268
          %v558 = vunpack.c.l.bf16 %v269
          %v559 = vunpack.c.l.bf16 %v270
          %v560 = vunpack.c.l.bf16 %v271
          %v561 = vunpack.c.l.bf16 %v272
          %v562 = vstv %s497
          %v563 = vmul.f32 %v562, %v498
          %v564 = vmul.f32 %v562, %v499
          %v565 = vmul.f32 %v562, %v500
          %v566 = vmul.f32 %v562, %v501
          %v567 = vmul.f32 %v562, %v502
          %v568 = vmul.f32 %v562, %v503
          %v569 = vmul.f32 %v562, %v504
          %v570 = vmul.f32 %v562, %v505
          %v571 = vmul.f32 %v562, %v506
          %v572 = vmul.f32 %v562, %v507
          %v573 = vmul.f32 %v562, %v508
          %v574 = vmul.f32 %v562, %v509
          %v575 = vmul.f32 %v562, %v510
          %v576 = vmul.f32 %v562, %v511
          %v577 = vmul.f32 %v562, %v512
          %v578 = vmul.f32 %v562, %v513
          %v579 = vmul.f32 %v562, %v514
          %v580 = vmul.f32 %v562, %v515
          %v581 = vmul.f32 %v562, %v516
          %v582 = vmul.f32 %v562, %v517
          %v583 = vmul.f32 %v562, %v518
          %v584 = vmul.f32 %v562, %v519
          %v585 = vmul.f32 %v562, %v520
          %v586 = vmul.f32 %v562, %v521
          %v587 = vmul.f32 %v562, %v522
          %v588 = vmul.f32 %v562, %v523
          %v589 = vmul.f32 %v562, %v524
          %v590 = vmul.f32 %v562, %v525
          %v591 = vmul.f32 %v562, %v526
          %v592 = vmul.f32 %v562, %v527
          %v593 = vmul.f32 %v562, %v528
          %v594 = vmul.f32 %v562, %v529
          %v595 = vmul.f32 %v562, %v530
          %v596 = vmul.f32 %v562, %v531
          %v597 = vmul.f32 %v562, %v532
          %v598 = vmul.f32 %v562, %v533
          %v599 = vmul.f32 %v562, %v534
          %v600 = vmul.f32 %v562, %v535
          %v601 = vmul.f32 %v562, %v536
          %v602 = vmul.f32 %v562, %v537
          %v603 = vmul.f32 %v562, %v538
          %v604 = vmul.f32 %v562, %v539
          %v605 = vmul.f32 %v562, %v540
          %v606 = vmul.f32 %v562, %v541
          %v607 = vmul.f32 %v562, %v542
          %v608 = vmul.f32 %v562, %v543
          %v609 = vmul.f32 %v562, %v544
          %v610 = vmul.f32 %v562, %v545
          %v611 = vmul.f32 %v562, %v546
          %v612 = vmul.f32 %v562, %v547
          %v613 = vmul.f32 %v562, %v548
          %v614 = vmul.f32 %v562, %v549
          %v615 = vmul.f32 %v562, %v550
          %v616 = vmul.f32 %v562, %v551
          %v617 = vmul.f32 %v562, %v552
          %v618 = vmul.f32 %v562, %v553
          %v619 = vmul.f32 %v562, %v554
          %v620 = vmul.f32 %v562, %v555
          %v621 = vmul.f32 %v562, %v556
          %v622 = vmul.f32 %v562, %v557
          %v623 = vmul.f32 %v562, %v558
          %v624 = vmul.f32 %v562, %v559
          %v625 = vmul.f32 %v562, %v560
          %v626 = vmul.f32 %v562, %v561
          %627 = vst [vmem:[#allocation11] sm:$0xff] %v563
          %628 = vst [vmem:[#allocation11 + $0x8] sm:$0xff] %v564
          %629 = vst [vmem:[#allocation11 + $0x10] sm:$0xff] %v565
          %630 = vst [vmem:[#allocation11 + $0x18] sm:$0xff] %v566
          %631 = vst [vmem:[#allocation11 + $0x20] sm:$0xff] %v567
          %632 = vst [vmem:[#allocation11 + $0x28] sm:$0xff] %v568
          %633 = vst [vmem:[#allocation11 + $0x30] sm:$0xff] %v569
          %634 = vst [vmem:[#allocation11 + $0x38] sm:$0xff] %v570
          %635 = vst [vmem:[#allocation11 + $0x40] sm:$0xff] %v571
          %636 = vst [vmem:[#allocation11 + $0x48] sm:$0xff] %v572
          %637 = vst [vmem:[#allocation11 + $0x50] sm:$0xff] %v573
          %638 = vst [vmem:[#allocation11 + $0x58] sm:$0xff] %v574
          %639 = vst [vmem:[#allocation11 + $0x60] sm:$0xff] %v575
          %640 = vst [vmem:[#allocation11 + $0x68] sm:$0xff] %v576
          %641 = vst [vmem:[#allocation11 + $0x70] sm:$0xff] %v577
          %642 = vst [vmem:[#allocation11 + $0x78] sm:$0xff] %v578
          %643 = vst [vmem:[#allocation11 + $0x80] sm:$0xff] %v579
          %644 = vst [vmem:[#allocation11 + $0x88] sm:$0xff] %v580
          %645 = vst [vmem:[#allocation11 + $0x90] sm:$0xff] %v581
          %646 = vst [vmem:[#allocation11 + $0x98] sm:$0xff] %v582
          %647 = vst [vmem:[#allocation11 + $0xa0] sm:$0xff] %v583
          %648 = vst [vmem:[#allocation11 + $0xa8] sm:$0xff] %v584
          %649 = vst [vmem:[#allocation11 + $0xb0] sm:$0xff] %v585
          %650 = vst [vmem:[#allocation11 + $0xb8] sm:$0xff] %v586
          %651 = vst [vmem:[#allocation11 + $0xc0] sm:$0xff] %v587
          %652 = vst [vmem:[#allocation11 + $0xc8] sm:$0xff] %v588
          %653 = vst [vmem:[#allocation11 + $0xd0] sm:$0xff] %v589
          %654 = vst [vmem:[#allocation11 + $0xd8] sm:$0xff] %v590
          %655 = vst [vmem:[#allocation11 + $0xe0] sm:$0xff] %v591
          %656 = vst [vmem:[#allocation11 + $0xe8] sm:$0xff] %v592
          %657 = vst [vmem:[#allocation11 + $0xf0] sm:$0xff] %v593
          %658 = vst [vmem:[#allocation11 + $0xf8] sm:$0xff] %v594
          %659 = vst [vmem:[#allocation11 + $0x100] sm:$0xff] %v595
          %660 = vst [vmem:[#allocation11 + $0x108] sm:$0xff] %v596
          %661 = vst [vmem:[#allocation11 + $0x110] sm:$0xff] %v597
          %662 = vst [vmem:[#allocation11 + $0x118] sm:$0xff] %v598
          %663 = vst [vmem:[#allocation11 + $0x120] sm:$0xff] %v599
          %664 = vst [vmem:[#allocation11 + $0x128] sm:$0xff] %v600
          %665 = vst [vmem:[#allocation11 + $0x130] sm:$0xff] %v601
          %666 = vst [vmem:[#allocation11 + $0x138] sm:$0xff] %v602
          %667 = vst [vmem:[#allocation11 + $0x140] sm:$0xff] %v603
          %668 = vst [vmem:[#allocation11 + $0x148] sm:$0xff] %v604
          %669 = vst [vmem:[#allocation11 + $0x150] sm:$0xff] %v605
          %670 = vst [vmem:[#allocation11 + $0x158] sm:$0xff] %v606
          %671 = vst [vmem:[#allocation11 + $0x160] sm:$0xff] %v607
          %672 = vst [vmem:[#allocation11 + $0x168] sm:$0xff] %v608
          %673 = vst [vmem:[#allocation11 + $0x170] sm:$0xff] %v609
          %674 = vst [vmem:[#allocation11 + $0x178] sm:$0xff] %v610
          %675 = vst [vmem:[#allocation11 + $0x180] sm:$0xff] %v611
          %676 = vst [vmem:[#allocation11 + $0x188] sm:$0xff] %v612
          %677 = vst [vmem:[#allocation11 + $0x190] sm:$0xff] %v613
          %678 = vst [vmem:[#allocation11 + $0x198] sm:$0xff] %v614
          %679 = vst [vmem:[#allocation11 + $0x1a0] sm:$0xff] %v615
          %680 = vst [vmem:[#allocation11 + $0x1a8] sm:$0xff] %v616
          %681 = vst [vmem:[#allocation11 + $0x1b0] sm:$0xff] %v617
          %682 = vst [vmem:[#allocation11 + $0x1b8] sm:$0xff] %v618
          %683 = vst [vmem:[#allocation11 + $0x1c0] sm:$0xff] %v619
          %684 = vst [vmem:[#allocation11 + $0x1c8] sm:$0xff] %v620
          %685 = vst [vmem:[#allocation11 + $0x1d0] sm:$0xff] %v621
          %686 = vst [vmem:[#allocation11 + $0x1d8] sm:$0xff] %v622
          %687 = vst [vmem:[#allocation11 + $0x1e0] sm:$0xff] %v623
          %688 = vst [vmem:[#allocation11 + $0x1e8] sm:$0xff] %v624
          %689 = vst [vmem:[#allocation11 + $0x1f0] sm:$0xff] %v625
          %690 = vst [vmem:[#allocation11 + $0x1f8] sm:$0xff] %v626
        $region48: #{tpu_custom_call.1} parent=31 // pred_fallthru
          _
        %p691 = scmp.lt.s32.totalorder %s22, 0
        %s692 = ssub.s32 0, %s22
        %s693 = scalar_select %p691, %s692, %s22
        %s694 = sand.u32 %s693, 1
        %s695 = ssub.s32 0, %s694
        %s696 = scalar_select %p691, %s695, %s694
        %p697 = scmp.ne.s32.totalorder %s696, 0
        %p698 = scmp.lt.s32.totalorder %s696, 0
        %p699 = pnand %p698, %p697
        %p700 = pneg %p699
        %s701 = sadd.s32 %s696, 2
        %s702 = scalar_select %p700, %s701, %s696
        %p703 = scmp.eq.s32.totalorder %s702, 0
        // Predicated region
        $region49: #{tpu_custom_call.1} parent=31 // pred_check
          %p704 = pneg %p703
        $region50: #{tpu_custom_call.1} parent=31 // pred_check_branch
          %706 = sbr.rel (%p704) target = $region52
        $region51: #{tpu_custom_call.1} parent=31 // pred_region
          %v707 = vld [vmem:[#allocation9] sm:$0xff]
          %v708 = vld [vmem:[#allocation9 + $0x8] sm:$0xff]
          %v709 = vld [vmem:[#allocation9 + $0x10] sm:$0xff]
          %v710 = vld [vmem:[#allocation9 + $0x18] sm:$0xff]
          %v711 = vld [vmem:[#allocation9 + $0x20] sm:$0xff]
          %v712 = vld [vmem:[#allocation9 + $0x28] sm:$0xff]
          %v713 = vld [vmem:[#allocation9 + $0x30] sm:$0xff]
          %v714 = vld [vmem:[#allocation9 + $0x38] sm:$0xff]
          %v715 = vld [vmem:[#allocation9 + $0x40] sm:$0xff]
          %v716 = vld [vmem:[#allocation9 + $0x48] sm:$0xff]
          %v717 = vld [vmem:[#allocation9 + $0x50] sm:$0xff]
          %v718 = vld [vmem:[#allocation9 + $0x58] sm:$0xff]
          %v719 = vld [vmem:[#allocation9 + $0x60] sm:$0xff]
          %v720 = vld [vmem:[#allocation9 + $0x68] sm:$0xff]
          %v721 = vld [vmem:[#allocation9 + $0x70] sm:$0xff]
          %v722 = vld [vmem:[#allocation9 + $0x78] sm:$0xff]
          %v723 = vld [vmem:[#allocation9 + $0x80] sm:$0xff]
          %v724 = vld [vmem:[#allocation9 + $0x88] sm:$0xff]
          %v725 = vld [vmem:[#allocation9 + $0x90] sm:$0xff]
          %v726 = vld [vmem:[#allocation9 + $0x98] sm:$0xff]
          %v727 = vld [vmem:[#allocation9 + $0xa0] sm:$0xff]
          %v728 = vld [vmem:[#allocation9 + $0xa8] sm:$0xff]
          %v729 = vld [vmem:[#allocation9 + $0xb0] sm:$0xff]
          %v730 = vld [vmem:[#allocation9 + $0xb8] sm:$0xff]
          %v731 = vld [vmem:[#allocation9 + $0xc0] sm:$0xff]
          %v732 = vld [vmem:[#allocation9 + $0xc8] sm:$0xff]
          %v733 = vld [vmem:[#allocation9 + $0xd0] sm:$0xff]
          %v734 = vld [vmem:[#allocation9 + $0xd8] sm:$0xff]
          %v735 = vld [vmem:[#allocation9 + $0xe0] sm:$0xff]
          %v736 = vld [vmem:[#allocation9 + $0xe8] sm:$0xff]
          %v737 = vld [vmem:[#allocation9 + $0xf0] sm:$0xff]
          %v738 = vld [vmem:[#allocation9 + $0xf8] sm:$0xff]
          %v739 = vld [vmem:[#allocation9 + $0x100] sm:$0xff]
          %v740 = vld [vmem:[#allocation9 + $0x108] sm:$0xff]
          %v741 = vld [vmem:[#allocation9 + $0x110] sm:$0xff]
          %v742 = vld [vmem:[#allocation9 + $0x118] sm:$0xff]
          %v743 = vld [vmem:[#allocation9 + $0x120] sm:$0xff]
          %v744 = vld [vmem:[#allocation9 + $0x128] sm:$0xff]
          %v745 = vld [vmem:[#allocation9 + $0x130] sm:$0xff]
          %v746 = vld [vmem:[#allocation9 + $0x138] sm:$0xff]
          %v747 = vld [vmem:[#allocation9 + $0x140] sm:$0xff]
          %v748 = vld [vmem:[#allocation9 + $0x148] sm:$0xff]
          %v749 = vld [vmem:[#allocation9 + $0x150] sm:$0xff]
          %v750 = vld [vmem:[#allocation9 + $0x158] sm:$0xff]
          %v751 = vld [vmem:[#allocation9 + $0x160] sm:$0xff]
          %v752 = vld [vmem:[#allocation9 + $0x168] sm:$0xff]
          %v753 = vld [vmem:[#allocation9 + $0x170] sm:$0xff]
          %v754 = vld [vmem:[#allocation9 + $0x178] sm:$0xff]
          %v755 = vld [vmem:[#allocation9 + $0x180] sm:$0xff]
          %v756 = vld [vmem:[#allocation9 + $0x188] sm:$0xff]
          %v757 = vld [vmem:[#allocation9 + $0x190] sm:$0xff]
          %v758 = vld [vmem:[#allocation9 + $0x198] sm:$0xff]
          %v759 = vld [vmem:[#allocation9 + $0x1a0] sm:$0xff]
          %v760 = vld [vmem:[#allocation9 + $0x1a8] sm:$0xff]
          %v761 = vld [vmem:[#allocation9 + $0x1b0] sm:$0xff]
          %v762 = vld [vmem:[#allocation9 + $0x1b8] sm:$0xff]
          %v763 = vld [vmem:[#allocation9 + $0x1c0] sm:$0xff]
          %v764 = vld [vmem:[#allocation9 + $0x1c8] sm:$0xff]
          %v765 = vld [vmem:[#allocation9 + $0x1d0] sm:$0xff]
          %v766 = vld [vmem:[#allocation9 + $0x1d8] sm:$0xff]
          %v767 = vld [vmem:[#allocation9 + $0x1e0] sm:$0xff]
          %v768 = vld [vmem:[#allocation9 + $0x1e8] sm:$0xff]
          %v769 = vld [vmem:[#allocation9 + $0x1f0] sm:$0xff]
          %v770 = vld [vmem:[#allocation9 + $0x1f8] sm:$0xff]
          %v771 = vld [vmem:[#allocation9 + $0x200] sm:$0xff]
          %v772 = vld [vmem:[#allocation9 + $0x208] sm:$0xff]
          %v773 = vld [vmem:[#allocation9 + $0x210] sm:$0xff]
          %v774 = vld [vmem:[#allocation9 + $0x218] sm:$0xff]
          %v775 = vld [vmem:[#allocation9 + $0x220] sm:$0xff]
          %v776 = vld [vmem:[#allocation9 + $0x228] sm:$0xff]
          %v777 = vld [vmem:[#allocation9 + $0x230] sm:$0xff]
          %v778 = vld [vmem:[#allocation9 + $0x238] sm:$0xff]
          %v779 = vld [vmem:[#allocation9 + $0x240] sm:$0xff]
          %v780 = vld [vmem:[#allocation9 + $0x248] sm:$0xff]
          %v781 = vld [vmem:[#allocation9 + $0x250] sm:$0xff]
          %v782 = vld [vmem:[#allocation9 + $0x258] sm:$0xff]
          %v783 = vld [vmem:[#allocation9 + $0x260] sm:$0xff]
          %v784 = vld [vmem:[#allocation9 + $0x268] sm:$0xff]
          %v785 = vld [vmem:[#allocation9 + $0x270] sm:$0xff]
          %v786 = vld [vmem:[#allocation9 + $0x278] sm:$0xff]
          %v787 = vld [vmem:[#allocation9 + $0x280] sm:$0xff]
          %v788 = vld [vmem:[#allocation9 + $0x288] sm:$0xff]
          %v789 = vld [vmem:[#allocation9 + $0x290] sm:$0xff]
          %v790 = vld [vmem:[#allocation9 + $0x298] sm:$0xff]
          %v791 = vld [vmem:[#allocation9 + $0x2a0] sm:$0xff]
          %v792 = vld [vmem:[#allocation9 + $0x2a8] sm:$0xff]
          %v793 = vld [vmem:[#allocation9 + $0x2b0] sm:$0xff]
          %v794 = vld [vmem:[#allocation9 + $0x2b8] sm:$0xff]
          %v795 = vld [vmem:[#allocation9 + $0x2c0] sm:$0xff]
          %v796 = vld [vmem:[#allocation9 + $0x2c8] sm:$0xff]
          %v797 = vld [vmem:[#allocation9 + $0x2d0] sm:$0xff]
          %v798 = vld [vmem:[#allocation9 + $0x2d8] sm:$0xff]
          %v799 = vld [vmem:[#allocation9 + $0x2e0] sm:$0xff]
          %v800 = vld [vmem:[#allocation9 + $0x2e8] sm:$0xff]
          %v801 = vld [vmem:[#allocation9 + $0x2f0] sm:$0xff]
          %v802 = vld [vmem:[#allocation9 + $0x2f8] sm:$0xff]
          %v803 = vld [vmem:[#allocation9 + $0x300] sm:$0xff]
          %v804 = vld [vmem:[#allocation9 + $0x308] sm:$0xff]
          %v805 = vld [vmem:[#allocation9 + $0x310] sm:$0xff]
          %v806 = vld [vmem:[#allocation9 + $0x318] sm:$0xff]
          %v807 = vld [vmem:[#allocation9 + $0x320] sm:$0xff]
          %v808 = vld [vmem:[#allocation9 + $0x328] sm:$0xff]
          %v809 = vld [vmem:[#allocation9 + $0x330] sm:$0xff]
          %v810 = vld [vmem:[#allocation9 + $0x338] sm:$0xff]
          %v811 = vld [vmem:[#allocation9 + $0x340] sm:$0xff]
          %v812 = vld [vmem:[#allocation9 + $0x348] sm:$0xff]
          %v813 = vld [vmem:[#allocation9 + $0x350] sm:$0xff]
          %v814 = vld [vmem:[#allocation9 + $0x358] sm:$0xff]
          %v815 = vld [vmem:[#allocation9 + $0x360] sm:$0xff]
          %v816 = vld [vmem:[#allocation9 + $0x368] sm:$0xff]
          %v817 = vld [vmem:[#allocation9 + $0x370] sm:$0xff]
          %v818 = vld [vmem:[#allocation9 + $0x378] sm:$0xff]
          %v819 = vld [vmem:[#allocation9 + $0x380] sm:$0xff]
          %v820 = vld [vmem:[#allocation9 + $0x388] sm:$0xff]
          %v821 = vld [vmem:[#allocation9 + $0x390] sm:$0xff]
          %v822 = vld [vmem:[#allocation9 + $0x398] sm:$0xff]
          %v823 = vld [vmem:[#allocation9 + $0x3a0] sm:$0xff]
          %v824 = vld [vmem:[#allocation9 + $0x3a8] sm:$0xff]
          %v825 = vld [vmem:[#allocation9 + $0x3b0] sm:$0xff]
          %v826 = vld [vmem:[#allocation9 + $0x3b8] sm:$0xff]
          %v827 = vld [vmem:[#allocation9 + $0x3c0] sm:$0xff]
          %v828 = vld [vmem:[#allocation9 + $0x3c8] sm:$0xff]
          %v829 = vld [vmem:[#allocation9 + $0x3d0] sm:$0xff]
          %v830 = vld [vmem:[#allocation9 + $0x3d8] sm:$0xff]
          %v831 = vld [vmem:[#allocation9 + $0x3e0] sm:$0xff]
          %v832 = vld [vmem:[#allocation9 + $0x3e8] sm:$0xff]
          %v833 = vld [vmem:[#allocation9 + $0x3f0] sm:$0xff]
          %v834 = vld [vmem:[#allocation9 + $0x3f8] sm:$0xff]
          %v835 = vld [vmem:[#allocation2] sm:$0xff]
          %v836 = vld [vmem:[#allocation2 + $0x8] sm:$0xff]
          %v837 = vld [vmem:[#allocation2 + $0x10] sm:$0xff]
          %v838 = vld [vmem:[#allocation2 + $0x18] sm:$0xff]
          %v839 = vld [vmem:[#allocation2 + $0x20] sm:$0xff]
          %v840 = vld [vmem:[#allocation2 + $0x28] sm:$0xff]
          %v841 = vld [vmem:[#allocation2 + $0x30] sm:$0xff]
          %v842 = vld [vmem:[#allocation2 + $0x38] sm:$0xff]
          %v843 = vld [vmem:[#allocation2 + $0x40] sm:$0xff]
          %v844 = vld [vmem:[#allocation2 + $0x48] sm:$0xff]
          %v845 = vld [vmem:[#allocation2 + $0x50] sm:$0xff]
          %v846 = vld [vmem:[#allocation2 + $0x58] sm:$0xff]
          %v847 = vld [vmem:[#allocation2 + $0x60] sm:$0xff]
          %v848 = vld [vmem:[#allocation2 + $0x68] sm:$0xff]
          %v849 = vld [vmem:[#allocation2 + $0x70] sm:$0xff]
          %v850 = vld [vmem:[#allocation2 + $0x78] sm:$0xff]
          %v851 = vld [vmem:[#allocation2 + $0x80] sm:$0xff]
          %v852 = vld [vmem:[#allocation2 + $0x88] sm:$0xff]
          %v853 = vld [vmem:[#allocation2 + $0x90] sm:$0xff]
          %v854 = vld [vmem:[#allocation2 + $0x98] sm:$0xff]
          %v855 = vld [vmem:[#allocation2 + $0xa0] sm:$0xff]
          %v856 = vld [vmem:[#allocation2 + $0xa8] sm:$0xff]
          %v857 = vld [vmem:[#allocation2 + $0xb0] sm:$0xff]
          %v858 = vld [vmem:[#allocation2 + $0xb8] sm:$0xff]
          %v859 = vld [vmem:[#allocation2 + $0xc0] sm:$0xff]
          %v860 = vld [vmem:[#allocation2 + $0xc8] sm:$0xff]
          %v861 = vld [vmem:[#allocation2 + $0xd0] sm:$0xff]
          %v862 = vld [vmem:[#allocation2 + $0xd8] sm:$0xff]
          %v863 = vld [vmem:[#allocation2 + $0xe0] sm:$0xff]
          %v864 = vld [vmem:[#allocation2 + $0xe8] sm:$0xff]
          %v865 = vld [vmem:[#allocation2 + $0xf0] sm:$0xff]
          %v866 = vld [vmem:[#allocation2 + $0xf8] sm:$0xff]
          %v995 = vunpack.c.l.b16 %v707
          %v996 = vunpack.c.h.b16 %v707
          %v997 = vunpack.c.l.b16 %v708
          %v998 = vunpack.c.h.b16 %v708
          %v999 = vunpack.c.l.b16 %v709
          %v1000 = vunpack.c.h.b16 %v709
          %v1001 = vunpack.c.l.b16 %v710
          %v1002 = vunpack.c.h.b16 %v710
          %v1003 = vunpack.c.l.b16 %v711
          %v1004 = vunpack.c.h.b16 %v711
          %v1005 = vunpack.c.l.b16 %v712
          %v1006 = vunpack.c.h.b16 %v712
          %v1007 = vunpack.c.l.b16 %v713
          %v1008 = vunpack.c.h.b16 %v713
          %v1009 = vunpack.c.l.b16 %v714
          %v1010 = vunpack.c.h.b16 %v714
          %v1011 = vunpack.c.l.b16 %v715
          %v1012 = vunpack.c.h.b16 %v715
          %v1013 = vunpack.c.l.b16 %v716
          %v1014 = vunpack.c.h.b16 %v716
          %v1015 = vunpack.c.l.b16 %v717
          %v1016 = vunpack.c.h.b16 %v717
          %v1017 = vunpack.c.l.b16 %v718
          %v1018 = vunpack.c.h.b16 %v718
          %v1019 = vunpack.c.l.b16 %v719
          %v1020 = vunpack.c.h.b16 %v719
          %v1021 = vunpack.c.l.b16 %v720
          %v1022 = vunpack.c.h.b16 %v720
          %v1023 = vunpack.c.l.b16 %v721
          %v1024 = vunpack.c.h.b16 %v721
          %v1025 = vunpack.c.l.b16 %v722
          %v1026 = vunpack.c.h.b16 %v722
          %v1027 = vunpack.c.l.b16 %v723
          %v1028 = vunpack.c.h.b16 %v723
          %v1029 = vunpack.c.l.b16 %v724
          %v1030 = vunpack.c.h.b16 %v724
          %v1031 = vunpack.c.l.b16 %v725
          %v1032 = vunpack.c.h.b16 %v725
          %v1033 = vunpack.c.l.b16 %v726
          %v1034 = vunpack.c.h.b16 %v726
          %v1035 = vunpack.c.l.b16 %v727
          %v1036 = vunpack.c.h.b16 %v727
          %v1037 = vunpack.c.l.b16 %v728
          %v1038 = vunpack.c.h.b16 %v728
          %v1039 = vunpack.c.l.b16 %v729
          %v1040 = vunpack.c.h.b16 %v729
          %v1041 = vunpack.c.l.b16 %v730
          %v1042 = vunpack.c.h.b16 %v730
          %v1043 = vunpack.c.l.b16 %v731
          %v1044 = vunpack.c.h.b16 %v731
          %v1045 = vunpack.c.l.b16 %v732
          %v1046 = vunpack.c.h.b16 %v732
          %v1047 = vunpack.c.l.b16 %v733
          %v1048 = vunpack.c.h.b16 %v733
          %v1049 = vunpack.c.l.b16 %v734
          %v1050 = vunpack.c.h.b16 %v734
          %v1051 = vunpack.c.l.b16 %v735
          %v1052 = vunpack.c.h.b16 %v735
          %v1053 = vunpack.c.l.b16 %v736
          %v1054 = vunpack.c.h.b16 %v736
          %v1055 = vunpack.c.l.b16 %v737
          %v1056 = vunpack.c.h.b16 %v737
          %v1057 = vunpack.c.l.b16 %v738
          %v1058 = vunpack.c.h.b16 %v738
          %v1059 = vunpack.c.l.b16 %v739
          %v1060 = vunpack.c.h.b16 %v739
          %v1061 = vunpack.c.l.b16 %v740
          %v1062 = vunpack.c.h.b16 %v740
          %v1063 = vunpack.c.l.b16 %v741
          %v1064 = vunpack.c.h.b16 %v741
          %v1065 = vunpack.c.l.b16 %v742
          %v1066 = vunpack.c.h.b16 %v742
          %v1067 = vunpack.c.l.b16 %v743
          %v1068 = vunpack.c.h.b16 %v743
          %v1069 = vunpack.c.l.b16 %v744
          %v1070 = vunpack.c.h.b16 %v744
          %v1071 = vunpack.c.l.b16 %v745
          %v1072 = vunpack.c.h.b16 %v745
          %v1073 = vunpack.c.l.b16 %v746
          %v1074 = vunpack.c.h.b16 %v746
          %v1075 = vunpack.c.l.b16 %v747
          %v1076 = vunpack.c.h.b16 %v747
          %v1077 = vunpack.c.l.b16 %v748
          %v1078 = vunpack.c.h.b16 %v748
          %v1079 = vunpack.c.l.b16 %v749
          %v1080 = vunpack.c.h.b16 %v749
          %v1081 = vunpack.c.l.b16 %v750
          %v1082 = vunpack.c.h.b16 %v750
          %v1083 = vunpack.c.l.b16 %v751
          %v1084 = vunpack.c.h.b16 %v751
          %v1085 = vunpack.c.l.b16 %v752
          %v1086 = vunpack.c.h.b16 %v752
          %v1087 = vunpack.c.l.b16 %v753
          %v1088 = vunpack.c.h.b16 %v753
          %v1089 = vunpack.c.l.b16 %v754
          %v1090 = vunpack.c.h.b16 %v754
          %v1091 = vunpack.c.l.b16 %v755
          %v1092 = vunpack.c.h.b16 %v755
          %v1093 = vunpack.c.l.b16 %v756
          %v1094 = vunpack.c.h.b16 %v756
          %v1095 = vunpack.c.l.b16 %v757
          %v1096 = vunpack.c.h.b16 %v757
          %v1097 = vunpack.c.l.b16 %v758
          %v1098 = vunpack.c.h.b16 %v758
          %v1099 = vunpack.c.l.b16 %v759
          %v1100 = vunpack.c.h.b16 %v759
          %v1101 = vunpack.c.l.b16 %v760
          %v1102 = vunpack.c.h.b16 %v760
          %v1103 = vunpack.c.l.b16 %v761
          %v1104 = vunpack.c.h.b16 %v761
          %v1105 = vunpack.c.l.b16 %v762
          %v1106 = vunpack.c.h.b16 %v762
          %v1107 = vunpack.c.l.b16 %v763
          %v1108 = vunpack.c.h.b16 %v763
          %v1109 = vunpack.c.l.b16 %v764
          %v1110 = vunpack.c.h.b16 %v764
          %v1111 = vunpack.c.l.b16 %v765
          %v1112 = vunpack.c.h.b16 %v765
          %v1113 = vunpack.c.l.b16 %v766
          %v1114 = vunpack.c.h.b16 %v766
          %v1115 = vunpack.c.l.b16 %v767
          %v1116 = vunpack.c.h.b16 %v767
          %v1117 = vunpack.c.l.b16 %v768
          %v1118 = vunpack.c.h.b16 %v768
          %v1119 = vunpack.c.l.b16 %v769
          %v1120 = vunpack.c.h.b16 %v769
          %v1121 = vunpack.c.l.b16 %v770
          %v1122 = vunpack.c.h.b16 %v770
          %v1123 = vunpack.c.l.b16 %v771
          %v1124 = vunpack.c.h.b16 %v771
          %v1125 = vunpack.c.l.b16 %v772
          %v1126 = vunpack.c.h.b16 %v772
          %v1127 = vunpack.c.l.b16 %v773
          %v1128 = vunpack.c.h.b16 %v773
          %v1129 = vunpack.c.l.b16 %v774
          %v1130 = vunpack.c.h.b16 %v774
          %v1131 = vunpack.c.l.b16 %v775
          %v1132 = vunpack.c.h.b16 %v775
          %v1133 = vunpack.c.l.b16 %v776
          %v1134 = vunpack.c.h.b16 %v776
          %v1135 = vunpack.c.l.b16 %v777
          %v1136 = vunpack.c.h.b16 %v777
          %v1137 = vunpack.c.l.b16 %v778
          %v1138 = vunpack.c.h.b16 %v778
          %v1139 = vunpack.c.l.b16 %v779
          %v1140 = vunpack.c.h.b16 %v779
          %v1141 = vunpack.c.l.b16 %v780
          %v1142 = vunpack.c.h.b16 %v780
          %v1143 = vunpack.c.l.b16 %v781
          %v1144 = vunpack.c.h.b16 %v781
          %v1145 = vunpack.c.l.b16 %v782
          %v1146 = vunpack.c.h.b16 %v782
          %v1147 = vunpack.c.l.b16 %v783
          %v1148 = vunpack.c.h.b16 %v783
          %v1149 = vunpack.c.l.b16 %v784
          %v1150 = vunpack.c.h.b16 %v784
          %v1151 = vunpack.c.l.b16 %v785
          %v1152 = vunpack.c.h.b16 %v785
          %v1153 = vunpack.c.l.b16 %v786
          %v1154 = vunpack.c.h.b16 %v786
          %v1155 = vunpack.c.l.b16 %v787
          %v1156 = vunpack.c.h.b16 %v787
          %v1157 = vunpack.c.l.b16 %v788
          %v1158 = vunpack.c.h.b16 %v788
          %v1159 = vunpack.c.l.b16 %v789
          %v1160 = vunpack.c.h.b16 %v789
          %v1161 = vunpack.c.l.b16 %v790
          %v1162 = vunpack.c.h.b16 %v790
          %v1163 = vunpack.c.l.b16 %v791
          %v1164 = vunpack.c.h.b16 %v791
          %v1165 = vunpack.c.l.b16 %v792
          %v1166 = vunpack.c.h.b16 %v792
          %v1167 = vunpack.c.l.b16 %v793
          %v1168 = vunpack.c.h.b16 %v793
          %v1169 = vunpack.c.l.b16 %v794
          %v1170 = vunpack.c.h.b16 %v794
          %v1171 = vunpack.c.l.b16 %v795
          %v1172 = vunpack.c.h.b16 %v795
          %v1173 = vunpack.c.l.b16 %v796
          %v1174 = vunpack.c.h.b16 %v796
          %v1175 = vunpack.c.l.b16 %v797
          %v1176 = vunpack.c.h.b16 %v797
          %v1177 = vunpack.c.l.b16 %v798
          %v1178 = vunpack.c.h.b16 %v798
          %v1179 = vunpack.c.l.b16 %v799
          %v1180 = vunpack.c.h.b16 %v799
          %v1181 = vunpack.c.l.b16 %v800
          %v1182 = vunpack.c.h.b16 %v800
          %v1183 = vunpack.c.l.b16 %v801
          %v1184 = vunpack.c.h.b16 %v801
          %v1185 = vunpack.c.l.b16 %v802
          %v1186 = vunpack.c.h.b16 %v802
          %v1187 = vunpack.c.l.b16 %v803
          %v1188 = vunpack.c.h.b16 %v803
          %v1189 = vunpack.c.l.b16 %v804
          %v1190 = vunpack.c.h.b16 %v804
          %v1191 = vunpack.c.l.b16 %v805
          %v1192 = vunpack.c.h.b16 %v805
          %v1193 = vunpack.c.l.b16 %v806
          %v1194 = vunpack.c.h.b16 %v806
          %v1195 = vunpack.c.l.b16 %v807
          %v1196 = vunpack.c.h.b16 %v807
          %v1197 = vunpack.c.l.b16 %v808
          %v1198 = vunpack.c.h.b16 %v808
          %v1199 = vunpack.c.l.b16 %v809
          %v1200 = vunpack.c.h.b16 %v809
          %v1201 = vunpack.c.l.b16 %v810
          %v1202 = vunpack.c.h.b16 %v810
          %v1203 = vunpack.c.l.b16 %v811
          %v1204 = vunpack.c.h.b16 %v811
          %v1205 = vunpack.c.l.b16 %v812
          %v1206 = vunpack.c.h.b16 %v812
          %v1207 = vunpack.c.l.b16 %v813
          %v1208 = vunpack.c.h.b16 %v813
          %v1209 = vunpack.c.l.b16 %v814
          %v1210 = vunpack.c.h.b16 %v814
          %v1211 = vunpack.c.l.b16 %v815
          %v1212 = vunpack.c.h.b16 %v815
          %v1213 = vunpack.c.l.b16 %v816
          %v1214 = vunpack.c.h.b16 %v816
          %v1215 = vunpack.c.l.b16 %v817
          %v1216 = vunpack.c.h.b16 %v817
          %v1217 = vunpack.c.l.b16 %v818
          %v1218 = vunpack.c.h.b16 %v818
          %v1219 = vunpack.c.l.b16 %v819
          %v1220 = vunpack.c.h.b16 %v819
          %v1221 = vunpack.c.l.b16 %v820
          %v1222 = vunpack.c.h.b16 %v820
          %v1223 = vunpack.c.l.b16 %v821
          %v1224 = vunpack.c.h.b16 %v821
          %v1225 = vunpack.c.l.b16 %v822
          %v1226 = vunpack.c.h.b16 %v822
          %v1227 = vunpack.c.l.b16 %v823
          %v1228 = vunpack.c.h.b16 %v823
          %v1229 = vunpack.c.l.b16 %v824
          %v1230 = vunpack.c.h.b16 %v824
          %v1231 = vunpack.c.l.b16 %v825
          %v1232 = vunpack.c.h.b16 %v825
          %v1233 = vunpack.c.l.b16 %v826
          %v1234 = vunpack.c.h.b16 %v826
          %v1235 = vunpack.c.l.b16 %v827
          %v1236 = vunpack.c.h.b16 %v827
          %v1237 = vunpack.c.l.b16 %v828
          %v1238 = vunpack.c.h.b16 %v828
          %v1239 = vunpack.c.l.b16 %v829
          %v1240 = vunpack.c.h.b16 %v829
          %v1241 = vunpack.c.l.b16 %v830
          %v1242 = vunpack.c.h.b16 %v830
          %v1243 = vunpack.c.l.b16 %v831
          %v1244 = vunpack.c.h.b16 %v831
          %v1245 = vunpack.c.l.b16 %v832
          %v1246 = vunpack.c.h.b16 %v832
          %v1247 = vunpack.c.l.b16 %v833
          %v1248 = vunpack.c.h.b16 %v833
          %v1249 = vunpack.c.l.b16 %v834
          %v1250 = vunpack.c.h.b16 %v834
          %v1251 = vpack.c.b16 %v999, %v995
          %v1252 = vpack.c.b16 %v1000, %v996
          %v1253 = vpack.c.b16 %v1001, %v997
          %v1254 = vpack.c.b16 %v1002, %v998
          %v1255 = vpack.c.b16 %v1007, %v1003
          %v1256 = vpack.c.b16 %v1008, %v1004
          %v1257 = vpack.c.b16 %v1009, %v1005
          %v1258 = vpack.c.b16 %v1010, %v1006
          %v1259 = vpack.c.b16 %v1015, %v1011
          %v1260 = vpack.c.b16 %v1016, %v1012
          %v1261 = vpack.c.b16 %v1017, %v1013
          %v1262 = vpack.c.b16 %v1018, %v1014
          %v1263 = vpack.c.b16 %v1023, %v1019
          %v1264 = vpack.c.b16 %v1024, %v1020
          %v1265 = vpack.c.b16 %v1025, %v1021
          %v1266 = vpack.c.b16 %v1026, %v1022
          %v1267 = vpack.c.b16 %v1031, %v1027
          %v1268 = vpack.c.b16 %v1032, %v1028
          %v1269 = vpack.c.b16 %v1033, %v1029
          %v1270 = vpack.c.b16 %v1034, %v1030
          %v1271 = vpack.c.b16 %v1039, %v1035
          %v1272 = vpack.c.b16 %v1040, %v1036
          %v1273 = vpack.c.b16 %v1041, %v1037
          %v1274 = vpack.c.b16 %v1042, %v1038
          %v1275 = vpack.c.b16 %v1047, %v1043
          %v1276 = vpack.c.b16 %v1048, %v1044
          %v1277 = vpack.c.b16 %v1049, %v1045
          %v1278 = vpack.c.b16 %v1050, %v1046
          %v1279 = vpack.c.b16 %v1055, %v1051
          %v1280 = vpack.c.b16 %v1056, %v1052
          %v1281 = vpack.c.b16 %v1057, %v1053
          %v1282 = vpack.c.b16 %v1058, %v1054
          %v1283 = vpack.c.b16 %v1063, %v1059
          %v1284 = vpack.c.b16 %v1064, %v1060
          %v1285 = vpack.c.b16 %v1065, %v1061
          %v1286 = vpack.c.b16 %v1066, %v1062
          %v1287 = vpack.c.b16 %v1071, %v1067
          %v1288 = vpack.c.b16 %v1072, %v1068
          %v1289 = vpack.c.b16 %v1073, %v1069
          %v1290 = vpack.c.b16 %v1074, %v1070
          %v1291 = vpack.c.b16 %v1079, %v1075
          %v1292 = vpack.c.b16 %v1080, %v1076
          %v1293 = vpack.c.b16 %v1081, %v1077
          %v1294 = vpack.c.b16 %v1082, %v1078
          %v1295 = vpack.c.b16 %v1087, %v1083
          %v1296 = vpack.c.b16 %v1088, %v1084
          %v1297 = vpack.c.b16 %v1089, %v1085
          %v1298 = vpack.c.b16 %v1090, %v1086
          %v1299 = vpack.c.b16 %v1095, %v1091
          %v1300 = vpack.c.b16 %v1096, %v1092
          %v1301 = vpack.c.b16 %v1097, %v1093
          %v1302 = vpack.c.b16 %v1098, %v1094
          %v1303 = vpack.c.b16 %v1103, %v1099
          %v1304 = vpack.c.b16 %v1104, %v1100
          %v1305 = vpack.c.b16 %v1105, %v1101
          %v1306 = vpack.c.b16 %v1106, %v1102
          %v1307 = vpack.c.b16 %v1111, %v1107
          %v1308 = vpack.c.b16 %v1112, %v1108
          %v1309 = vpack.c.b16 %v1113, %v1109
          %v1310 = vpack.c.b16 %v1114, %v1110
          %v1311 = vpack.c.b16 %v1119, %v1115
          %v1312 = vpack.c.b16 %v1120, %v1116
          %v1313 = vpack.c.b16 %v1121, %v1117
          %v1314 = vpack.c.b16 %v1122, %v1118
          %v1315 = vpack.c.b16 %v1127, %v1123
          %v1316 = vpack.c.b16 %v1128, %v1124
          %v1317 = vpack.c.b16 %v1129, %v1125
          %v1318 = vpack.c.b16 %v1130, %v1126
          %v1319 = vpack.c.b16 %v1135, %v1131
          %v1320 = vpack.c.b16 %v1136, %v1132
          %v1321 = vpack.c.b16 %v1137, %v1133
          %v1322 = vpack.c.b16 %v1138, %v1134
          %v1323 = vpack.c.b16 %v1143, %v1139
          %v1324 = vpack.c.b16 %v1144, %v1140
          %v1325 = vpack.c.b16 %v1145, %v1141
          %v1326 = vpack.c.b16 %v1146, %v1142
          %v1327 = vpack.c.b16 %v1151, %v1147
          %v1328 = vpack.c.b16 %v1152, %v1148
          %v1329 = vpack.c.b16 %v1153, %v1149
          %v1330 = vpack.c.b16 %v1154, %v1150
          %v1331 = vpack.c.b16 %v1159, %v1155
          %v1332 = vpack.c.b16 %v1160, %v1156
          %v1333 = vpack.c.b16 %v1161, %v1157
          %v1334 = vpack.c.b16 %v1162, %v1158
          %v1335 = vpack.c.b16 %v1167, %v1163
          %v1336 = vpack.c.b16 %v1168, %v1164
          %v1337 = vpack.c.b16 %v1169, %v1165
          %v1338 = vpack.c.b16 %v1170, %v1166
          %v1339 = vpack.c.b16 %v1175, %v1171
          %v1340 = vpack.c.b16 %v1176, %v1172
          %v1341 = vpack.c.b16 %v1177, %v1173
          %v1342 = vpack.c.b16 %v1178, %v1174
          %v1343 = vpack.c.b16 %v1183, %v1179
          %v1344 = vpack.c.b16 %v1184, %v1180
          %v1345 = vpack.c.b16 %v1185, %v1181
          %v1346 = vpack.c.b16 %v1186, %v1182
          %v1347 = vpack.c.b16 %v1191, %v1187
          %v1348 = vpack.c.b16 %v1192, %v1188
          %v1349 = vpack.c.b16 %v1193, %v1189
          %v1350 = vpack.c.b16 %v1194, %v1190
          %v1351 = vpack.c.b16 %v1199, %v1195
          %v1352 = vpack.c.b16 %v1200, %v1196
          %v1353 = vpack.c.b16 %v1201, %v1197
          %v1354 = vpack.c.b16 %v1202, %v1198
          %v1355 = vpack.c.b16 %v1207, %v1203
          %v1356 = vpack.c.b16 %v1208, %v1204
          %v1357 = vpack.c.b16 %v1209, %v1205
          %v1358 = vpack.c.b16 %v1210, %v1206
          %v1359 = vpack.c.b16 %v1215, %v1211
          %v1360 = vpack.c.b16 %v1216, %v1212
          %v1361 = vpack.c.b16 %v1217, %v1213
          %v1362 = vpack.c.b16 %v1218, %v1214
          %v1363 = vpack.c.b16 %v1223, %v1219
          %v1364 = vpack.c.b16 %v1224, %v1220
          %v1365 = vpack.c.b16 %v1225, %v1221
          %v1366 = vpack.c.b16 %v1226, %v1222
          %v1367 = vpack.c.b16 %v1231, %v1227
          %v1368 = vpack.c.b16 %v1232, %v1228
          %v1369 = vpack.c.b16 %v1233, %v1229
          %v1370 = vpack.c.b16 %v1234, %v1230
          %v1371 = vpack.c.b16 %v1239, %v1235
          %v1372 = vpack.c.b16 %v1240, %v1236
          %v1373 = vpack.c.b16 %v1241, %v1237
          %v1374 = vpack.c.b16 %v1242, %v1238
          %v1375 = vpack.c.b16 %v1247, %v1243
          %v1376 = vpack.c.b16 %v1248, %v1244
          %v1377 = vpack.c.b16 %v1249, %v1245
          %v1378 = vpack.c.b16 %v1250, %v1246
          %1507 = vmatprep.subr.bf16.mxu0 0
          %1508 = vmatpush1.bf16.msra.mxu0 %v835
          %1509 = vmatprep.subr.bf16.mxu0 0
          %1510 = vmatpush1.bf16.msra.mxu0 %v836
          %1511 = vmatprep.subr.bf16.mxu0 0
          %1512 = vmatpush1.bf16.msra.mxu0 %v837
          %1513 = vmatprep.subr.bf16.mxu0 0
          %1514 = vmatpush1.bf16.msra.mxu0 %v838
          %1515 = vmatprep.subr.bf16.mxu0 0
          %1516 = vmatpush1.bf16.msra.mxu0 %v839
          %1517 = vmatprep.subr.bf16.mxu0 0
          %1518 = vmatpush1.bf16.msra.mxu0 %v840
          %1519 = vmatprep.subr.bf16.mxu0 0
          %1520 = vmatpush1.bf16.msra.mxu0 %v841
          %1521 = vmatprep.subr.bf16.mxu0 0
          %1522 = vmatpush1.bf16.msra.mxu0 %v842
          %1523 = vmatprep.subr.bf16.mxu0 0
          %1524 = vmatpush1.bf16.msra.mxu0 %v843
          %1525 = vmatprep.subr.bf16.mxu0 0
          %1526 = vmatpush1.bf16.msra.mxu0 %v844
          %1527 = vmatprep.subr.bf16.mxu0 0
          %1528 = vmatpush1.bf16.msra.mxu0 %v845
          %1529 = vmatprep.subr.bf16.mxu0 0
          %1530 = vmatpush1.bf16.msra.mxu0 %v846
          %1531 = vmatprep.subr.bf16.mxu0 0
          %1532 = vmatpush1.bf16.msra.mxu0 %v847
          %1533 = vmatprep.subr.bf16.mxu0 0
          %1534 = vmatpush1.bf16.msra.mxu0 %v848
          %1535 = vmatprep.subr.bf16.mxu0 0
          %1536 = vmatpush1.bf16.msra.mxu0 %v849
          %1537 = vmatprep.subr.bf16.mxu0 0
          %1538 = vmatpush1.bf16.msra.mxu0 %v850
          %1539 = vmatprep.mubr.bf16.mxu0 %v1252
          %1540 = vmatmul.mubr.bf16.gmra.mrb[0].mxu0 %v1251
          %v1541 = vpop.f32.mrb[0].mxu0
          %v1542 = vadd.f32 0.0, %v1541
          %v1543 = vpop.f32.mrb[0].mxu0
          %v1544 = vpop.f32.mrb[0].mxu0
          %v1545 = vadd.f32 0.0, %v1544
          %v1546 = vpop.f32.mrb[0].mxu0
          %1547 = vmatprep.mubr.bf16.mxu0 %v1256
          %1548 = vmatmul.mubr.bf16.gmra.mrb[0].mxu0 %v1255
          %v1549 = vpop.f32.mrb[0].mxu0
          %v1550 = vadd.f32 0.0, %v1549
          %v1551 = vpop.f32.mrb[0].mxu0
          %v1552 = vpop.f32.mrb[0].mxu0
          %v1553 = vadd.f32 0.0, %v1552
          %v1554 = vpop.f32.mrb[0].mxu0
          %1555 = vmatprep.mubr.bf16.mxu0 %v1260
          %1556 = vmatmul.mubr.bf16.gmra.mrb[0].mxu0 %v1259
          %v1557 = vpop.f32.mrb[0].mxu0
          %v1558 = vadd.f32 0.0, %v1557
          %v1559 = vpop.f32.mrb[0].mxu0
          %v1560 = vpop.f32.mrb[0].mxu0
          %v1561 = vadd.f32 0.0, %v1560
          %v1562 = vpop.f32.mrb[0].mxu0
          %1563 = vmatprep.mubr.bf16.mxu0 %v1264
          %1564 = vmatmul.mubr.bf16.gmra.mrb[0].mxu0 %v1263
          %v1565 = vpop.f32.mrb[0].mxu0
          %v1566 = vadd.f32 0.0, %v1565
          %v1567 = vpop.f32.mrb[0].mxu0
          %v1568 = vpop.f32.mrb[0].mxu0
          %v1569 = vadd.f32 0.0, %v1568
          %v1570 = vpop.f32.mrb[0].mxu0
          %1571 = vmatprep.mubr.bf16.mxu0 %v1268
          %1572 = vmatmul.mubr.bf16.gmra.mrb[0].mxu0 %v1267
          %v1573 = vpop.f32.mrb[0].mxu0
          %v1574 = vadd.f32 0.0, %v1573
          %v1575 = vpop.f32.mrb[0].mxu0
          %v1576 = vpop.f32.mrb[0].mxu0
          %v1577 = vadd.f32 0.0, %v1576
          %v1578 = vpop.f32.mrb[0].mxu0
          %1579 = vmatprep.mubr.bf16.mxu0 %v1272
          %1580 = vmatmul.mubr.bf16.gmra.mrb[0].mxu0 %v1271
          %v1581 = vpop.f32.mrb[0].mxu0
          %v1582 = vadd.f32 0.0, %v1581
          %v1583 = vpop.f32.mrb[0].mxu0
          %v1584 = vpop.f32.mrb[0].mxu0
          %v1585 = vadd.f32 0.0, %v1584
          %v1586 = vpop.f32.mrb[0].mxu0
          %1587 = vmatprep.mubr.bf16.mxu0 %v1276
          %1588 = vmatmul.mubr.bf16.gmra.mrb[0].mxu0 %v1275
          %v1589 = vpop.f32.mrb[0].mxu0
          %v1590 = vadd.f32 0.0, %v1589
          %v1591 = vpop.f32.mrb[0].mxu0
          %v1592 = vpop.f32.mrb[0].mxu0
          %v1593 = vadd.f32 0.0, %v1592
          %v1594 = vpop.f32.mrb[0].mxu0
          %1595 = vmatprep.mubr.bf16.mxu0 %v1280
          %1596 = vmatmul.mubr.bf16.gmra.mrb[0].mxu0 %v1279
          %v1597 = vpop.f32.mrb[0].mxu0
          %v1598 = vadd.f32 0.0, %v1597
          %v1599 = vpop.f32.mrb[0].mxu0
          %v1600 = vpop.f32.mrb[0].mxu0
          %v1601 = vadd.f32 0.0, %v1600
          %v1602 = vpop.f32.mrb[0].mxu0
          %1603 = vmatprep.mubr.bf16.mxu0 %v1284
          %1604 = vmatmul.mubr.bf16.gmra.mrb[0].mxu0 %v1283
          %v1605 = vpop.f32.mrb[0].mxu0
          %v1606 = vadd.f32 0.0, %v1605
          %v1607 = vpop.f32.mrb[0].mxu0
          %v1608 = vpop.f32.mrb[0].mxu0
          %v1609 = vadd.f32 0.0, %v1608
          %v1610 = vpop.f32.mrb[0].mxu0
          %1611 = vmatprep.mubr.bf16.mxu0 %v1288
          %1612 = vmatmul.mubr.bf16.gmra.mrb[0].mxu0 %v1287
          %v1613 = vpop.f32.mrb[0].mxu0
          %v1614 = vadd.f32 0.0, %v1613
          %v1615 = vpop.f32.mrb[0].mxu0
          %v1616 = vpop.f32.mrb[0].mxu0
          %v1617 = vadd.f32 0.0, %v1616
          %v1618 = vpop.f32.mrb[0].mxu0
          %1619 = vmatprep.mubr.bf16.mxu0 %v1292
          %1620 = vmatmul.mubr.bf16.gmra.mrb[0].mxu0 %v1291
          %v1621 = vpop.f32.mrb[0].mxu0
          %v1622 = vadd.f32 0.0, %v1621
          %v1623 = vpop.f32.mrb[0].mxu0
          %v1624 = vpop.f32.mrb[0].mxu0
          %v1625 = vadd.f32 0.0, %v1624
          %v1626 = vpop.f32.mrb[0].mxu0
          %1627 = vmatprep.mubr.bf16.mxu0 %v1296
          %1628 = vmatmul.mubr.bf16.gmra.mrb[0].mxu0 %v1295
          %v1629 = vpop.f32.mrb[0].mxu0
          %v1630 = vadd.f32 0.0, %v1629
          %v1631 = vpop.f32.mrb[0].mxu0
          %v1632 = vpop.f32.mrb[0].mxu0
          %v1633 = vadd.f32 0.0, %v1632
          %v1634 = vpop.f32.mrb[0].mxu0
          %1635 = vmatprep.mubr.bf16.mxu0 %v1300
          %1636 = vmatmul.mubr.bf16.gmra.mrb[0].mxu0 %v1299
          %v1637 = vpop.f32.mrb[0].mxu0
          %v1638 = vadd.f32 0.0, %v1637
          %v1639 = vpop.f32.mrb[0].mxu0
          %v1640 = vpop.f32.mrb[0].mxu0
          %v1641 = vadd.f32 0.0, %v1640
          %v1642 = vpop.f32.mrb[0].mxu0
          %1643 = vmatprep.mubr.bf16.mxu0 %v1304
          %1644 = vmatmul.mubr.bf16.gmra.mrb[0].mxu0 %v1303
          %v1645 = vpop.f32.mrb[0].mxu0
          %v1646 = vadd.f32 0.0, %v1645
          %v1647 = vpop.f32.mrb[0].mxu0
          %v1648 = vpop.f32.mrb[0].mxu0
          %v1649 = vadd.f32 0.0, %v1648
          %v1650 = vpop.f32.mrb[0].mxu0
          %1651 = vmatprep.mubr.bf16.mxu0 %v1308
          %1652 = vmatmul.mubr.bf16.gmra.mrb[0].mxu0 %v1307
          %v1653 = vpop.f32.mrb[0].mxu0
          %v1654 = vadd.f32 0.0, %v1653
          %v1655 = vpop.f32.mrb[0].mxu0
          %v1656 = vpop.f32.mrb[0].mxu0
          %v1657 = vadd.f32 0.0, %v1656
          %v1658 = vpop.f32.mrb[0].mxu0
          %1659 = vmatprep.mubr.bf16.mxu0 %v1312
          %1660 = vmatmul.mubr.bf16.gmra.mrb[0].mxu0 %v1311
          %v1661 = vpop.f32.mrb[0].mxu0
          %v1662 = vadd.f32 0.0, %v1661
          %v1663 = vpop.f32.mrb[0].mxu0
          %v1664 = vpop.f32.mrb[0].mxu0
          %v1665 = vadd.f32 0.0, %v1664
          %v1666 = vpop.f32.mrb[0].mxu0
          %1667 = vmatprep.mubr.bf16.mxu0 %v1316
          %1668 = vmatmul.mubr.bf16.gmra.mrb[0].mxu0 %v1315
          %v1669 = vpop.f32.mrb[0].mxu0
          %v1670 = vadd.f32 0.0, %v1669
          %v1671 = vpop.f32.mrb[0].mxu0
          %v1672 = vpop.f32.mrb[0].mxu0
          %v1673 = vadd.f32 0.0, %v1672
          %v1674 = vpop.f32.mrb[0].mxu0
          %1675 = vmatprep.mubr.bf16.mxu0 %v1320
          %1676 = vmatmul.mubr.bf16.gmra.mrb[0].mxu0 %v1319
          %v1677 = vpop.f32.mrb[0].mxu0
          %v1678 = vadd.f32 0.0, %v1677
          %v1679 = vpop.f32.mrb[0].mxu0
          %v1680 = vpop.f32.mrb[0].mxu0
          %v1681 = vadd.f32 0.0, %v1680
          %v1682 = vpop.f32.mrb[0].mxu0
          %1683 = vmatprep.mubr.bf16.mxu0 %v1324
          %1684 = vmatmul.mubr.bf16.gmra.mrb[0].mxu0 %v1323
          %v1685 = vpop.f32.mrb[0].mxu0
          %v1686 = vadd.f32 0.0, %v1685
          %v1687 = vpop.f32.mrb[0].mxu0
          %v1688 = vpop.f32.mrb[0].mxu0
          %v1689 = vadd.f32 0.0, %v1688
          %v1690 = vpop.f32.mrb[0].mxu0
          %1691 = vmatprep.mubr.bf16.mxu0 %v1328
          %1692 = vmatmul.mubr.bf16.gmra.mrb[0].mxu0 %v1327
          %v1693 = vpop.f32.mrb[0].mxu0
          %v1694 = vadd.f32 0.0, %v1693
          %v1695 = vpop.f32.mrb[0].mxu0
          %v1696 = vpop.f32.mrb[0].mxu0
          %v1697 = vadd.f32 0.0, %v1696
          %v1698 = vpop.f32.mrb[0].mxu0
          %1699 = vmatprep.mubr.bf16.mxu0 %v1332
          %1700 = vmatmul.mubr.bf16.gmra.mrb[0].mxu0 %v1331
          %v1701 = vpop.f32.mrb[0].mxu0
          %v1702 = vadd.f32 0.0, %v1701
          %v1703 = vpop.f32.mrb[0].mxu0
          %v1704 = vpop.f32.mrb[0].mxu0
          %v1705 = vadd.f32 0.0, %v1704
          %v1706 = vpop.f32.mrb[0].mxu0
          %1707 = vmatprep.mubr.bf16.mxu0 %v1336
          %1708 = vmatmul.mubr.bf16.gmra.mrb[0].mxu0 %v1335
          %v1709 = vpop.f32.mrb[0].mxu0
          %v1710 = vadd.f32 0.0, %v1709
          %v1711 = vpop.f32.mrb[0].mxu0
          %v1712 = vpop.f32.mrb[0].mxu0
          %v1713 = vadd.f32 0.0, %v1712
          %v1714 = vpop.f32.mrb[0].mxu0
          %1715 = vmatprep.mubr.bf16.mxu0 %v1340
          %1716 = vmatmul.mubr.bf16.gmra.mrb[0].mxu0 %v1339
          %v1717 = vpop.f32.mrb[0].mxu0
          %v1718 = vadd.f32 0.0, %v1717
          %v1719 = vpop.f32.mrb[0].mxu0
          %v1720 = vpop.f32.mrb[0].mxu0
          %v1721 = vadd.f32 0.0, %v1720
          %v1722 = vpop.f32.mrb[0].mxu0
          %1723 = vmatprep.mubr.bf16.mxu0 %v1344
          %1724 = vmatmul.mubr.bf16.gmra.mrb[0].mxu0 %v1343
          %v1725 = vpop.f32.mrb[0].mxu0
          %v1726 = vadd.f32 0.0, %v1725
          %v1727 = vpop.f32.mrb[0].mxu0
          %v1728 = vpop.f32.mrb[0].mxu0
          %v1729 = vadd.f32 0.0, %v1728
          %v1730 = vpop.f32.mrb[0].mxu0
          %1731 = vmatprep.mubr.bf16.mxu0 %v1348
          %1732 = vmatmul.mubr.bf16.gmra.mrb[0].mxu0 %v1347
          %v1733 = vpop.f32.mrb[0].mxu0
          %v1734 = vadd.f32 0.0, %v1733
          %v1735 = vpop.f32.mrb[0].mxu0
          %v1736 = vpop.f32.mrb[0].mxu0
          %v1737 = vadd.f32 0.0, %v1736
          %v1738 = vpop.f32.mrb[0].mxu0
          %1739 = vmatprep.mubr.bf16.mxu0 %v1352
          %1740 = vmatmul.mubr.bf16.gmra.mrb[0].mxu0 %v1351
          %v1741 = vpop.f32.mrb[0].mxu0
          %v1742 = vadd.f32 0.0, %v1741
          %v1743 = vpop.f32.mrb[0].mxu0
          %v1744 = vpop.f32.mrb[0].mxu0
          %v1745 = vadd.f32 0.0, %v1744
          %v1746 = vpop.f32.mrb[0].mxu0
          %1747 = vmatprep.mubr.bf16.mxu0 %v1356
          %1748 = vmatmul.mubr.bf16.gmra.mrb[0].mxu0 %v1355
          %v1749 = vpop.f32.mrb[0].mxu0
          %v1750 = vadd.f32 0.0, %v1749
          %v1751 = vpop.f32.mrb[0].mxu0
          %v1752 = vpop.f32.mrb[0].mxu0
          %v1753 = vadd.f32 0.0, %v1752
          %v1754 = vpop.f32.mrb[0].mxu0
          %1755 = vmatprep.mubr.bf16.mxu0 %v1360
          %1756 = vmatmul.mubr.bf16.gmra.mrb[0].mxu0 %v1359
          %v1757 = vpop.f32.mrb[0].mxu0
          %v1758 = vadd.f32 0.0, %v1757
          %v1759 = vpop.f32.mrb[0].mxu0
          %v1760 = vpop.f32.mrb[0].mxu0
          %v1761 = vadd.f32 0.0, %v1760
          %v1762 = vpop.f32.mrb[0].mxu0
          %1763 = vmatprep.mubr.bf16.mxu0 %v1364
          %1764 = vmatmul.mubr.bf16.gmra.mrb[0].mxu0 %v1363
          %v1765 = vpop.f32.mrb[0].mxu0
          %v1766 = vadd.f32 0.0, %v1765
          %v1767 = vpop.f32.mrb[0].mxu0
          %v1768 = vpop.f32.mrb[0].mxu0
          %v1769 = vadd.f32 0.0, %v1768
          %v1770 = vpop.f32.mrb[0].mxu0
          %1771 = vmatprep.mubr.bf16.mxu0 %v1368
          %1772 = vmatmul.mubr.bf16.gmra.mrb[0].mxu0 %v1367
          %v1773 = vpop.f32.mrb[0].mxu0
          %v1774 = vadd.f32 0.0, %v1773
          %v1775 = vpop.f32.mrb[0].mxu0
          %v1776 = vpop.f32.mrb[0].mxu0
          %v1777 = vadd.f32 0.0, %v1776
          %v1778 = vpop.f32.mrb[0].mxu0
          %1779 = vmatprep.mubr.bf16.mxu0 %v1372
          %1780 = vmatmul.mubr.bf16.gmra.mrb[0].mxu0 %v1371
          %v1781 = vpop.f32.mrb[0].mxu0
          %v1782 = vadd.f32 0.0, %v1781
          %v1783 = vpop.f32.mrb[0].mxu0
          %v1784 = vpop.f32.mrb[0].mxu0
          %v1785 = vadd.f32 0.0, %v1784
          %v1786 = vpop.f32.mrb[0].mxu0
          %1787 = vmatprep.mubr.bf16.mxu0 %v1376
          %1788 = vmatmul.mubr.bf16.gmra.mrb[0].mxu0 %v1375
          %v1789 = vpop.f32.mrb[0].mxu0
          %v1790 = vadd.f32 0.0, %v1789
          %v1791 = vpop.f32.mrb[0].mxu0
          %v1792 = vpop.f32.mrb[0].mxu0
          %v1793 = vadd.f32 0.0, %v1792
          %v1794 = vpop.f32.mrb[0].mxu0
          %1795 = vdwg.mxu0
          %1796 = vmatprep.subr.bf16.mxu0 0
          %1797 = vmatpush1.bf16.msra.mxu0 %v851
          %1798 = vmatprep.subr.bf16.mxu0 0
          %1799 = vmatpush1.bf16.msra.mxu0 %v852
          %1800 = vmatprep.subr.bf16.mxu0 0
          %1801 = vmatpush1.bf16.msra.mxu0 %v853
          %1802 = vmatprep.subr.bf16.mxu0 0
          %1803 = vmatpush1.bf16.msra.mxu0 %v854
          %1804 = vmatprep.subr.bf16.mxu0 0
          %1805 = vmatpush1.bf16.msra.mxu0 %v855
          %1806 = vmatprep.subr.bf16.mxu0 0
          %1807 = vmatpush1.bf16.msra.mxu0 %v856
          %1808 = vmatprep.subr.bf16.mxu0 0
          %1809 = vmatpush1.bf16.msra.mxu0 %v857
          %1810 = vmatprep.subr.bf16.mxu0 0
          %1811 = vmatpush1.bf16.msra.mxu0 %v858
          %1812 = vmatprep.subr.bf16.mxu0 0
          %1813 = vmatpush1.bf16.msra.mxu0 %v859
          %1814 = vmatprep.subr.bf16.mxu0 0
          %1815 = vmatpush1.bf16.msra.mxu0 %v860
          %1816 = vmatprep.subr.bf16.mxu0 0
          %1817 = vmatpush1.bf16.msra.mxu0 %v861
          %1818 = vmatprep.subr.bf16.mxu0 0
          %1819 = vmatpush1.bf16.msra.mxu0 %v862
          %1820 = vmatprep.subr.bf16.mxu0 0
          %1821 = vmatpush1.bf16.msra.mxu0 %v863
          %1822 = vmatprep.subr.bf16.mxu0 0
          %1823 = vmatpush1.bf16.msra.mxu0 %v864
          %1824 = vmatprep.subr.bf16.mxu0 0
          %1825 = vmatpush1.bf16.msra.mxu0 %v865
          %1826 = vmatprep.subr.bf16.mxu0 0
          %1827 = vmatpush1.bf16.msra.mxu0 %v866
          %1828 = vmatprep.mubr.bf16.mxu0 %v1254
          %1829 = vmatmul.mubr.bf16.gmra.mrb[0].mxu0 %v1253
          %v1830 = vpop.f32.mrb[0].mxu0
          %v1831 = vadd.f32 %v1542, %v1830
          %v1832 = vpop.f32.mrb[0].mxu0
          %v1833 = vpop.f32.mrb[0].mxu0
          %v1834 = vadd.f32 %v1545, %v1833
          %v1835 = vpop.f32.mrb[0].mxu0
          %1836 = vmatprep.mubr.bf16.mxu0 %v1258
          %1837 = vmatmul.mubr.bf16.gmra.mrb[0].mxu0 %v1257
          %v1838 = vpop.f32.mrb[0].mxu0
          %v1839 = vadd.f32 %v1550, %v1838
          %v1840 = vpop.f32.mrb[0].mxu0
          %v1841 = vpop.f32.mrb[0].mxu0
          %v1842 = vadd.f32 %v1553, %v1841
          %v1843 = vpop.f32.mrb[0].mxu0
          %1844 = vmatprep.mubr.bf16.mxu0 %v1262
          %1845 = vmatmul.mubr.bf16.gmra.mrb[0].mxu0 %v1261
          %v1846 = vpop.f32.mrb[0].mxu0
          %v1847 = vadd.f32 %v1558, %v1846
          %v1848 = vpop.f32.mrb[0].mxu0
          %v1849 = vpop.f32.mrb[0].mxu0
          %v1850 = vadd.f32 %v1561, %v1849
          %v1851 = vpop.f32.mrb[0].mxu0
          %1852 = vmatprep.mubr.bf16.mxu0 %v1266
          %1853 = vmatmul.mubr.bf16.gmra.mrb[0].mxu0 %v1265
          %v1854 = vpop.f32.mrb[0].mxu0
          %v1855 = vadd.f32 %v1566, %v1854
          %v1856 = vpop.f32.mrb[0].mxu0
          %v1857 = vpop.f32.mrb[0].mxu0
          %v1858 = vadd.f32 %v1569, %v1857
          %v1859 = vpop.f32.mrb[0].mxu0
          %1860 = vmatprep.mubr.bf16.mxu0 %v1270
          %1861 = vmatmul.mubr.bf16.gmra.mrb[0].mxu0 %v1269
          %v1862 = vpop.f32.mrb[0].mxu0
          %v1863 = vadd.f32 %v1574, %v1862
          %v1864 = vpop.f32.mrb[0].mxu0
          %v1865 = vpop.f32.mrb[0].mxu0
          %v1866 = vadd.f32 %v1577, %v1865
          %v1867 = vpop.f32.mrb[0].mxu0
          %1868 = vmatprep.mubr.bf16.mxu0 %v1274
          %1869 = vmatmul.mubr.bf16.gmra.mrb[0].mxu0 %v1273
          %v1870 = vpop.f32.mrb[0].mxu0
          %v1871 = vadd.f32 %v1582, %v1870
          %v1872 = vpop.f32.mrb[0].mxu0
          %v1873 = vpop.f32.mrb[0].mxu0
          %v1874 = vadd.f32 %v1585, %v1873
          %v1875 = vpop.f32.mrb[0].mxu0
          %1876 = vmatprep.mubr.bf16.mxu0 %v1278
          %1877 = vmatmul.mubr.bf16.gmra.mrb[0].mxu0 %v1277
          %v1878 = vpop.f32.mrb[0].mxu0
          %v1879 = vadd.f32 %v1590, %v1878
          %v1880 = vpop.f32.mrb[0].mxu0
          %v1881 = vpop.f32.mrb[0].mxu0
          %v1882 = vadd.f32 %v1593, %v1881
          %v1883 = vpop.f32.mrb[0].mxu0
          %1884 = vmatprep.mubr.bf16.mxu0 %v1282
          %1885 = vmatmul.mubr.bf16.gmra.mrb[0].mxu0 %v1281
          %v1886 = vpop.f32.mrb[0].mxu0
          %v1887 = vadd.f32 %v1598, %v1886
          %v1888 = vpop.f32.mrb[0].mxu0
          %v1889 = vpop.f32.mrb[0].mxu0
          %v1890 = vadd.f32 %v1601, %v1889
          %v1891 = vpop.f32.mrb[0].mxu0
          %1892 = vmatprep.mubr.bf16.mxu0 %v1286
          %1893 = vmatmul.mubr.bf16.gmra.mrb[0].mxu0 %v1285
          %v1894 = vpop.f32.mrb[0].mxu0
          %v1895 = vadd.f32 %v1606, %v1894
          %v1896 = vpop.f32.mrb[0].mxu0
          %v1897 = vpop.f32.mrb[0].mxu0
          %v1898 = vadd.f32 %v1609, %v1897
          %v1899 = vpop.f32.mrb[0].mxu0
          %1900 = vmatprep.mubr.bf16.mxu0 %v1290
          %1901 = vmatmul.mubr.bf16.gmra.mrb[0].mxu0 %v1289
          %v1902 = vpop.f32.mrb[0].mxu0
          %v1903 = vadd.f32 %v1614, %v1902
          %v1904 = vpop.f32.mrb[0].mxu0
          %v1905 = vpop.f32.mrb[0].mxu0
          %v1906 = vadd.f32 %v1617, %v1905
          %v1907 = vpop.f32.mrb[0].mxu0
          %1908 = vmatprep.mubr.bf16.mxu0 %v1294
          %1909 = vmatmul.mubr.bf16.gmra.mrb[0].mxu0 %v1293
          %v1910 = vpop.f32.mrb[0].mxu0
          %v1911 = vadd.f32 %v1622, %v1910
          %v1912 = vpop.f32.mrb[0].mxu0
          %v1913 = vpop.f32.mrb[0].mxu0
          %v1914 = vadd.f32 %v1625, %v1913
          %v1915 = vpop.f32.mrb[0].mxu0
          %1916 = vmatprep.mubr.bf16.mxu0 %v1298
          %1917 = vmatmul.mubr.bf16.gmra.mrb[0].mxu0 %v1297
          %v1918 = vpop.f32.mrb[0].mxu0
          %v1919 = vadd.f32 %v1630, %v1918
          %v1920 = vpop.f32.mrb[0].mxu0
          %v1921 = vpop.f32.mrb[0].mxu0
          %v1922 = vadd.f32 %v1633, %v1921
          %v1923 = vpop.f32.mrb[0].mxu0
          %1924 = vmatprep.mubr.bf16.mxu0 %v1302
          %1925 = vmatmul.mubr.bf16.gmra.mrb[0].mxu0 %v1301
          %v1926 = vpop.f32.mrb[0].mxu0
          %v1927 = vadd.f32 %v1638, %v1926
          %v1928 = vpop.f32.mrb[0].mxu0
          %v1929 = vpop.f32.mrb[0].mxu0
          %v1930 = vadd.f32 %v1641, %v1929
          %v1931 = vpop.f32.mrb[0].mxu0
          %1932 = vmatprep.mubr.bf16.mxu0 %v1306
          %1933 = vmatmul.mubr.bf16.gmra.mrb[0].mxu0 %v1305
          %v1934 = vpop.f32.mrb[0].mxu0
          %v1935 = vadd.f32 %v1646, %v1934
          %v1936 = vpop.f32.mrb[0].mxu0
          %v1937 = vpop.f32.mrb[0].mxu0
          %v1938 = vadd.f32 %v1649, %v1937
          %v1939 = vpop.f32.mrb[0].mxu0
          %1940 = vmatprep.mubr.bf16.mxu0 %v1310
          %1941 = vmatmul.mubr.bf16.gmra.mrb[0].mxu0 %v1309
          %v1942 = vpop.f32.mrb[0].mxu0
          %v1943 = vadd.f32 %v1654, %v1942
          %v1944 = vpop.f32.mrb[0].mxu0
          %v1945 = vpop.f32.mrb[0].mxu0
          %v1946 = vadd.f32 %v1657, %v1945
          %v1947 = vpop.f32.mrb[0].mxu0
          %1948 = vmatprep.mubr.bf16.mxu0 %v1314
          %1949 = vmatmul.mubr.bf16.gmra.mrb[0].mxu0 %v1313
          %v1950 = vpop.f32.mrb[0].mxu0
          %v1951 = vadd.f32 %v1662, %v1950
          %v1952 = vpop.f32.mrb[0].mxu0
          %v1953 = vpop.f32.mrb[0].mxu0
          %v1954 = vadd.f32 %v1665, %v1953
          %v1955 = vpop.f32.mrb[0].mxu0
          %1956 = vmatprep.mubr.bf16.mxu0 %v1318
          %1957 = vmatmul.mubr.bf16.gmra.mrb[0].mxu0 %v1317
          %v1958 = vpop.f32.mrb[0].mxu0
          %v1959 = vadd.f32 %v1670, %v1958
          %v1960 = vpop.f32.mrb[0].mxu0
          %v1961 = vpop.f32.mrb[0].mxu0
          %v1962 = vadd.f32 %v1673, %v1961
          %v1963 = vpop.f32.mrb[0].mxu0
          %1964 = vmatprep.mubr.bf16.mxu0 %v1322
          %1965 = vmatmul.mubr.bf16.gmra.mrb[0].mxu0 %v1321
          %v1966 = vpop.f32.mrb[0].mxu0
          %v1967 = vadd.f32 %v1678, %v1966
          %v1968 = vpop.f32.mrb[0].mxu0
          %v1969 = vpop.f32.mrb[0].mxu0
          %v1970 = vadd.f32 %v1681, %v1969
          %v1971 = vpop.f32.mrb[0].mxu0
          %1972 = vmatprep.mubr.bf16.mxu0 %v1326
          %1973 = vmatmul.mubr.bf16.gmra.mrb[0].mxu0 %v1325
          %v1974 = vpop.f32.mrb[0].mxu0
          %v1975 = vadd.f32 %v1686, %v1974
          %v1976 = vpop.f32.mrb[0].mxu0
          %v1977 = vpop.f32.mrb[0].mxu0
          %v1978 = vadd.f32 %v1689, %v1977
          %v1979 = vpop.f32.mrb[0].mxu0
          %1980 = vmatprep.mubr.bf16.mxu0 %v1330
          %1981 = vmatmul.mubr.bf16.gmra.mrb[0].mxu0 %v1329
          %v1982 = vpop.f32.mrb[0].mxu0
          %v1983 = vadd.f32 %v1694, %v1982
          %v1984 = vpop.f32.mrb[0].mxu0
          %v1985 = vpop.f32.mrb[0].mxu0
          %v1986 = vadd.f32 %v1697, %v1985
          %v1987 = vpop.f32.mrb[0].mxu0
          %1988 = vmatprep.mubr.bf16.mxu0 %v1334
          %1989 = vmatmul.mubr.bf16.gmra.mrb[0].mxu0 %v1333
          %v1990 = vpop.f32.mrb[0].mxu0
          %v1991 = vadd.f32 %v1702, %v1990
          %v1992 = vpop.f32.mrb[0].mxu0
          %v1993 = vpop.f32.mrb[0].mxu0
          %v1994 = vadd.f32 %v1705, %v1993
          %v1995 = vpop.f32.mrb[0].mxu0
          %1996 = vmatprep.mubr.bf16.mxu0 %v1338
          %1997 = vmatmul.mubr.bf16.gmra.mrb[0].mxu0 %v1337
          %v1998 = vpop.f32.mrb[0].mxu0
          %v1999 = vadd.f32 %v1710, %v1998
          %v2000 = vpop.f32.mrb[0].mxu0
          %v2001 = vpop.f32.mrb[0].mxu0
          %v2002 = vadd.f32 %v1713, %v2001
          %v2003 = vpop.f32.mrb[0].mxu0
          %2004 = vmatprep.mubr.bf16.mxu0 %v1342
          %2005 = vmatmul.mubr.bf16.gmra.mrb[0].mxu0 %v1341
          %v2006 = vpop.f32.mrb[0].mxu0
          %v2007 = vadd.f32 %v1718, %v2006
          %v2008 = vpop.f32.mrb[0].mxu0
          %v2009 = vpop.f32.mrb[0].mxu0
          %v2010 = vadd.f32 %v1721, %v2009
          %v2011 = vpop.f32.mrb[0].mxu0
          %2012 = vmatprep.mubr.bf16.mxu0 %v1346
          %2013 = vmatmul.mubr.bf16.gmra.mrb[0].mxu0 %v1345
          %v2014 = vpop.f32.mrb[0].mxu0
          %v2015 = vadd.f32 %v1726, %v2014
          %v2016 = vpop.f32.mrb[0].mxu0
          %v2017 = vpop.f32.mrb[0].mxu0
          %v2018 = vadd.f32 %v1729, %v2017
          %v2019 = vpop.f32.mrb[0].mxu0
          %2020 = vmatprep.mubr.bf16.mxu0 %v1350
          %2021 = vmatmul.mubr.bf16.gmra.mrb[0].mxu0 %v1349
          %v2022 = vpop.f32.mrb[0].mxu0
          %v2023 = vadd.f32 %v1734, %v2022
          %v2024 = vpop.f32.mrb[0].mxu0
          %v2025 = vpop.f32.mrb[0].mxu0
          %v2026 = vadd.f32 %v1737, %v2025
          %v2027 = vpop.f32.mrb[0].mxu0
          %2028 = vmatprep.mubr.bf16.mxu0 %v1354
          %2029 = vmatmul.mubr.bf16.gmra.mrb[0].mxu0 %v1353
          %v2030 = vpop.f32.mrb[0].mxu0
          %v2031 = vadd.f32 %v1742, %v2030
          %v2032 = vpop.f32.mrb[0].mxu0
          %v2033 = vpop.f32.mrb[0].mxu0
          %v2034 = vadd.f32 %v1745, %v2033
          %v2035 = vpop.f32.mrb[0].mxu0
          %2036 = vmatprep.mubr.bf16.mxu0 %v1358
          %2037 = vmatmul.mubr.bf16.gmra.mrb[0].mxu0 %v1357
          %v2038 = vpop.f32.mrb[0].mxu0
          %v2039 = vadd.f32 %v1750, %v2038
          %v2040 = vpop.f32.mrb[0].mxu0
          %v2041 = vpop.f32.mrb[0].mxu0
          %v2042 = vadd.f32 %v1753, %v2041
          %v2043 = vpop.f32.mrb[0].mxu0
          %2044 = vmatprep.mubr.bf16.mxu0 %v1362
          %2045 = vmatmul.mubr.bf16.gmra.mrb[0].mxu0 %v1361
          %v2046 = vpop.f32.mrb[0].mxu0
          %v2047 = vadd.f32 %v1758, %v2046
          %v2048 = vpop.f32.mrb[0].mxu0
          %v2049 = vpop.f32.mrb[0].mxu0
          %v2050 = vadd.f32 %v1761, %v2049
          %v2051 = vpop.f32.mrb[0].mxu0
          %2052 = vmatprep.mubr.bf16.mxu0 %v1366
          %2053 = vmatmul.mubr.bf16.gmra.mrb[0].mxu0 %v1365
          %v2054 = vpop.f32.mrb[0].mxu0
          %v2055 = vadd.f32 %v1766, %v2054
          %v2056 = vpop.f32.mrb[0].mxu0
          %v2057 = vpop.f32.mrb[0].mxu0
          %v2058 = vadd.f32 %v1769, %v2057
          %v2059 = vpop.f32.mrb[0].mxu0
          %2060 = vmatprep.mubr.bf16.mxu0 %v1370
          %2061 = vmatmul.mubr.bf16.gmra.mrb[0].mxu0 %v1369
          %v2062 = vpop.f32.mrb[0].mxu0
          %v2063 = vadd.f32 %v1774, %v2062
          %v2064 = vpop.f32.mrb[0].mxu0
          %v2065 = vpop.f32.mrb[0].mxu0
          %v2066 = vadd.f32 %v1777, %v2065
          %v2067 = vpop.f32.mrb[0].mxu0
          %2068 = vmatprep.mubr.bf16.mxu0 %v1374
          %2069 = vmatmul.mubr.bf16.gmra.mrb[0].mxu0 %v1373
          %v2070 = vpop.f32.mrb[0].mxu0
          %v2071 = vadd.f32 %v1782, %v2070
          %v2072 = vpop.f32.mrb[0].mxu0
          %v2073 = vpop.f32.mrb[0].mxu0
          %v2074 = vadd.f32 %v1785, %v2073
          %v2075 = vpop.f32.mrb[0].mxu0
          %2076 = vmatprep.mubr.bf16.mxu0 %v1378
          %2077 = vmatmul.mubr.bf16.gmra.mrb[0].mxu0 %v1377
          %v2078 = vpop.f32.mrb[0].mxu0
          %v2079 = vadd.f32 %v1790, %v2078
          %v2080 = vpop.f32.mrb[0].mxu0
          %v2081 = vpop.f32.mrb[0].mxu0
          %v2082 = vadd.f32 %v1793, %v2081
          %v2083 = vpop.f32.mrb[0].mxu0
          %2084 = vdwg.mxu0
          %v2085 = vpack.c.bf16 %v1834, %v1831
          %v2086 = vpack.c.bf16 %v1842, %v1839
          %v2087 = vpack.c.bf16 %v1850, %v1847
          %v2088 = vpack.c.bf16 %v1858, %v1855
          %v2089 = vpack.c.bf16 %v1866, %v1863
          %v2090 = vpack.c.bf16 %v1874, %v1871
          %v2091 = vpack.c.bf16 %v1882, %v1879
          %v2092 = vpack.c.bf16 %v1890, %v1887
          %v2093 = vpack.c.bf16 %v1898, %v1895
          %v2094 = vpack.c.bf16 %v1906, %v1903
          %v2095 = vpack.c.bf16 %v1914, %v1911
          %v2096 = vpack.c.bf16 %v1922, %v1919
          %v2097 = vpack.c.bf16 %v1930, %v1927
          %v2098 = vpack.c.bf16 %v1938, %v1935
          %v2099 = vpack.c.bf16 %v1946, %v1943
          %v2100 = vpack.c.bf16 %v1954, %v1951
          %v2101 = vpack.c.bf16 %v1962, %v1959
          %v2102 = vpack.c.bf16 %v1970, %v1967
          %v2103 = vpack.c.bf16 %v1978, %v1975
          %v2104 = vpack.c.bf16 %v1986, %v1983
          %v2105 = vpack.c.bf16 %v1994, %v1991
          %v2106 = vpack.c.bf16 %v2002, %v1999
          %v2107 = vpack.c.bf16 %v2010, %v2007
          %v2108 = vpack.c.bf16 %v2018, %v2015
          %v2109 = vpack.c.bf16 %v2026, %v2023
          %v2110 = vpack.c.bf16 %v2034, %v2031
          %v2111 = vpack.c.bf16 %v2042, %v2039
          %v2112 = vpack.c.bf16 %v2050, %v2047
          %v2113 = vpack.c.bf16 %v2058, %v2055
          %v2114 = vpack.c.bf16 %v2066, %v2063
          %v2115 = vpack.c.bf16 %v2074, %v2071
          %v2116 = vpack.c.bf16 %v2082, %v2079
          %s2117 = sshra.s32 %s202, 4
          %s2118 = sand.u32 %s202, 15
          %s2119 = smul.addr %s2117, 8
          %s2120 = scalar_lea.vmem [#allocation3], %s2119
          %2121 = vst [vmem:[%s2120] sm:$0xff] %v2085
          %2122 = vst [vmem:[%s2120 + $0x8] sm:$0xff] %v2086
          %2123 = vst [vmem:[%s2120 + $0x10] sm:$0xff] %v2087
          %2124 = vst [vmem:[%s2120 + $0x18] sm:$0xff] %v2088
          %2125 = vst [vmem:[%s2120 + $0x20] sm:$0xff] %v2089
          %2126 = vst [vmem:[%s2120 + $0x28] sm:$0xff] %v2090
          %2127 = vst [vmem:[%s2120 + $0x30] sm:$0xff] %v2091
          %2128 = vst [vmem:[%s2120 + $0x38] sm:$0xff] %v2092
          %2129 = vst [vmem:[%s2120 + $0x40] sm:$0xff] %v2093
          %2130 = vst [vmem:[%s2120 + $0x48] sm:$0xff] %v2094
          %2131 = vst [vmem:[%s2120 + $0x50] sm:$0xff] %v2095
          %2132 = vst [vmem:[%s2120 + $0x58] sm:$0xff] %v2096
          %2133 = vst [vmem:[%s2120 + $0x60] sm:$0xff] %v2097
          %2134 = vst [vmem:[%s2120 + $0x68] sm:$0xff] %v2098
          %2135 = vst [vmem:[%s2120 + $0x70] sm:$0xff] %v2099
          %2136 = vst [vmem:[%s2120 + $0x78] sm:$0xff] %v2100
          %2137 = vst [vmem:[%s2120 + $0x80] sm:$0xff] %v2101
          %2138 = vst [vmem:[%s2120 + $0x88] sm:$0xff] %v2102
          %2139 = vst [vmem:[%s2120 + $0x90] sm:$0xff] %v2103
          %2140 = vst [vmem:[%s2120 + $0x98] sm:$0xff] %v2104
          %2141 = vst [vmem:[%s2120 + $0xa0] sm:$0xff] %v2105
          %2142 = vst [vmem:[%s2120 + $0xa8] sm:$0xff] %v2106
          %2143 = vst [vmem:[%s2120 + $0xb0] sm:$0xff] %v2107
          %2144 = vst [vmem:[%s2120 + $0xb8] sm:$0xff] %v2108
          %2145 = vst [vmem:[%s2120 + $0xc0] sm:$0xff] %v2109
          %2146 = vst [vmem:[%s2120 + $0xc8] sm:$0xff] %v2110
          %2147 = vst [vmem:[%s2120 + $0xd0] sm:$0xff] %v2111
          %2148 = vst [vmem:[%s2120 + $0xd8] sm:$0xff] %v2112
          %2149 = vst [vmem:[%s2120 + $0xe0] sm:$0xff] %v2113
          %2150 = vst [vmem:[%s2120 + $0xe8] sm:$0xff] %v2114
          %2151 = vst [vmem:[%s2120 + $0xf0] sm:$0xff] %v2115
          %2152 = vst [vmem:[%s2120 + $0xf8] sm:$0xff] %v2116
          %s2153 = scalar_lea.vmem [#allocation11], %s202
          %v2154 = vld [vmem:[%s2153] sm:$0xff]
          %v2155 = vld [vmem:[%s2153 + $0x8] sm:$0xff]
          %v2156 = vld [vmem:[%s2153 + $0x10] sm:$0xff]
          %v2157 = vld [vmem:[%s2153 + $0x18] sm:$0xff]
          %v2158 = vld [vmem:[%s2153 + $0x20] sm:$0xff]
          %v2159 = vld [vmem:[%s2153 + $0x28] sm:$0xff]
          %v2160 = vld [vmem:[%s2153 + $0x30] sm:$0xff]
          %v2161 = vld [vmem:[%s2153 + $0x38] sm:$0xff]
          %v2162 = vld [vmem:[%s2153 + $0x40] sm:$0xff]
          %v2163 = vld [vmem:[%s2153 + $0x48] sm:$0xff]
          %v2164 = vld [vmem:[%s2153 + $0x50] sm:$0xff]
          %v2165 = vld [vmem:[%s2153 + $0x58] sm:$0xff]
          %v2166 = vld [vmem:[%s2153 + $0x60] sm:$0xff]
          %v2167 = vld [vmem:[%s2153 + $0x68] sm:$0xff]
          %v2168 = vld [vmem:[%s2153 + $0x70] sm:$0xff]
          %v2169 = vld [vmem:[%s2153 + $0x78] sm:$0xff]
          %v2170 = vld [vmem:[%s2153 + $0x80] sm:$0xff]
          %v2171 = vld [vmem:[%s2153 + $0x88] sm:$0xff]
          %v2172 = vld [vmem:[%s2153 + $0x90] sm:$0xff]
          %v2173 = vld [vmem:[%s2153 + $0x98] sm:$0xff]
          %v2174 = vld [vmem:[%s2153 + $0xa0] sm:$0xff]
          %v2175 = vld [vmem:[%s2153 + $0xa8] sm:$0xff]
          %v2176 = vld [vmem:[%s2153 + $0xb0] sm:$0xff]
          %v2177 = vld [vmem:[%s2153 + $0xb8] sm:$0xff]
          %v2178 = vld [vmem:[%s2153 + $0xc0] sm:$0xff]
          %v2179 = vld [vmem:[%s2153 + $0xc8] sm:$0xff]
          %v2180 = vld [vmem:[%s2153 + $0xd0] sm:$0xff]
          %v2181 = vld [vmem:[%s2153 + $0xd8] sm:$0xff]
          %v2182 = vld [vmem:[%s2153 + $0xe0] sm:$0xff]
          %v2183 = vld [vmem:[%s2153 + $0xe8] sm:$0xff]
          %v2184 = vld [vmem:[%s2153 + $0xf0] sm:$0xff]
          %v2185 = vld [vmem:[%s2153 + $0xf8] sm:$0xff]
          %v2186 = vld [vmem:[%s2153 + $0x100] sm:$0xff]
          %v2187 = vld [vmem:[%s2153 + $0x108] sm:$0xff]
          %v2188 = vld [vmem:[%s2153 + $0x110] sm:$0xff]
          %v2189 = vld [vmem:[%s2153 + $0x118] sm:$0xff]
          %v2190 = vld [vmem:[%s2153 + $0x120] sm:$0xff]
          %v2191 = vld [vmem:[%s2153 + $0x128] sm:$0xff]
          %v2192 = vld [vmem:[%s2153 + $0x130] sm:$0xff]
          %v2193 = vld [vmem:[%s2153 + $0x138] sm:$0xff]
          %v2194 = vld [vmem:[%s2153 + $0x140] sm:$0xff]
          %v2195 = vld [vmem:[%s2153 + $0x148] sm:$0xff]
          %v2196 = vld [vmem:[%s2153 + $0x150] sm:$0xff]
          %v2197 = vld [vmem:[%s2153 + $0x158] sm:$0xff]
          %v2198 = vld [vmem:[%s2153 + $0x160] sm:$0xff]
          %v2199 = vld [vmem:[%s2153 + $0x168] sm:$0xff]
          %v2200 = vld [vmem:[%s2153 + $0x170] sm:$0xff]
          %v2201 = vld [vmem:[%s2153 + $0x178] sm:$0xff]
          %v2202 = vld [vmem:[%s2153 + $0x180] sm:$0xff]
          %v2203 = vld [vmem:[%s2153 + $0x188] sm:$0xff]
          %v2204 = vld [vmem:[%s2153 + $0x190] sm:$0xff]
          %v2205 = vld [vmem:[%s2153 + $0x198] sm:$0xff]
          %v2206 = vld [vmem:[%s2153 + $0x1a0] sm:$0xff]
          %v2207 = vld [vmem:[%s2153 + $0x1a8] sm:$0xff]
          %v2208 = vld [vmem:[%s2153 + $0x1b0] sm:$0xff]
          %v2209 = vld [vmem:[%s2153 + $0x1b8] sm:$0xff]
          %v2210 = vld [vmem:[%s2153 + $0x1c0] sm:$0xff]
          %v2211 = vld [vmem:[%s2153 + $0x1c8] sm:$0xff]
          %v2212 = vld [vmem:[%s2153 + $0x1d0] sm:$0xff]
          %v2213 = vld [vmem:[%s2153 + $0x1d8] sm:$0xff]
          %v2214 = vld [vmem:[%s2153 + $0x1e0] sm:$0xff]
          %v2215 = vld [vmem:[%s2153 + $0x1e8] sm:$0xff]
          %v2216 = vld [vmem:[%s2153 + $0x1f0] sm:$0xff]
          %v2217 = vld [vmem:[%s2153 + $0x1f8] sm:$0xff]
          %s2218 = sadd.s32 %s22, 1
          %s2219 = sld [smem:[#allocation4 + %s2218]]
          %v2220 = vstv %s2219
          %v2221 = vmul.f32 %v2220, %v1831
          %v2222 = vmul.f32 %v2220, %v1834
          %v2223 = vmul.f32 %v2220, %v1839
          %v2224 = vmul.f32 %v2220, %v1842
          %v2225 = vmul.f32 %v2220, %v1847
          %v2226 = vmul.f32 %v2220, %v1850
          %v2227 = vmul.f32 %v2220, %v1855
          %v2228 = vmul.f32 %v2220, %v1858
          %v2229 = vmul.f32 %v2220, %v1863
          %v2230 = vmul.f32 %v2220, %v1866
          %v2231 = vmul.f32 %v2220, %v1871
          %v2232 = vmul.f32 %v2220, %v1874
          %v2233 = vmul.f32 %v2220, %v1879
          %v2234 = vmul.f32 %v2220, %v1882
          %v2235 = vmul.f32 %v2220, %v1887
          %v2236 = vmul.f32 %v2220, %v1890
          %v2237 = vmul.f32 %v2220, %v1895
          %v2238 = vmul.f32 %v2220, %v1898
          %v2239 = vmul.f32 %v2220, %v1903
          %v2240 = vmul.f32 %v2220, %v1906
          %v2241 = vmul.f32 %v2220, %v1911
          %v2242 = vmul.f32 %v2220, %v1914
          %v2243 = vmul.f32 %v2220, %v1919
          %v2244 = vmul.f32 %v2220, %v1922
          %v2245 = vmul.f32 %v2220, %v1927
          %v2246 = vmul.f32 %v2220, %v1930
          %v2247 = vmul.f32 %v2220, %v1935
          %v2248 = vmul.f32 %v2220, %v1938
          %v2249 = vmul.f32 %v2220, %v1943
          %v2250 = vmul.f32 %v2220, %v1946
          %v2251 = vmul.f32 %v2220, %v1951
          %v2252 = vmul.f32 %v2220, %v1954
          %v2253 = vmul.f32 %v2220, %v1959
          %v2254 = vmul.f32 %v2220, %v1962
          %v2255 = vmul.f32 %v2220, %v1967
          %v2256 = vmul.f32 %v2220, %v1970
          %v2257 = vmul.f32 %v2220, %v1975
          %v2258 = vmul.f32 %v2220, %v1978
          %v2259 = vmul.f32 %v2220, %v1983
          %v2260 = vmul.f32 %v2220, %v1986
          %v2261 = vmul.f32 %v2220, %v1991
          %v2262 = vmul.f32 %v2220, %v1994
          %v2263 = vmul.f32 %v2220, %v1999
          %v2264 = vmul.f32 %v2220, %v2002
          %v2265 = vmul.f32 %v2220, %v2007
          %v2266 = vmul.f32 %v2220, %v2010
          %v2267 = vmul.f32 %v2220, %v2015
          %v2268 = vmul.f32 %v2220, %v2018
          %v2269 = vmul.f32 %v2220, %v2023
          %v2270 = vmul.f32 %v2220, %v2026
          %v2271 = vmul.f32 %v2220, %v2031
          %v2272 = vmul.f32 %v2220, %v2034
          %v2273 = vmul.f32 %v2220, %v2039
          %v2274 = vmul.f32 %v2220, %v2042
          %v2275 = vmul.f32 %v2220, %v2047
          %v2276 = vmul.f32 %v2220, %v2050
          %v2277 = vmul.f32 %v2220, %v2055
          %v2278 = vmul.f32 %v2220, %v2058
          %v2279 = vmul.f32 %v2220, %v2063
          %v2280 = vmul.f32 %v2220, %v2066
          %v2281 = vmul.f32 %v2220, %v2071
          %v2282 = vmul.f32 %v2220, %v2074
          %v2283 = vmul.f32 %v2220, %v2079
          %v2284 = vmul.f32 %v2220, %v2082
          %v2285 = vadd.f32 %v2154, %v2221
          %v2286 = vadd.f32 %v2155, %v2222
          %v2287 = vadd.f32 %v2156, %v2223
          %v2288 = vadd.f32 %v2157, %v2224
          %v2289 = vadd.f32 %v2158, %v2225
          %v2290 = vadd.f32 %v2159, %v2226
          %v2291 = vadd.f32 %v2160, %v2227
          %v2292 = vadd.f32 %v2161, %v2228
          %v2293 = vadd.f32 %v2162, %v2229
          %v2294 = vadd.f32 %v2163, %v2230
          %v2295 = vadd.f32 %v2164, %v2231
          %v2296 = vadd.f32 %v2165, %v2232
          %v2297 = vadd.f32 %v2166, %v2233
          %v2298 = vadd.f32 %v2167, %v2234
          %v2299 = vadd.f32 %v2168, %v2235
          %v2300 = vadd.f32 %v2169, %v2236
          %v2301 = vadd.f32 %v2170, %v2237
          %v2302 = vadd.f32 %v2171, %v2238
          %v2303 = vadd.f32 %v2172, %v2239
          %v2304 = vadd.f32 %v2173, %v2240
          %v2305 = vadd.f32 %v2174, %v2241
          %v2306 = vadd.f32 %v2175, %v2242
          %v2307 = vadd.f32 %v2176, %v2243
          %v2308 = vadd.f32 %v2177, %v2244
          %v2309 = vadd.f32 %v2178, %v2245
          %v2310 = vadd.f32 %v2179, %v2246
          %v2311 = vadd.f32 %v2180, %v2247
          %v2312 = vadd.f32 %v2181, %v2248
          %v2313 = vadd.f32 %v2182, %v2249
          %v2314 = vadd.f32 %v2183, %v2250
          %v2315 = vadd.f32 %v2184, %v2251
          %v2316 = vadd.f32 %v2185, %v2252
          %v2317 = vadd.f32 %v2186, %v2253
          %v2318 = vadd.f32 %v2187, %v2254
          %v2319 = vadd.f32 %v2188, %v2255
          %v2320 = vadd.f32 %v2189, %v2256
          %v2321 = vadd.f32 %v2190, %v2257
          %v2322 = vadd.f32 %v2191, %v2258
          %v2323 = vadd.f32 %v2192, %v2259
          %v2324 = vadd.f32 %v2193, %v2260
          %v2325 = vadd.f32 %v2194, %v2261
          %v2326 = vadd.f32 %v2195, %v2262
          %v2327 = vadd.f32 %v2196, %v2263
          %v2328 = vadd.f32 %v2197, %v2264
          %v2329 = vadd.f32 %v2198, %v2265
          %v2330 = vadd.f32 %v2199, %v2266
          %v2331 = vadd.f32 %v2200, %v2267
          %v2332 = vadd.f32 %v2201, %v2268
          %v2333 = vadd.f32 %v2202, %v2269
          %v2334 = vadd.f32 %v2203, %v2270
          %v2335 = vadd.f32 %v2204, %v2271
          %v2336 = vadd.f32 %v2205, %v2272
          %v2337 = vadd.f32 %v2206, %v2273
          %v2338 = vadd.f32 %v2207, %v2274
          %v2339 = vadd.f32 %v2208, %v2275
          %v2340 = vadd.f32 %v2209, %v2276
          %v2341 = vadd.f32 %v2210, %v2277
          %v2342 = vadd.f32 %v2211, %v2278
          %v2343 = vadd.f32 %v2212, %v2279
          %v2344 = vadd.f32 %v2213, %v2280
          %v2345 = vadd.f32 %v2214, %v2281
          %v2346 = vadd.f32 %v2215, %v2282
          %v2347 = vadd.f32 %v2216, %v2283
          %v2348 = vadd.f32 %v2217, %v2284
          %2349 = vst [vmem:[%s2153] sm:$0xff] %v2285
          %2350 = vst [vmem:[%s2153 + $0x8] sm:$0xff] %v2286
          %2351 = vst [vmem:[%s2153 + $0x10] sm:$0xff] %v2287
          %2352 = vst [vmem:[%s2153 + $0x18] sm:$0xff] %v2288
          %2353 = vst [vmem:[%s2153 + $0x20] sm:$0xff] %v2289
          %2354 = vst [vmem:[%s2153 + $0x28] sm:$0xff] %v2290
          %2355 = vst [vmem:[%s2153 + $0x30] sm:$0xff] %v2291
          %2356 = vst [vmem:[%s2153 + $0x38] sm:$0xff] %v2292
          %2357 = vst [vmem:[%s2153 + $0x40] sm:$0xff] %v2293
          %2358 = vst [vmem:[%s2153 + $0x48] sm:$0xff] %v2294
          %2359 = vst [vmem:[%s2153 + $0x50] sm:$0xff] %v2295
          %2360 = vst [vmem:[%s2153 + $0x58] sm:$0xff] %v2296
          %2361 = vst [vmem:[%s2153 + $0x60] sm:$0xff] %v2297
          %2362 = vst [vmem:[%s2153 + $0x68] sm:$0xff] %v2298
          %2363 = vst [vmem:[%s2153 + $0x70] sm:$0xff] %v2299
          %2364 = vst [vmem:[%s2153 + $0x78] sm:$0xff] %v2300
          %2365 = vst [vmem:[%s2153 + $0x80] sm:$0xff] %v2301
          %2366 = vst [vmem:[%s2153 + $0x88] sm:$0xff] %v2302
          %2367 = vst [vmem:[%s2153 + $0x90] sm:$0xff] %v2303
          %2368 = vst [vmem:[%s2153 + $0x98] sm:$0xff] %v2304
          %2369 = vst [vmem:[%s2153 + $0xa0] sm:$0xff] %v2305
          %2370 = vst [vmem:[%s2153 + $0xa8] sm:$0xff] %v2306
          %2371 = vst [vmem:[%s2153 + $0xb0] sm:$0xff] %v2307
          %2372 = vst [vmem:[%s2153 + $0xb8] sm:$0xff] %v2308
          %2373 = vst [vmem:[%s2153 + $0xc0] sm:$0xff] %v2309
          %2374 = vst [vmem:[%s2153 + $0xc8] sm:$0xff] %v2310
          %2375 = vst [vmem:[%s2153 + $0xd0] sm:$0xff] %v2311
          %2376 = vst [vmem:[%s2153 + $0xd8] sm:$0xff] %v2312
          %2377 = vst [vmem:[%s2153 + $0xe0] sm:$0xff] %v2313
          %2378 = vst [vmem:[%s2153 + $0xe8] sm:$0xff] %v2314
          %2379 = vst [vmem:[%s2153 + $0xf0] sm:$0xff] %v2315
          %2380 = vst [vmem:[%s2153 + $0xf8] sm:$0xff] %v2316
          %2381 = vst [vmem:[%s2153 + $0x100] sm:$0xff] %v2317
          %2382 = vst [vmem:[%s2153 + $0x108] sm:$0xff] %v2318
          %2383 = vst [vmem:[%s2153 + $0x110] sm:$0xff] %v2319
          %2384 = vst [vmem:[%s2153 + $0x118] sm:$0xff] %v2320
          %2385 = vst [vmem:[%s2153 + $0x120] sm:$0xff] %v2321
          %2386 = vst [vmem:[%s2153 + $0x128] sm:$0xff] %v2322
          %2387 = vst [vmem:[%s2153 + $0x130] sm:$0xff] %v2323
          %2388 = vst [vmem:[%s2153 + $0x138] sm:$0xff] %v2324
          %2389 = vst [vmem:[%s2153 + $0x140] sm:$0xff] %v2325
          %2390 = vst [vmem:[%s2153 + $0x148] sm:$0xff] %v2326
          %2391 = vst [vmem:[%s2153 + $0x150] sm:$0xff] %v2327
          %2392 = vst [vmem:[%s2153 + $0x158] sm:$0xff] %v2328
          %2393 = vst [vmem:[%s2153 + $0x160] sm:$0xff] %v2329
          %2394 = vst [vmem:[%s2153 + $0x168] sm:$0xff] %v2330
          %2395 = vst [vmem:[%s2153 + $0x170] sm:$0xff] %v2331
          %2396 = vst [vmem:[%s2153 + $0x178] sm:$0xff] %v2332
          %2397 = vst [vmem:[%s2153 + $0x180] sm:$0xff] %v2333
          %2398 = vst [vmem:[%s2153 + $0x188] sm:$0xff] %v2334
          %2399 = vst [vmem:[%s2153 + $0x190] sm:$0xff] %v2335
          %2400 = vst [vmem:[%s2153 + $0x198] sm:$0xff] %v2336
          %2401 = vst [vmem:[%s2153 + $0x1a0] sm:$0xff] %v2337
          %2402 = vst [vmem:[%s2153 + $0x1a8] sm:$0xff] %v2338
          %2403 = vst [vmem:[%s2153 + $0x1b0] sm:$0xff] %v2339
          %2404 = vst [vmem:[%s2153 + $0x1b8] sm:$0xff] %v2340
          %2405 = vst [vmem:[%s2153 + $0x1c0] sm:$0xff] %v2341
          %2406 = vst [vmem:[%s2153 + $0x1c8] sm:$0xff] %v2342
          %2407 = vst [vmem:[%s2153 + $0x1d0] sm:$0xff] %v2343
          %2408 = vst [vmem:[%s2153 + $0x1d8] sm:$0xff] %v2344
          %2409 = vst [vmem:[%s2153 + $0x1e0] sm:$0xff] %v2345
          %2410 = vst [vmem:[%s2153 + $0x1e8] sm:$0xff] %v2346
          %2411 = vst [vmem:[%s2153 + $0x1f0] sm:$0xff] %v2347
          %2412 = vst [vmem:[%s2153 + $0x1f8] sm:$0xff] %v2348
        $region52: #{tpu_custom_call.1} parent=31 // pred_fallthru
          _
        %p2413 = scmp.eq.s32.totalorder %s702, 1
        // Predicated region
        $region53: #{tpu_custom_call.1} parent=31 // pred_check
          %p2414 = pneg %p2413
        $region54: #{tpu_custom_call.1} parent=31 // pred_check_branch
          %2416 = sbr.rel (%p2414) target = $region56
        $region55: #{tpu_custom_call.1} parent=31 // pred_region
          %v2417 = vld [vmem:[#allocation9] sm:$0xff]
          %v2418 = vld [vmem:[#allocation9 + $0x8] sm:$0xff]
          %v2419 = vld [vmem:[#allocation9 + $0x10] sm:$0xff]
          %v2420 = vld [vmem:[#allocation9 + $0x18] sm:$0xff]
          %v2421 = vld [vmem:[#allocation9 + $0x20] sm:$0xff]
          %v2422 = vld [vmem:[#allocation9 + $0x28] sm:$0xff]
          %v2423 = vld [vmem:[#allocation9 + $0x30] sm:$0xff]
          %v2424 = vld [vmem:[#allocation9 + $0x38] sm:$0xff]
          %v2425 = vld [vmem:[#allocation9 + $0x40] sm:$0xff]
          %v2426 = vld [vmem:[#allocation9 + $0x48] sm:$0xff]
          %v2427 = vld [vmem:[#allocation9 + $0x50] sm:$0xff]
          %v2428 = vld [vmem:[#allocation9 + $0x58] sm:$0xff]
          %v2429 = vld [vmem:[#allocation9 + $0x60] sm:$0xff]
          %v2430 = vld [vmem:[#allocation9 + $0x68] sm:$0xff]
          %v2431 = vld [vmem:[#allocation9 + $0x70] sm:$0xff]
          %v2432 = vld [vmem:[#allocation9 + $0x78] sm:$0xff]
          %v2433 = vld [vmem:[#allocation9 + $0x80] sm:$0xff]
          %v2434 = vld [vmem:[#allocation9 + $0x88] sm:$0xff]
          %v2435 = vld [vmem:[#allocation9 + $0x90] sm:$0xff]
          %v2436 = vld [vmem:[#allocation9 + $0x98] sm:$0xff]
          %v2437 = vld [vmem:[#allocation9 + $0xa0] sm:$0xff]
          %v2438 = vld [vmem:[#allocation9 + $0xa8] sm:$0xff]
          %v2439 = vld [vmem:[#allocation9 + $0xb0] sm:$0xff]
          %v2440 = vld [vmem:[#allocation9 + $0xb8] sm:$0xff]
          %v2441 = vld [vmem:[#allocation9 + $0xc0] sm:$0xff]
          %v2442 = vld [vmem:[#allocation9 + $0xc8] sm:$0xff]
          %v2443 = vld [vmem:[#allocation9 + $0xd0] sm:$0xff]
          %v2444 = vld [vmem:[#allocation9 + $0xd8] sm:$0xff]
          %v2445 = vld [vmem:[#allocation9 + $0xe0] sm:$0xff]
          %v2446 = vld [vmem:[#allocation9 + $0xe8] sm:$0xff]
          %v2447 = vld [vmem:[#allocation9 + $0xf0] sm:$0xff]
          %v2448 = vld [vmem:[#allocation9 + $0xf8] sm:$0xff]
          %v2449 = vld [vmem:[#allocation9 + $0x100] sm:$0xff]
          %v2450 = vld [vmem:[#allocation9 + $0x108] sm:$0xff]
          %v2451 = vld [vmem:[#allocation9 + $0x110] sm:$0xff]
          %v2452 = vld [vmem:[#allocation9 + $0x118] sm:$0xff]
          %v2453 = vld [vmem:[#allocation9 + $0x120] sm:$0xff]
          %v2454 = vld [vmem:[#allocation9 + $0x128] sm:$0xff]
          %v2455 = vld [vmem:[#allocation9 + $0x130] sm:$0xff]
          %v2456 = vld [vmem:[#allocation9 + $0x138] sm:$0xff]
          %v2457 = vld [vmem:[#allocation9 + $0x140] sm:$0xff]
          %v2458 = vld [vmem:[#allocation9 + $0x148] sm:$0xff]
          %v2459 = vld [vmem:[#allocation9 + $0x150] sm:$0xff]
          %v2460 = vld [vmem:[#allocation9 + $0x158] sm:$0xff]
          %v2461 = vld [vmem:[#allocation9 + $0x160] sm:$0xff]
          %v2462 = vld [vmem:[#allocation9 + $0x168] sm:$0xff]
          %v2463 = vld [vmem:[#allocation9 + $0x170] sm:$0xff]
          %v2464 = vld [vmem:[#allocation9 + $0x178] sm:$0xff]
          %v2465 = vld [vmem:[#allocation9 + $0x180] sm:$0xff]
          %v2466 = vld [vmem:[#allocation9 + $0x188] sm:$0xff]
          %v2467 = vld [vmem:[#allocation9 + $0x190] sm:$0xff]
          %v2468 = vld [vmem:[#allocation9 + $0x198] sm:$0xff]
          %v2469 = vld [vmem:[#allocation9 + $0x1a0] sm:$0xff]
          %v2470 = vld [vmem:[#allocation9 + $0x1a8] sm:$0xff]
          %v2471 = vld [vmem:[#allocation9 + $0x1b0] sm:$0xff]
          %v2472 = vld [vmem:[#allocation9 + $0x1b8] sm:$0xff]
          %v2473 = vld [vmem:[#allocation9 + $0x1c0] sm:$0xff]
          %v2474 = vld [vmem:[#allocation9 + $0x1c8] sm:$0xff]
          %v2475 = vld [vmem:[#allocation9 + $0x1d0] sm:$0xff]
          %v2476 = vld [vmem:[#allocation9 + $0x1d8] sm:$0xff]
          %v2477 = vld [vmem:[#allocation9 + $0x1e0] sm:$0xff]
          %v2478 = vld [vmem:[#allocation9 + $0x1e8] sm:$0xff]
          %v2479 = vld [vmem:[#allocation9 + $0x1f0] sm:$0xff]
          %v2480 = vld [vmem:[#allocation9 + $0x1f8] sm:$0xff]
          %v2481 = vld [vmem:[#allocation9 + $0x200] sm:$0xff]
          %v2482 = vld [vmem:[#allocation9 + $0x208] sm:$0xff]
          %v2483 = vld [vmem:[#allocation9 + $0x210] sm:$0xff]
          %v2484 = vld [vmem:[#allocation9 + $0x218] sm:$0xff]
          %v2485 = vld [vmem:[#allocation9 + $0x220] sm:$0xff]
          %v2486 = vld [vmem:[#allocation9 + $0x228] sm:$0xff]
          %v2487 = vld [vmem:[#allocation9 + $0x230] sm:$0xff]
          %v2488 = vld [vmem:[#allocation9 + $0x238] sm:$0xff]
          %v2489 = vld [vmem:[#allocation9 + $0x240] sm:$0xff]
          %v2490 = vld [vmem:[#allocation9 + $0x248] sm:$0xff]
          %v2491 = vld [vmem:[#allocation9 + $0x250] sm:$0xff]
          %v2492 = vld [vmem:[#allocation9 + $0x258] sm:$0xff]
          %v2493 = vld [vmem:[#allocation9 + $0x260] sm:$0xff]
          %v2494 = vld [vmem:[#allocation9 + $0x268] sm:$0xff]
          %v2495 = vld [vmem:[#allocation9 + $0x270] sm:$0xff]
          %v2496 = vld [vmem:[#allocation9 + $0x278] sm:$0xff]
          %v2497 = vld [vmem:[#allocation9 + $0x280] sm:$0xff]
          %v2498 = vld [vmem:[#allocation9 + $0x288] sm:$0xff]
          %v2499 = vld [vmem:[#allocation9 + $0x290] sm:$0xff]
          %v2500 = vld [vmem:[#allocation9 + $0x298] sm:$0xff]
          %v2501 = vld [vmem:[#allocation9 + $0x2a0] sm:$0xff]
          %v2502 = vld [vmem:[#allocation9 + $0x2a8] sm:$0xff]
          %v2503 = vld [vmem:[#allocation9 + $0x2b0] sm:$0xff]
          %v2504 = vld [vmem:[#allocation9 + $0x2b8] sm:$0xff]
          %v2505 = vld [vmem:[#allocation9 + $0x2c0] sm:$0xff]
          %v2506 = vld [vmem:[#allocation9 + $0x2c8] sm:$0xff]
          %v2507 = vld [vmem:[#allocation9 + $0x2d0] sm:$0xff]
          %v2508 = vld [vmem:[#allocation9 + $0x2d8] sm:$0xff]
          %v2509 = vld [vmem:[#allocation9 + $0x2e0] sm:$0xff]
          %v2510 = vld [vmem:[#allocation9 + $0x2e8] sm:$0xff]
          %v2511 = vld [vmem:[#allocation9 + $0x2f0] sm:$0xff]
          %v2512 = vld [vmem:[#allocation9 + $0x2f8] sm:$0xff]
          %v2513 = vld [vmem:[#allocation9 + $0x300] sm:$0xff]
          %v2514 = vld [vmem:[#allocation9 + $0x308] sm:$0xff]
          %v2515 = vld [vmem:[#allocation9 + $0x310] sm:$0xff]
          %v2516 = vld [vmem:[#allocation9 + $0x318] sm:$0xff]
          %v2517 = vld [vmem:[#allocation9 + $0x320] sm:$0xff]
          %v2518 = vld [vmem:[#allocation9 + $0x328] sm:$0xff]
          %v2519 = vld [vmem:[#allocation9 + $0x330] sm:$0xff]
          %v2520 = vld [vmem:[#allocation9 + $0x338] sm:$0xff]
          %v2521 = vld [vmem:[#allocation9 + $0x340] sm:$0xff]
          %v2522 = vld [vmem:[#allocation9 + $0x348] sm:$0xff]
          %v2523 = vld [vmem:[#allocation9 + $0x350] sm:$0xff]
          %v2524 = vld [vmem:[#allocation9 + $0x358] sm:$0xff]
          %v2525 = vld [vmem:[#allocation9 + $0x360] sm:$0xff]
          %v2526 = vld [vmem:[#allocation9 + $0x368] sm:$0xff]
          %v2527 = vld [vmem:[#allocation9 + $0x370] sm:$0xff]
          %v2528 = vld [vmem:[#allocation9 + $0x378] sm:$0xff]
          %v2529 = vld [vmem:[#allocation9 + $0x380] sm:$0xff]
          %v2530 = vld [vmem:[#allocation9 + $0x388] sm:$0xff]
          %v2531 = vld [vmem:[#allocation9 + $0x390] sm:$0xff]
          %v2532 = vld [vmem:[#allocation9 + $0x398] sm:$0xff]
          %v2533 = vld [vmem:[#allocation9 + $0x3a0] sm:$0xff]
          %v2534 = vld [vmem:[#allocation9 + $0x3a8] sm:$0xff]
          %v2535 = vld [vmem:[#allocation9 + $0x3b0] sm:$0xff]
          %v2536 = vld [vmem:[#allocation9 + $0x3b8] sm:$0xff]
          %v2537 = vld [vmem:[#allocation9 + $0x3c0] sm:$0xff]
          %v2538 = vld [vmem:[#allocation9 + $0x3c8] sm:$0xff]
          %v2539 = vld [vmem:[#allocation9 + $0x3d0] sm:$0xff]
          %v2540 = vld [vmem:[#allocation9 + $0x3d8] sm:$0xff]
          %v2541 = vld [vmem:[#allocation9 + $0x3e0] sm:$0xff]
          %v2542 = vld [vmem:[#allocation9 + $0x3e8] sm:$0xff]
          %v2543 = vld [vmem:[#allocation9 + $0x3f0] sm:$0xff]
          %v2544 = vld [vmem:[#allocation9 + $0x3f8] sm:$0xff]
          %v2545 = vld [vmem:[#allocation3] sm:$0xff]
          %v2546 = vld [vmem:[#allocation3 + $0x8] sm:$0xff]
          %v2547 = vld [vmem:[#allocation3 + $0x10] sm:$0xff]
          %v2548 = vld [vmem:[#allocation3 + $0x18] sm:$0xff]
          %v2549 = vld [vmem:[#allocation3 + $0x20] sm:$0xff]
          %v2550 = vld [vmem:[#allocation3 + $0x28] sm:$0xff]
          %v2551 = vld [vmem:[#allocation3 + $0x30] sm:$0xff]
          %v2552 = vld [vmem:[#allocation3 + $0x38] sm:$0xff]
          %v2553 = vld [vmem:[#allocation3 + $0x40] sm:$0xff]
          %v2554 = vld [vmem:[#allocation3 + $0x48] sm:$0xff]
          %v2555 = vld [vmem:[#allocation3 + $0x50] sm:$0xff]
          %v2556 = vld [vmem:[#allocation3 + $0x58] sm:$0xff]
          %v2557 = vld [vmem:[#allocation3 + $0x60] sm:$0xff]
          %v2558 = vld [vmem:[#allocation3 + $0x68] sm:$0xff]
          %v2559 = vld [vmem:[#allocation3 + $0x70] sm:$0xff]
          %v2560 = vld [vmem:[#allocation3 + $0x78] sm:$0xff]
          %v2561 = vld [vmem:[#allocation3 + $0x80] sm:$0xff]
          %v2562 = vld [vmem:[#allocation3 + $0x88] sm:$0xff]
          %v2563 = vld [vmem:[#allocation3 + $0x90] sm:$0xff]
          %v2564 = vld [vmem:[#allocation3 + $0x98] sm:$0xff]
          %v2565 = vld [vmem:[#allocation3 + $0xa0] sm:$0xff]
          %v2566 = vld [vmem:[#allocation3 + $0xa8] sm:$0xff]
          %v2567 = vld [vmem:[#allocation3 + $0xb0] sm:$0xff]
          %v2568 = vld [vmem:[#allocation3 + $0xb8] sm:$0xff]
          %v2569 = vld [vmem:[#allocation3 + $0xc0] sm:$0xff]
          %v2570 = vld [vmem:[#allocation3 + $0xc8] sm:$0xff]
          %v2571 = vld [vmem:[#allocation3 + $0xd0] sm:$0xff]
          %v2572 = vld [vmem:[#allocation3 + $0xd8] sm:$0xff]
          %v2573 = vld [vmem:[#allocation3 + $0xe0] sm:$0xff]
          %v2574 = vld [vmem:[#allocation3 + $0xe8] sm:$0xff]
          %v2575 = vld [vmem:[#allocation3 + $0xf0] sm:$0xff]
          %v2576 = vld [vmem:[#allocation3 + $0xf8] sm:$0xff]
          %v2705 = vunpack.c.l.b16 %v2417
          %v2706 = vunpack.c.h.b16 %v2417
          %v2707 = vunpack.c.l.b16 %v2418
          %v2708 = vunpack.c.h.b16 %v2418
          %v2709 = vunpack.c.l.b16 %v2419
          %v2710 = vunpack.c.h.b16 %v2419
          %v2711 = vunpack.c.l.b16 %v2420
          %v2712 = vunpack.c.h.b16 %v2420
          %v2713 = vunpack.c.l.b16 %v2421
          %v2714 = vunpack.c.h.b16 %v2421
          %v2715 = vunpack.c.l.b16 %v2422
          %v2716 = vunpack.c.h.b16 %v2422
          %v2717 = vunpack.c.l.b16 %v2423
          %v2718 = vunpack.c.h.b16 %v2423
          %v2719 = vunpack.c.l.b16 %v2424
          %v2720 = vunpack.c.h.b16 %v2424
          %v2721 = vunpack.c.l.b16 %v2425
          %v2722 = vunpack.c.h.b16 %v2425
          %v2723 = vunpack.c.l.b16 %v2426
          %v2724 = vunpack.c.h.b16 %v2426
          %v2725 = vunpack.c.l.b16 %v2427
          %v2726 = vunpack.c.h.b16 %v2427
          %v2727 = vunpack.c.l.b16 %v2428
          %v2728 = vunpack.c.h.b16 %v2428
          %v2729 = vunpack.c.l.b16 %v2429
          %v2730 = vunpack.c.h.b16 %v2429
          %v2731 = vunpack.c.l.b16 %v2430
          %v2732 = vunpack.c.h.b16 %v2430
          %v2733 = vunpack.c.l.b16 %v2431
          %v2734 = vunpack.c.h.b16 %v2431
          %v2735 = vunpack.c.l.b16 %v2432
          %v2736 = vunpack.c.h.b16 %v2432
          %v2737 = vunpack.c.l.b16 %v2433
          %v2738 = vunpack.c.h.b16 %v2433
          %v2739 = vunpack.c.l.b16 %v2434
          %v2740 = vunpack.c.h.b16 %v2434
          %v2741 = vunpack.c.l.b16 %v2435
          %v2742 = vunpack.c.h.b16 %v2435
          %v2743 = vunpack.c.l.b16 %v2436
          %v2744 = vunpack.c.h.b16 %v2436
          %v2745 = vunpack.c.l.b16 %v2437
          %v2746 = vunpack.c.h.b16 %v2437
          %v2747 = vunpack.c.l.b16 %v2438
          %v2748 = vunpack.c.h.b16 %v2438
          %v2749 = vunpack.c.l.b16 %v2439
          %v2750 = vunpack.c.h.b16 %v2439
          %v2751 = vunpack.c.l.b16 %v2440
          %v2752 = vunpack.c.h.b16 %v2440
          %v2753 = vunpack.c.l.b16 %v2441
          %v2754 = vunpack.c.h.b16 %v2441
          %v2755 = vunpack.c.l.b16 %v2442
          %v2756 = vunpack.c.h.b16 %v2442
          %v2757 = vunpack.c.l.b16 %v2443
          %v2758 = vunpack.c.h.b16 %v2443
          %v2759 = vunpack.c.l.b16 %v2444
          %v2760 = vunpack.c.h.b16 %v2444
          %v2761 = vunpack.c.l.b16 %v2445
          %v2762 = vunpack.c.h.b16 %v2445
          %v2763 = vunpack.c.l.b16 %v2446
          %v2764 = vunpack.c.h.b16 %v2446
          %v2765 = vunpack.c.l.b16 %v2447
          %v2766 = vunpack.c.h.b16 %v2447
          %v2767 = vunpack.c.l.b16 %v2448
          %v2768 = vunpack.c.h.b16 %v2448
          %v2769 = vunpack.c.l.b16 %v2449
          %v2770 = vunpack.c.h.b16 %v2449
          %v2771 = vunpack.c.l.b16 %v2450
          %v2772 = vunpack.c.h.b16 %v2450
          %v2773 = vunpack.c.l.b16 %v2451
          %v2774 = vunpack.c.h.b16 %v2451
          %v2775 = vunpack.c.l.b16 %v2452
          %v2776 = vunpack.c.h.b16 %v2452
          %v2777 = vunpack.c.l.b16 %v2453
          %v2778 = vunpack.c.h.b16 %v2453
          %v2779 = vunpack.c.l.b16 %v2454
          %v2780 = vunpack.c.h.b16 %v2454
          %v2781 = vunpack.c.l.b16 %v2455
          %v2782 = vunpack.c.h.b16 %v2455
          %v2783 = vunpack.c.l.b16 %v2456
          %v2784 = vunpack.c.h.b16 %v2456
          %v2785 = vunpack.c.l.b16 %v2457
          %v2786 = vunpack.c.h.b16 %v2457
          %v2787 = vunpack.c.l.b16 %v2458
          %v2788 = vunpack.c.h.b16 %v2458
          %v2789 = vunpack.c.l.b16 %v2459
          %v2790 = vunpack.c.h.b16 %v2459
          %v2791 = vunpack.c.l.b16 %v2460
          %v2792 = vunpack.c.h.b16 %v2460
          %v2793 = vunpack.c.l.b16 %v2461
          %v2794 = vunpack.c.h.b16 %v2461
          %v2795 = vunpack.c.l.b16 %v2462
          %v2796 = vunpack.c.h.b16 %v2462
          %v2797 = vunpack.c.l.b16 %v2463
          %v2798 = vunpack.c.h.b16 %v2463
          %v2799 = vunpack.c.l.b16 %v2464
          %v2800 = vunpack.c.h.b16 %v2464
          %v2801 = vunpack.c.l.b16 %v2465
          %v2802 = vunpack.c.h.b16 %v2465
          %v2803 = vunpack.c.l.b16 %v2466
          %v2804 = vunpack.c.h.b16 %v2466
          %v2805 = vunpack.c.l.b16 %v2467
          %v2806 = vunpack.c.h.b16 %v2467
          %v2807 = vunpack.c.l.b16 %v2468
          %v2808 = vunpack.c.h.b16 %v2468
          %v2809 = vunpack.c.l.b16 %v2469
          %v2810 = vunpack.c.h.b16 %v2469
          %v2811 = vunpack.c.l.b16 %v2470
          %v2812 = vunpack.c.h.b16 %v2470
          %v2813 = vunpack.c.l.b16 %v2471
          %v2814 = vunpack.c.h.b16 %v2471
          %v2815 = vunpack.c.l.b16 %v2472
          %v2816 = vunpack.c.h.b16 %v2472
          %v2817 = vunpack.c.l.b16 %v2473
          %v2818 = vunpack.c.h.b16 %v2473
          %v2819 = vunpack.c.l.b16 %v2474
          %v2820 = vunpack.c.h.b16 %v2474
          %v2821 = vunpack.c.l.b16 %v2475
          %v2822 = vunpack.c.h.b16 %v2475
          %v2823 = vunpack.c.l.b16 %v2476
          %v2824 = vunpack.c.h.b16 %v2476
          %v2825 = vunpack.c.l.b16 %v2477
          %v2826 = vunpack.c.h.b16 %v2477
          %v2827 = vunpack.c.l.b16 %v2478
          %v2828 = vunpack.c.h.b16 %v2478
          %v2829 = vunpack.c.l.b16 %v2479
          %v2830 = vunpack.c.h.b16 %v2479
          %v2831 = vunpack.c.l.b16 %v2480
          %v2832 = vunpack.c.h.b16 %v2480
          %v2833 = vunpack.c.l.b16 %v2481
          %v2834 = vunpack.c.h.b16 %v2481
          %v2835 = vunpack.c.l.b16 %v2482
          %v2836 = vunpack.c.h.b16 %v2482
          %v2837 = vunpack.c.l.b16 %v2483
          %v2838 = vunpack.c.h.b16 %v2483
          %v2839 = vunpack.c.l.b16 %v2484
          %v2840 = vunpack.c.h.b16 %v2484
          %v2841 = vunpack.c.l.b16 %v2485
          %v2842 = vunpack.c.h.b16 %v2485
          %v2843 = vunpack.c.l.b16 %v2486
          %v2844 = vunpack.c.h.b16 %v2486
          %v2845 = vunpack.c.l.b16 %v2487
          %v2846 = vunpack.c.h.b16 %v2487
          %v2847 = vunpack.c.l.b16 %v2488
          %v2848 = vunpack.c.h.b16 %v2488
          %v2849 = vunpack.c.l.b16 %v2489
          %v2850 = vunpack.c.h.b16 %v2489
          %v2851 = vunpack.c.l.b16 %v2490
          %v2852 = vunpack.c.h.b16 %v2490
          %v2853 = vunpack.c.l.b16 %v2491
          %v2854 = vunpack.c.h.b16 %v2491
          %v2855 = vunpack.c.l.b16 %v2492
          %v2856 = vunpack.c.h.b16 %v2492
          %v2857 = vunpack.c.l.b16 %v2493
          %v2858 = vunpack.c.h.b16 %v2493
          %v2859 = vunpack.c.l.b16 %v2494
          %v2860 = vunpack.c.h.b16 %v2494
          %v2861 = vunpack.c.l.b16 %v2495
          %v2862 = vunpack.c.h.b16 %v2495
          %v2863 = vunpack.c.l.b16 %v2496
          %v2864 = vunpack.c.h.b16 %v2496
          %v2865 = vunpack.c.l.b16 %v2497
          %v2866 = vunpack.c.h.b16 %v2497
          %v2867 = vunpack.c.l.b16 %v2498
          %v2868 = vunpack.c.h.b16 %v2498
          %v2869 = vunpack.c.l.b16 %v2499
          %v2870 = vunpack.c.h.b16 %v2499
          %v2871 = vunpack.c.l.b16 %v2500
          %v2872 = vunpack.c.h.b16 %v2500
          %v2873 = vunpack.c.l.b16 %v2501
          %v2874 = vunpack.c.h.b16 %v2501
          %v2875 = vunpack.c.l.b16 %v2502
          %v2876 = vunpack.c.h.b16 %v2502
          %v2877 = vunpack.c.l.b16 %v2503
          %v2878 = vunpack.c.h.b16 %v2503
          %v2879 = vunpack.c.l.b16 %v2504
          %v2880 = vunpack.c.h.b16 %v2504
          %v2881 = vunpack.c.l.b16 %v2505
          %v2882 = vunpack.c.h.b16 %v2505
          %v2883 = vunpack.c.l.b16 %v2506
          %v2884 = vunpack.c.h.b16 %v2506
          %v2885 = vunpack.c.l.b16 %v2507
          %v2886 = vunpack.c.h.b16 %v2507
          %v2887 = vunpack.c.l.b16 %v2508
          %v2888 = vunpack.c.h.b16 %v2508
          %v2889 = vunpack.c.l.b16 %v2509
          %v2890 = vunpack.c.h.b16 %v2509
          %v2891 = vunpack.c.l.b16 %v2510
          %v2892 = vunpack.c.h.b16 %v2510
          %v2893 = vunpack.c.l.b16 %v2511
          %v2894 = vunpack.c.h.b16 %v2511
          %v2895 = vunpack.c.l.b16 %v2512
          %v2896 = vunpack.c.h.b16 %v2512
          %v2897 = vunpack.c.l.b16 %v2513
          %v2898 = vunpack.c.h.b16 %v2513
          %v2899 = vunpack.c.l.b16 %v2514
          %v2900 = vunpack.c.h.b16 %v2514
          %v2901 = vunpack.c.l.b16 %v2515
          %v2902 = vunpack.c.h.b16 %v2515
          %v2903 = vunpack.c.l.b16 %v2516
          %v2904 = vunpack.c.h.b16 %v2516
          %v2905 = vunpack.c.l.b16 %v2517
          %v2906 = vunpack.c.h.b16 %v2517
          %v2907 = vunpack.c.l.b16 %v2518
          %v2908 = vunpack.c.h.b16 %v2518
          %v2909 = vunpack.c.l.b16 %v2519
          %v2910 = vunpack.c.h.b16 %v2519
          %v2911 = vunpack.c.l.b16 %v2520
          %v2912 = vunpack.c.h.b16 %v2520
          %v2913 = vunpack.c.l.b16 %v2521
          %v2914 = vunpack.c.h.b16 %v2521
          %v2915 = vunpack.c.l.b16 %v2522
          %v2916 = vunpack.c.h.b16 %v2522
          %v2917 = vunpack.c.l.b16 %v2523
          %v2918 = vunpack.c.h.b16 %v2523
          %v2919 = vunpack.c.l.b16 %v2524
          %v2920 = vunpack.c.h.b16 %v2524
          %v2921 = vunpack.c.l.b16 %v2525
          %v2922 = vunpack.c.h.b16 %v2525
          %v2923 = vunpack.c.l.b16 %v2526
          %v2924 = vunpack.c.h.b16 %v2526
          %v2925 = vunpack.c.l.b16 %v2527
          %v2926 = vunpack.c.h.b16 %v2527
          %v2927 = vunpack.c.l.b16 %v2528
          %v2928 = vunpack.c.h.b16 %v2528
          %v2929 = vunpack.c.l.b16 %v2529
          %v2930 = vunpack.c.h.b16 %v2529
          %v2931 = vunpack.c.l.b16 %v2530
          %v2932 = vunpack.c.h.b16 %v2530
          %v2933 = vunpack.c.l.b16 %v2531
          %v2934 = vunpack.c.h.b16 %v2531
          %v2935 = vunpack.c.l.b16 %v2532
          %v2936 = vunpack.c.h.b16 %v2532
          %v2937 = vunpack.c.l.b16 %v2533
          %v2938 = vunpack.c.h.b16 %v2533
          %v2939 = vunpack.c.l.b16 %v2534
          %v2940 = vunpack.c.h.b16 %v2534
          %v2941 = vunpack.c.l.b16 %v2535
          %v2942 = vunpack.c.h.b16 %v2535
          %v2943 = vunpack.c.l.b16 %v2536
          %v2944 = vunpack.c.h.b16 %v2536
          %v2945 = vunpack.c.l.b16 %v2537
          %v2946 = vunpack.c.h.b16 %v2537
          %v2947 = vunpack.c.l.b16 %v2538
          %v2948 = vunpack.c.h.b16 %v2538
          %v2949 = vunpack.c.l.b16 %v2539
          %v2950 = vunpack.c.h.b16 %v2539
          %v2951 = vunpack.c.l.b16 %v2540
          %v2952 = vunpack.c.h.b16 %v2540
          %v2953 = vunpack.c.l.b16 %v2541
          %v2954 = vunpack.c.h.b16 %v2541
          %v2955 = vunpack.c.l.b16 %v2542
          %v2956 = vunpack.c.h.b16 %v2542
          %v2957 = vunpack.c.l.b16 %v2543
          %v2958 = vunpack.c.h.b16 %v2543
          %v2959 = vunpack.c.l.b16 %v2544
          %v2960 = vunpack.c.h.b16 %v2544
          %v2961 = vpack.c.b16 %v2709, %v2705
          %v2962 = vpack.c.b16 %v2710, %v2706
          %v2963 = vpack.c.b16 %v2711, %v2707
          %v2964 = vpack.c.b16 %v2712, %v2708
          %v2965 = vpack.c.b16 %v2717, %v2713
          %v2966 = vpack.c.b16 %v2718, %v2714
          %v2967 = vpack.c.b16 %v2719, %v2715
          %v2968 = vpack.c.b16 %v2720, %v2716
          %v2969 = vpack.c.b16 %v2725, %v2721
          %v2970 = vpack.c.b16 %v2726, %v2722
          %v2971 = vpack.c.b16 %v2727, %v2723
          %v2972 = vpack.c.b16 %v2728, %v2724
          %v2973 = vpack.c.b16 %v2733, %v2729
          %v2974 = vpack.c.b16 %v2734, %v2730
          %v2975 = vpack.c.b16 %v2735, %v2731
          %v2976 = vpack.c.b16 %v2736, %v2732
          %v2977 = vpack.c.b16 %v2741, %v2737
          %v2978 = vpack.c.b16 %v2742, %v2738
          %v2979 = vpack.c.b16 %v2743, %v2739
          %v2980 = vpack.c.b16 %v2744, %v2740
          %v2981 = vpack.c.b16 %v2749, %v2745
          %v2982 = vpack.c.b16 %v2750, %v2746
          %v2983 = vpack.c.b16 %v2751, %v2747
          %v2984 = vpack.c.b16 %v2752, %v2748
          %v2985 = vpack.c.b16 %v2757, %v2753
          %v2986 = vpack.c.b16 %v2758, %v2754
          %v2987 = vpack.c.b16 %v2759, %v2755
          %v2988 = vpack.c.b16 %v2760, %v2756
          %v2989 = vpack.c.b16 %v2765, %v2761
          %v2990 = vpack.c.b16 %v2766, %v2762
          %v2991 = vpack.c.b16 %v2767, %v2763
          %v2992 = vpack.c.b16 %v2768, %v2764
          %v2993 = vpack.c.b16 %v2773, %v2769
          %v2994 = vpack.c.b16 %v2774, %v2770
          %v2995 = vpack.c.b16 %v2775, %v2771
          %v2996 = vpack.c.b16 %v2776, %v2772
          %v2997 = vpack.c.b16 %v2781, %v2777
          %v2998 = vpack.c.b16 %v2782, %v2778
          %v2999 = vpack.c.b16 %v2783, %v2779
          %v3000 = vpack.c.b16 %v2784, %v2780
          %v3001 = vpack.c.b16 %v2789, %v2785
          %v3002 = vpack.c.b16 %v2790, %v2786
          %v3003 = vpack.c.b16 %v2791, %v2787
          %v3004 = vpack.c.b16 %v2792, %v2788
          %v3005 = vpack.c.b16 %v2797, %v2793
          %v3006 = vpack.c.b16 %v2798, %v2794
          %v3007 = vpack.c.b16 %v2799, %v2795
          %v3008 = vpack.c.b16 %v2800, %v2796
          %v3009 = vpack.c.b16 %v2805, %v2801
          %v3010 = vpack.c.b16 %v2806, %v2802
          %v3011 = vpack.c.b16 %v2807, %v2803
          %v3012 = vpack.c.b16 %v2808, %v2804
          %v3013 = vpack.c.b16 %v2813, %v2809
          %v3014 = vpack.c.b16 %v2814, %v2810
          %v3015 = vpack.c.b16 %v2815, %v2811
          %v3016 = vpack.c.b16 %v2816, %v2812
          %v3017 = vpack.c.b16 %v2821, %v2817
          %v3018 = vpack.c.b16 %v2822, %v2818
          %v3019 = vpack.c.b16 %v2823, %v2819
          %v3020 = vpack.c.b16 %v2824, %v2820
          %v3021 = vpack.c.b16 %v2829, %v2825
          %v3022 = vpack.c.b16 %v2830, %v2826
          %v3023 = vpack.c.b16 %v2831, %v2827
          %v3024 = vpack.c.b16 %v2832, %v2828
          %v3025 = vpack.c.b16 %v2837, %v2833
          %v3026 = vpack.c.b16 %v2838, %v2834
          %v3027 = vpack.c.b16 %v2839, %v2835
          %v3028 = vpack.c.b16 %v2840, %v2836
          %v3029 = vpack.c.b16 %v2845, %v2841
          %v3030 = vpack.c.b16 %v2846, %v2842
          %v3031 = vpack.c.b16 %v2847, %v2843
          %v3032 = vpack.c.b16 %v2848, %v2844
          %v3033 = vpack.c.b16 %v2853, %v2849
          %v3034 = vpack.c.b16 %v2854, %v2850
          %v3035 = vpack.c.b16 %v2855, %v2851
          %v3036 = vpack.c.b16 %v2856, %v2852
          %v3037 = vpack.c.b16 %v2861, %v2857
          %v3038 = vpack.c.b16 %v2862, %v2858
          %v3039 = vpack.c.b16 %v2863, %v2859
          %v3040 = vpack.c.b16 %v2864, %v2860
          %v3041 = vpack.c.b16 %v2869, %v2865
          %v3042 = vpack.c.b16 %v2870, %v2866
          %v3043 = vpack.c.b16 %v2871, %v2867
          %v3044 = vpack.c.b16 %v2872, %v2868
          %v3045 = vpack.c.b16 %v2877, %v2873
          %v3046 = vpack.c.b16 %v2878, %v2874
          %v3047 = vpack.c.b16 %v2879, %v2875
          %v3048 = vpack.c.b16 %v2880, %v2876
          %v3049 = vpack.c.b16 %v2885, %v2881
          %v3050 = vpack.c.b16 %v2886, %v2882
          %v3051 = vpack.c.b16 %v2887, %v2883
          %v3052 = vpack.c.b16 %v2888, %v2884
          %v3053 = vpack.c.b16 %v2893, %v2889
          %v3054 = vpack.c.b16 %v2894, %v2890
          %v3055 = vpack.c.b16 %v2895, %v2891
          %v3056 = vpack.c.b16 %v2896, %v2892
          %v3057 = vpack.c.b16 %v2901, %v2897
          %v3058 = vpack.c.b16 %v2902, %v2898
          %v3059 = vpack.c.b16 %v2903, %v2899
          %v3060 = vpack.c.b16 %v2904, %v2900
          %v3061 = vpack.c.b16 %v2909, %v2905
          %v3062 = vpack.c.b16 %v2910, %v2906
          %v3063 = vpack.c.b16 %v2911, %v2907
          %v3064 = vpack.c.b16 %v2912, %v2908
          %v3065 = vpack.c.b16 %v2917, %v2913
          %v3066 = vpack.c.b16 %v2918, %v2914
          %v3067 = vpack.c.b16 %v2919, %v2915
          %v3068 = vpack.c.b16 %v2920, %v2916
          %v3069 = vpack.c.b16 %v2925, %v2921
          %v3070 = vpack.c.b16 %v2926, %v2922
          %v3071 = vpack.c.b16 %v2927, %v2923
          %v3072 = vpack.c.b16 %v2928, %v2924
          %v3073 = vpack.c.b16 %v2933, %v2929
          %v3074 = vpack.c.b16 %v2934, %v2930
          %v3075 = vpack.c.b16 %v2935, %v2931
          %v3076 = vpack.c.b16 %v2936, %v2932
          %v3077 = vpack.c.b16 %v2941, %v2937
          %v3078 = vpack.c.b16 %v2942, %v2938
          %v3079 = vpack.c.b16 %v2943, %v2939
          %v3080 = vpack.c.b16 %v2944, %v2940
          %v3081 = vpack.c.b16 %v2949, %v2945
          %v3082 = vpack.c.b16 %v2950, %v2946
          %v3083 = vpack.c.b16 %v2951, %v2947
          %v3084 = vpack.c.b16 %v2952, %v2948
          %v3085 = vpack.c.b16 %v2957, %v2953
          %v3086 = vpack.c.b16 %v2958, %v2954
          %v3087 = vpack.c.b16 %v2959, %v2955
          %v3088 = vpack.c.b16 %v2960, %v2956
          %3217 = vmatprep.subr.bf16.mxu0 0
          %3218 = vmatpush1.bf16.msra.mxu0 %v2545
          %3219 = vmatprep.subr.bf16.mxu0 0
          %3220 = vmatpush1.bf16.msra.mxu0 %v2546
          %3221 = vmatprep.subr.bf16.mxu0 0
          %3222 = vmatpush1.bf16.msra.mxu0 %v2547
          %3223 = vmatprep.subr.bf16.mxu0 0
          %3224 = vmatpush1.bf16.msra.mxu0 %v2548
          %3225 = vmatprep.subr.bf16.mxu0 0
          %3226 = vmatpush1.bf16.msra.mxu0 %v2549
          %3227 = vmatprep.subr.bf16.mxu0 0
          %3228 = vmatpush1.bf16.msra.mxu0 %v2550
          %3229 = vmatprep.subr.bf16.mxu0 0
          %3230 = vmatpush1.bf16.msra.mxu0 %v2551
          %3231 = vmatprep.subr.bf16.mxu0 0
          %3232 = vmatpush1.bf16.msra.mxu0 %v2552
          %3233 = vmatprep.subr.bf16.mxu0 0
          %3234 = vmatpush1.bf16.msra.mxu0 %v2553
          %3235 = vmatprep.subr.bf16.mxu0 0
          %3236 = vmatpush1.bf16.msra.mxu0 %v2554
          %3237 = vmatprep.subr.bf16.mxu0 0
          %3238 = vmatpush1.bf16.msra.mxu0 %v2555
          %3239 = vmatprep.subr.bf16.mxu0 0
          %3240 = vmatpush1.bf16.msra.mxu0 %v2556
          %3241 = vmatprep.subr.bf16.mxu0 0
          %3242 = vmatpush1.bf16.msra.mxu0 %v2557
          %3243 = vmatprep.subr.bf16.mxu0 0
          %3244 = vmatpush1.bf16.msra.mxu0 %v2558
          %3245 = vmatprep.subr.bf16.mxu0 0
          %3246 = vmatpush1.bf16.msra.mxu0 %v2559
          %3247 = vmatprep.subr.bf16.mxu0 0
          %3248 = vmatpush1.bf16.msra.mxu0 %v2560
          %3249 = vmatprep.mubr.bf16.mxu0 %v2962
          %3250 = vmatmul.mubr.bf16.gmra.mrb[0].mxu0 %v2961
          %v3251 = vpop.f32.mrb[0].mxu0
          %v3252 = vadd.f32 0.0, %v3251
          %v3253 = vpop.f32.mrb[0].mxu0
          %v3254 = vpop.f32.mrb[0].mxu0
          %v3255 = vadd.f32 0.0, %v3254
          %v3256 = vpop.f32.mrb[0].mxu0
          %3257 = vmatprep.mubr.bf16.mxu0 %v2966
          %3258 = vmatmul.mubr.bf16.gmra.mrb[0].mxu0 %v2965
          %v3259 = vpop.f32.mrb[0].mxu0
          %v3260 = vadd.f32 0.0, %v3259
          %v3261 = vpop.f32.mrb[0].mxu0
          %v3262 = vpop.f32.mrb[0].mxu0
          %v3263 = vadd.f32 0.0, %v3262
          %v3264 = vpop.f32.mrb[0].mxu0
          %3265 = vmatprep.mubr.bf16.mxu0 %v2970
          %3266 = vmatmul.mubr.bf16.gmra.mrb[0].mxu0 %v2969
          %v3267 = vpop.f32.mrb[0].mxu0
          %v3268 = vadd.f32 0.0, %v3267
          %v3269 = vpop.f32.mrb[0].mxu0
          %v3270 = vpop.f32.mrb[0].mxu0
          %v3271 = vadd.f32 0.0, %v3270
          %v3272 = vpop.f32.mrb[0].mxu0
          %3273 = vmatprep.mubr.bf16.mxu0 %v2974
          %3274 = vmatmul.mubr.bf16.gmra.mrb[0].mxu0 %v2973
          %v3275 = vpop.f32.mrb[0].mxu0
          %v3276 = vadd.f32 0.0, %v3275
          %v3277 = vpop.f32.mrb[0].mxu0
          %v3278 = vpop.f32.mrb[0].mxu0
          %v3279 = vadd.f32 0.0, %v3278
          %v3280 = vpop.f32.mrb[0].mxu0
          %3281 = vmatprep.mubr.bf16.mxu0 %v2978
          %3282 = vmatmul.mubr.bf16.gmra.mrb[0].mxu0 %v2977
          %v3283 = vpop.f32.mrb[0].mxu0
          %v3284 = vadd.f32 0.0, %v3283
          %v3285 = vpop.f32.mrb[0].mxu0
          %v3286 = vpop.f32.mrb[0].mxu0
          %v3287 = vadd.f32 0.0, %v3286
          %v3288 = vpop.f32.mrb[0].mxu0
          %3289 = vmatprep.mubr.bf16.mxu0 %v2982
          %3290 = vmatmul.mubr.bf16.gmra.mrb[0].mxu0 %v2981
          %v3291 = vpop.f32.mrb[0].mxu0
          %v3292 = vadd.f32 0.0, %v3291
          %v3293 = vpop.f32.mrb[0].mxu0
          %v3294 = vpop.f32.mrb[0].mxu0
          %v3295 = vadd.f32 0.0, %v3294
          %v3296 = vpop.f32.mrb[0].mxu0
          %3297 = vmatprep.mubr.bf16.mxu0 %v2986
          %3298 = vmatmul.mubr.bf16.gmra.mrb[0].mxu0 %v2985
          %v3299 = vpop.f32.mrb[0].mxu0
          %v3300 = vadd.f32 0.0, %v3299
          %v3301 = vpop.f32.mrb[0].mxu0
          %v3302 = vpop.f32.mrb[0].mxu0
          %v3303 = vadd.f32 0.0, %v3302
          %v3304 = vpop.f32.mrb[0].mxu0
          %3305 = vmatprep.mubr.bf16.mxu0 %v2990
          %3306 = vmatmul.mubr.bf16.gmra.mrb[0].mxu0 %v2989
          %v3307 = vpop.f32.mrb[0].mxu0
          %v3308 = vadd.f32 0.0, %v3307
          %v3309 = vpop.f32.mrb[0].mxu0
          %v3310 = vpop.f32.mrb[0].mxu0
          %v3311 = vadd.f32 0.0, %v3310
          %v3312 = vpop.f32.mrb[0].mxu0
          %3313 = vmatprep.mubr.bf16.mxu0 %v2994
          %3314 = vmatmul.mubr.bf16.gmra.mrb[0].mxu0 %v2993
          %v3315 = vpop.f32.mrb[0].mxu0
          %v3316 = vadd.f32 0.0, %v3315
          %v3317 = vpop.f32.mrb[0].mxu0
          %v3318 = vpop.f32.mrb[0].mxu0
          %v3319 = vadd.f32 0.0, %v3318
          %v3320 = vpop.f32.mrb[0].mxu0
          %3321 = vmatprep.mubr.bf16.mxu0 %v2998
          %3322 = vmatmul.mubr.bf16.gmra.mrb[0].mxu0 %v2997
          %v3323 = vpop.f32.mrb[0].mxu0
          %v3324 = vadd.f32 0.0, %v3323
          %v3325 = vpop.f32.mrb[0].mxu0
          %v3326 = vpop.f32.mrb[0].mxu0
          %v3327 = vadd.f32 0.0, %v3326
          %v3328 = vpop.f32.mrb[0].mxu0
          %3329 = vmatprep.mubr.bf16.mxu0 %v3002
          %3330 = vmatmul.mubr.bf16.gmra.mrb[0].mxu0 %v3001
          %v3331 = vpop.f32.mrb[0].mxu0
          %v3332 = vadd.f32 0.0, %v3331
          %v3333 = vpop.f32.mrb[0].mxu0
          %v3334 = vpop.f32.mrb[0].mxu0
          %v3335 = vadd.f32 0.0, %v3334
          %v3336 = vpop.f32.mrb[0].mxu0
          %3337 = vmatprep.mubr.bf16.mxu0 %v3006
          %3338 = vmatmul.mubr.bf16.gmra.mrb[0].mxu0 %v3005
          %v3339 = vpop.f32.mrb[0].mxu0
          %v3340 = vadd.f32 0.0, %v3339
          %v3341 = vpop.f32.mrb[0].mxu0
          %v3342 = vpop.f32.mrb[0].mxu0
          %v3343 = vadd.f32 0.0, %v3342
          %v3344 = vpop.f32.mrb[0].mxu0
          %3345 = vmatprep.mubr.bf16.mxu0 %v3010
          %3346 = vmatmul.mubr.bf16.gmra.mrb[0].mxu0 %v3009
          %v3347 = vpop.f32.mrb[0].mxu0
          %v3348 = vadd.f32 0.0, %v3347
          %v3349 = vpop.f32.mrb[0].mxu0
          %v3350 = vpop.f32.mrb[0].mxu0
          %v3351 = vadd.f32 0.0, %v3350
          %v3352 = vpop.f32.mrb[0].mxu0
          %3353 = vmatprep.mubr.bf16.mxu0 %v3014
          %3354 = vmatmul.mubr.bf16.gmra.mrb[0].mxu0 %v3013
          %v3355 = vpop.f32.mrb[0].mxu0
          %v3356 = vadd.f32 0.0, %v3355
          %v3357 = vpop.f32.mrb[0].mxu0
          %v3358 = vpop.f32.mrb[0].mxu0
          %v3359 = vadd.f32 0.0, %v3358
          %v3360 = vpop.f32.mrb[0].mxu0
          %3361 = vmatprep.mubr.bf16.mxu0 %v3018
          %3362 = vmatmul.mubr.bf16.gmra.mrb[0].mxu0 %v3017
          %v3363 = vpop.f32.mrb[0].mxu0
          %v3364 = vadd.f32 0.0, %v3363
          %v3365 = vpop.f32.mrb[0].mxu0
          %v3366 = vpop.f32.mrb[0].mxu0
          %v3367 = vadd.f32 0.0, %v3366
          %v3368 = vpop.f32.mrb[0].mxu0
          %3369 = vmatprep.mubr.bf16.mxu0 %v3022
          %3370 = vmatmul.mubr.bf16.gmra.mrb[0].mxu0 %v3021
          %v3371 = vpop.f32.mrb[0].mxu0
          %v3372 = vadd.f32 0.0, %v3371
          %v3373 = vpop.f32.mrb[0].mxu0
          %v3374 = vpop.f32.mrb[0].mxu0
          %v3375 = vadd.f32 0.0, %v3374
          %v3376 = vpop.f32.mrb[0].mxu0
          %3377 = vmatprep.mubr.bf16.mxu0 %v3026
          %3378 = vmatmul.mubr.bf16.gmra.mrb[0].mxu0 %v3025
          %v3379 = vpop.f32.mrb[0].mxu0
          %v3380 = vadd.f32 0.0, %v3379
          %v3381 = vpop.f32.mrb[0].mxu0
          %v3382 = vpop.f32.mrb[0].mxu0
          %v3383 = vadd.f32 0.0, %v3382
          %v3384 = vpop.f32.mrb[0].mxu0
          %3385 = vmatprep.mubr.bf16.mxu0 %v3030
          %3386 = vmatmul.mubr.bf16.gmra.mrb[0].mxu0 %v3029
          %v3387 = vpop.f32.mrb[0].mxu0
          %v3388 = vadd.f32 0.0, %v3387
          %v3389 = vpop.f32.mrb[0].mxu0
          %v3390 = vpop.f32.mrb[0].mxu0
          %v3391 = vadd.f32 0.0, %v3390
          %v3392 = vpop.f32.mrb[0].mxu0
          %3393 = vmatprep.mubr.bf16.mxu0 %v3034
          %3394 = vmatmul.mubr.bf16.gmra.mrb[0].mxu0 %v3033
          %v3395 = vpop.f32.mrb[0].mxu0
          %v3396 = vadd.f32 0.0, %v3395
          %v3397 = vpop.f32.mrb[0].mxu0
          %v3398 = vpop.f32.mrb[0].mxu0
          %v3399 = vadd.f32 0.0, %v3398
          %v3400 = vpop.f32.mrb[0].mxu0
          %3401 = vmatprep.mubr.bf16.mxu0 %v3038
          %3402 = vmatmul.mubr.bf16.gmra.mrb[0].mxu0 %v3037
          %v3403 = vpop.f32.mrb[0].mxu0
          %v3404 = vadd.f32 0.0, %v3403
          %v3405 = vpop.f32.mrb[0].mxu0
          %v3406 = vpop.f32.mrb[0].mxu0
          %v3407 = vadd.f32 0.0, %v3406
          %v3408 = vpop.f32.mrb[0].mxu0
          %3409 = vmatprep.mubr.bf16.mxu0 %v3042
          %3410 = vmatmul.mubr.bf16.gmra.mrb[0].mxu0 %v3041
          %v3411 = vpop.f32.mrb[0].mxu0
          %v3412 = vadd.f32 0.0, %v3411
          %v3413 = vpop.f32.mrb[0].mxu0
          %v3414 = vpop.f32.mrb[0].mxu0
          %v3415 = vadd.f32 0.0, %v3414
          %v3416 = vpop.f32.mrb[0].mxu0
          %3417 = vmatprep.mubr.bf16.mxu0 %v3046
          %3418 = vmatmul.mubr.bf16.gmra.mrb[0].mxu0 %v3045
          %v3419 = vpop.f32.mrb[0].mxu0
          %v3420 = vadd.f32 0.0, %v3419
          %v3421 = vpop.f32.mrb[0].mxu0
          %v3422 = vpop.f32.mrb[0].mxu0
          %v3423 = vadd.f32 0.0, %v3422
          %v3424 = vpop.f32.mrb[0].mxu0
          %3425 = vmatprep.mubr.bf16.mxu0 %v3050
          %3426 = vmatmul.mubr.bf16.gmra.mrb[0].mxu0 %v3049
          %v3427 = vpop.f32.mrb[0].mxu0
          %v3428 = vadd.f32 0.0, %v3427
          %v3429 = vpop.f32.mrb[0].mxu0
          %v3430 = vpop.f32.mrb[0].mxu0
          %v3431 = vadd.f32 0.0, %v3430
          %v3432 = vpop.f32.mrb[0].mxu0
          %3433 = vmatprep.mubr.bf16.mxu0 %v3054
          %3434 = vmatmul.mubr.bf16.gmra.mrb[0].mxu0 %v3053
          %v3435 = vpop.f32.mrb[0].mxu0
          %v3436 = vadd.f32 0.0, %v3435
          %v3437 = vpop.f32.mrb[0].mxu0
          %v3438 = vpop.f32.mrb[0].mxu0
          %v3439 = vadd.f32 0.0, %v3438
          %v3440 = vpop.f32.mrb[0].mxu0
          %3441 = vmatprep.mubr.bf16.mxu0 %v3058
          %3442 = vmatmul.mubr.bf16.gmra.mrb[0].mxu0 %v3057
          %v3443 = vpop.f32.mrb[0].mxu0
          %v3444 = vadd.f32 0.0, %v3443
          %v3445 = vpop.f32.mrb[0].mxu0
          %v3446 = vpop.f32.mrb[0].mxu0
          %v3447 = vadd.f32 0.0, %v3446
          %v3448 = vpop.f32.mrb[0].mxu0
          %3449 = vmatprep.mubr.bf16.mxu0 %v3062
          %3450 = vmatmul.mubr.bf16.gmra.mrb[0].mxu0 %v3061
          %v3451 = vpop.f32.mrb[0].mxu0
          %v3452 = vadd.f32 0.0, %v3451
          %v3453 = vpop.f32.mrb[0].mxu0
          %v3454 = vpop.f32.mrb[0].mxu0
          %v3455 = vadd.f32 0.0, %v3454
          %v3456 = vpop.f32.mrb[0].mxu0
          %3457 = vmatprep.mubr.bf16.mxu0 %v3066
          %3458 = vmatmul.mubr.bf16.gmra.mrb[0].mxu0 %v3065
          %v3459 = vpop.f32.mrb[0].mxu0
          %v3460 = vadd.f32 0.0, %v3459
          %v3461 = vpop.f32.mrb[0].mxu0
          %v3462 = vpop.f32.mrb[0].mxu0
          %v3463 = vadd.f32 0.0, %v3462
          %v3464 = vpop.f32.mrb[0].mxu0
          %3465 = vmatprep.mubr.bf16.mxu0 %v3070
          %3466 = vmatmul.mubr.bf16.gmra.mrb[0].mxu0 %v3069
          %v3467 = vpop.f32.mrb[0].mxu0
          %v3468 = vadd.f32 0.0, %v3467
          %v3469 = vpop.f32.mrb[0].mxu0
          %v3470 = vpop.f32.mrb[0].mxu0
          %v3471 = vadd.f32 0.0, %v3470
          %v3472 = vpop.f32.mrb[0].mxu0
          %3473 = vmatprep.mubr.bf16.mxu0 %v3074
          %3474 = vmatmul.mubr.bf16.gmra.mrb[0].mxu0 %v3073
          %v3475 = vpop.f32.mrb[0].mxu0
          %v3476 = vadd.f32 0.0, %v3475
          %v3477 = vpop.f32.mrb[0].mxu0
          %v3478 = vpop.f32.mrb[0].mxu0
          %v3479 = vadd.f32 0.0, %v3478
          %v3480 = vpop.f32.mrb[0].mxu0
          %3481 = vmatprep.mubr.bf16.mxu0 %v3078
          %3482 = vmatmul.mubr.bf16.gmra.mrb[0].mxu0 %v3077
          %v3483 = vpop.f32.mrb[0].mxu0
          %v3484 = vadd.f32 0.0, %v3483
          %v3485 = vpop.f32.mrb[0].mxu0
          %v3486 = vpop.f32.mrb[0].mxu0
          %v3487 = vadd.f32 0.0, %v3486
          %v3488 = vpop.f32.mrb[0].mxu0
          %3489 = vmatprep.mubr.bf16.mxu0 %v3082
          %3490 = vmatmul.mubr.bf16.gmra.mrb[0].mxu0 %v3081
          %v3491 = vpop.f32.mrb[0].mxu0
          %v3492 = vadd.f32 0.0, %v3491
          %v3493 = vpop.f32.mrb[0].mxu0
          %v3494 = vpop.f32.mrb[0].mxu0
          %v3495 = vadd.f32 0.0, %v3494
          %v3496 = vpop.f32.mrb[0].mxu0
          %3497 = vmatprep.mubr.bf16.mxu0 %v3086
          %3498 = vmatmul.mubr.bf16.gmra.mrb[0].mxu0 %v3085
          %v3499 = vpop.f32.mrb[0].mxu0
          %v3500 = vadd.f32 0.0, %v3499
          %v3501 = vpop.f32.mrb[0].mxu0
          %v3502 = vpop.f32.mrb[0].mxu0
          %v3503 = vadd.f32 0.0, %v3502
          %v3504 = vpop.f32.mrb[0].mxu0
          %3505 = vdwg.mxu0
          %3506 = vmatprep.subr.bf16.mxu0 0
          %3507 = vmatpush1.bf16.msra.mxu0 %v2561
          %3508 = vmatprep.subr.bf16.mxu0 0
          %3509 = vmatpush1.bf16.msra.mxu0 %v2562
          %3510 = vmatprep.subr.bf16.mxu0 0
          %3511 = vmatpush1.bf16.msra.mxu0 %v2563
          %3512 = vmatprep.subr.bf16.mxu0 0
          %3513 = vmatpush1.bf16.msra.mxu0 %v2564
          %3514 = vmatprep.subr.bf16.mxu0 0
          %3515 = vmatpush1.bf16.msra.mxu0 %v2565
          %3516 = vmatprep.subr.bf16.mxu0 0
          %3517 = vmatpush1.bf16.msra.mxu0 %v2566
          %3518 = vmatprep.subr.bf16.mxu0 0
          %3519 = vmatpush1.bf16.msra.mxu0 %v2567
          %3520 = vmatprep.subr.bf16.mxu0 0
          %3521 = vmatpush1.bf16.msra.mxu0 %v2568
          %3522 = vmatprep.subr.bf16.mxu0 0
          %3523 = vmatpush1.bf16.msra.mxu0 %v2569
          %3524 = vmatprep.subr.bf16.mxu0 0
          %3525 = vmatpush1.bf16.msra.mxu0 %v2570
          %3526 = vmatprep.subr.bf16.mxu0 0
          %3527 = vmatpush1.bf16.msra.mxu0 %v2571
          %3528 = vmatprep.subr.bf16.mxu0 0
          %3529 = vmatpush1.bf16.msra.mxu0 %v2572
          %3530 = vmatprep.subr.bf16.mxu0 0
          %3531 = vmatpush1.bf16.msra.mxu0 %v2573
          %3532 = vmatprep.subr.bf16.mxu0 0
          %3533 = vmatpush1.bf16.msra.mxu0 %v2574
          %3534 = vmatprep.subr.bf16.mxu0 0
          %3535 = vmatpush1.bf16.msra.mxu0 %v2575
          %3536 = vmatprep.subr.bf16.mxu0 0
          %3537 = vmatpush1.bf16.msra.mxu0 %v2576
          %3538 = vmatprep.mubr.bf16.mxu0 %v2964
          %3539 = vmatmul.mubr.bf16.gmra.mrb[0].mxu0 %v2963
          %v3540 = vpop.f32.mrb[0].mxu0
          %v3541 = vadd.f32 %v3252, %v3540
          %v3542 = vpop.f32.mrb[0].mxu0
          %v3543 = vpop.f32.mrb[0].mxu0
          %v3544 = vadd.f32 %v3255, %v3543
          %v3545 = vpop.f32.mrb[0].mxu0
          %3546 = vmatprep.mubr.bf16.mxu0 %v2968
          %3547 = vmatmul.mubr.bf16.gmra.mrb[0].mxu0 %v2967
          %v3548 = vpop.f32.mrb[0].mxu0
          %v3549 = vadd.f32 %v3260, %v3548
          %v3550 = vpop.f32.mrb[0].mxu0
          %v3551 = vpop.f32.mrb[0].mxu0
          %v3552 = vadd.f32 %v3263, %v3551
          %v3553 = vpop.f32.mrb[0].mxu0
          %3554 = vmatprep.mubr.bf16.mxu0 %v2972
          %3555 = vmatmul.mubr.bf16.gmra.mrb[0].mxu0 %v2971
          %v3556 = vpop.f32.mrb[0].mxu0
          %v3557 = vadd.f32 %v3268, %v3556
          %v3558 = vpop.f32.mrb[0].mxu0
          %v3559 = vpop.f32.mrb[0].mxu0
          %v3560 = vadd.f32 %v3271, %v3559
          %v3561 = vpop.f32.mrb[0].mxu0
          %3562 = vmatprep.mubr.bf16.mxu0 %v2976
          %3563 = vmatmul.mubr.bf16.gmra.mrb[0].mxu0 %v2975
          %v3564 = vpop.f32.mrb[0].mxu0
          %v3565 = vadd.f32 %v3276, %v3564
          %v3566 = vpop.f32.mrb[0].mxu0
          %v3567 = vpop.f32.mrb[0].mxu0
          %v3568 = vadd.f32 %v3279, %v3567
          %v3569 = vpop.f32.mrb[0].mxu0
          %3570 = vmatprep.mubr.bf16.mxu0 %v2980
          %3571 = vmatmul.mubr.bf16.gmra.mrb[0].mxu0 %v2979
          %v3572 = vpop.f32.mrb[0].mxu0
          %v3573 = vadd.f32 %v3284, %v3572
          %v3574 = vpop.f32.mrb[0].mxu0
          %v3575 = vpop.f32.mrb[0].mxu0
          %v3576 = vadd.f32 %v3287, %v3575
          %v3577 = vpop.f32.mrb[0].mxu0
          %3578 = vmatprep.mubr.bf16.mxu0 %v2984
          %3579 = vmatmul.mubr.bf16.gmra.mrb[0].mxu0 %v2983
          %v3580 = vpop.f32.mrb[0].mxu0
          %v3581 = vadd.f32 %v3292, %v3580
          %v3582 = vpop.f32.mrb[0].mxu0
          %v3583 = vpop.f32.mrb[0].mxu0
          %v3584 = vadd.f32 %v3295, %v3583
          %v3585 = vpop.f32.mrb[0].mxu0
          %3586 = vmatprep.mubr.bf16.mxu0 %v2988
          %3587 = vmatmul.mubr.bf16.gmra.mrb[0].mxu0 %v2987
          %v3588 = vpop.f32.mrb[0].mxu0
          %v3589 = vadd.f32 %v3300, %v3588
          %v3590 = vpop.f32.mrb[0].mxu0
          %v3591 = vpop.f32.mrb[0].mxu0
          %v3592 = vadd.f32 %v3303, %v3591
          %v3593 = vpop.f32.mrb[0].mxu0
          %3594 = vmatprep.mubr.bf16.mxu0 %v2992
          %3595 = vmatmul.mubr.bf16.gmra.mrb[0].mxu0 %v2991
          %v3596 = vpop.f32.mrb[0].mxu0
          %v3597 = vadd.f32 %v3308, %v3596
          %v3598 = vpop.f32.mrb[0].mxu0
          %v3599 = vpop.f32.mrb[0].mxu0
          %v3600 = vadd.f32 %v3311, %v3599
          %v3601 = vpop.f32.mrb[0].mxu0
          %3602 = vmatprep.mubr.bf16.mxu0 %v2996
          %3603 = vmatmul.mubr.bf16.gmra.mrb[0].mxu0 %v2995
          %v3604 = vpop.f32.mrb[0].mxu0
          %v3605 = vadd.f32 %v3316, %v3604
          %v3606 = vpop.f32.mrb[0].mxu0
          %v3607 = vpop.f32.mrb[0].mxu0
          %v3608 = vadd.f32 %v3319, %v3607
          %v3609 = vpop.f32.mrb[0].mxu0
          %3610 = vmatprep.mubr.bf16.mxu0 %v3000
          %3611 = vmatmul.mubr.bf16.gmra.mrb[0].mxu0 %v2999
          %v3612 = vpop.f32.mrb[0].mxu0
          %v3613 = vadd.f32 %v3324, %v3612
          %v3614 = vpop.f32.mrb[0].mxu0
          %v3615 = vpop.f32.mrb[0].mxu0
          %v3616 = vadd.f32 %v3327, %v3615
          %v3617 = vpop.f32.mrb[0].mxu0
          %3618 = vmatprep.mubr.bf16.mxu0 %v3004
          %3619 = vmatmul.mubr.bf16.gmra.mrb[0].mxu0 %v3003
          %v3620 = vpop.f32.mrb[0].mxu0
          %v3621 = vadd.f32 %v3332, %v3620
          %v3622 = vpop.f32.mrb[0].mxu0
          %v3623 = vpop.f32.mrb[0].mxu0
          %v3624 = vadd.f32 %v3335, %v3623
          %v3625 = vpop.f32.mrb[0].mxu0
          %3626 = vmatprep.mubr.bf16.mxu0 %v3008
          %3627 = vmatmul.mubr.bf16.gmra.mrb[0].mxu0 %v3007
          %v3628 = vpop.f32.mrb[0].mxu0
          %v3629 = vadd.f32 %v3340, %v3628
          %v3630 = vpop.f32.mrb[0].mxu0
          %v3631 = vpop.f32.mrb[0].mxu0
          %v3632 = vadd.f32 %v3343, %v3631
          %v3633 = vpop.f32.mrb[0].mxu0
          %3634 = vmatprep.mubr.bf16.mxu0 %v3012
          %3635 = vmatmul.mubr.bf16.gmra.mrb[0].mxu0 %v3011
          %v3636 = vpop.f32.mrb[0].mxu0
          %v3637 = vadd.f32 %v3348, %v3636
          %v3638 = vpop.f32.mrb[0].mxu0
          %v3639 = vpop.f32.mrb[0].mxu0
          %v3640 = vadd.f32 %v3351, %v3639
          %v3641 = vpop.f32.mrb[0].mxu0
          %3642 = vmatprep.mubr.bf16.mxu0 %v3016
          %3643 = vmatmul.mubr.bf16.gmra.mrb[0].mxu0 %v3015
          %v3644 = vpop.f32.mrb[0].mxu0
          %v3645 = vadd.f32 %v3356, %v3644
          %v3646 = vpop.f32.mrb[0].mxu0
          %v3647 = vpop.f32.mrb[0].mxu0
          %v3648 = vadd.f32 %v3359, %v3647
          %v3649 = vpop.f32.mrb[0].mxu0
          %3650 = vmatprep.mubr.bf16.mxu0 %v3020
          %3651 = vmatmul.mubr.bf16.gmra.mrb[0].mxu0 %v3019
          %v3652 = vpop.f32.mrb[0].mxu0
          %v3653 = vadd.f32 %v3364, %v3652
          %v3654 = vpop.f32.mrb[0].mxu0
          %v3655 = vpop.f32.mrb[0].mxu0
          %v3656 = vadd.f32 %v3367, %v3655
          %v3657 = vpop.f32.mrb[0].mxu0
          %3658 = vmatprep.mubr.bf16.mxu0 %v3024
          %3659 = vmatmul.mubr.bf16.gmra.mrb[0].mxu0 %v3023
          %v3660 = vpop.f32.mrb[0].mxu0
          %v3661 = vadd.f32 %v3372, %v3660
          %v3662 = vpop.f32.mrb[0].mxu0
          %v3663 = vpop.f32.mrb[0].mxu0
          %v3664 = vadd.f32 %v3375, %v3663
          %v3665 = vpop.f32.mrb[0].mxu0
          %3666 = vmatprep.mubr.bf16.mxu0 %v3028
          %3667 = vmatmul.mubr.bf16.gmra.mrb[0].mxu0 %v3027
          %v3668 = vpop.f32.mrb[0].mxu0
          %v3669 = vadd.f32 %v3380, %v3668
          %v3670 = vpop.f32.mrb[0].mxu0
          %v3671 = vpop.f32.mrb[0].mxu0
          %v3672 = vadd.f32 %v3383, %v3671
          %v3673 = vpop.f32.mrb[0].mxu0
          %3674 = vmatprep.mubr.bf16.mxu0 %v3032
          %3675 = vmatmul.mubr.bf16.gmra.mrb[0].mxu0 %v3031
          %v3676 = vpop.f32.mrb[0].mxu0
          %v3677 = vadd.f32 %v3388, %v3676
          %v3678 = vpop.f32.mrb[0].mxu0
          %v3679 = vpop.f32.mrb[0].mxu0
          %v3680 = vadd.f32 %v3391, %v3679
          %v3681 = vpop.f32.mrb[0].mxu0
          %3682 = vmatprep.mubr.bf16.mxu0 %v3036
          %3683 = vmatmul.mubr.bf16.gmra.mrb[0].mxu0 %v3035
          %v3684 = vpop.f32.mrb[0].mxu0
          %v3685 = vadd.f32 %v3396, %v3684
          %v3686 = vpop.f32.mrb[0].mxu0
          %v3687 = vpop.f32.mrb[0].mxu0
          %v3688 = vadd.f32 %v3399, %v3687
          %v3689 = vpop.f32.mrb[0].mxu0
          %3690 = vmatprep.mubr.bf16.mxu0 %v3040
          %3691 = vmatmul.mubr.bf16.gmra.mrb[0].mxu0 %v3039
          %v3692 = vpop.f32.mrb[0].mxu0
          %v3693 = vadd.f32 %v3404, %v3692
          %v3694 = vpop.f32.mrb[0].mxu0
          %v3695 = vpop.f32.mrb[0].mxu0
          %v3696 = vadd.f32 %v3407, %v3695
          %v3697 = vpop.f32.mrb[0].mxu0
          %3698 = vmatprep.mubr.bf16.mxu0 %v3044
          %3699 = vmatmul.mubr.bf16.gmra.mrb[0].mxu0 %v3043
          %v3700 = vpop.f32.mrb[0].mxu0
          %v3701 = vadd.f32 %v3412, %v3700
          %v3702 = vpop.f32.mrb[0].mxu0
          %v3703 = vpop.f32.mrb[0].mxu0
          %v3704 = vadd.f32 %v3415, %v3703
          %v3705 = vpop.f32.mrb[0].mxu0
          %3706 = vmatprep.mubr.bf16.mxu0 %v3048
          %3707 = vmatmul.mubr.bf16.gmra.mrb[0].mxu0 %v3047
          %v3708 = vpop.f32.mrb[0].mxu0
          %v3709 = vadd.f32 %v3420, %v3708
          %v3710 = vpop.f32.mrb[0].mxu0
          %v3711 = vpop.f32.mrb[0].mxu0
          %v3712 = vadd.f32 %v3423, %v3711
          %v3713 = vpop.f32.mrb[0].mxu0
          %3714 = vmatprep.mubr.bf16.mxu0 %v3052
          %3715 = vmatmul.mubr.bf16.gmra.mrb[0].mxu0 %v3051
          %v3716 = vpop.f32.mrb[0].mxu0
          %v3717 = vadd.f32 %v3428, %v3716
          %v3718 = vpop.f32.mrb[0].mxu0
          %v3719 = vpop.f32.mrb[0].mxu0
          %v3720 = vadd.f32 %v3431, %v3719
          %v3721 = vpop.f32.mrb[0].mxu0
          %3722 = vmatprep.mubr.bf16.mxu0 %v3056
          %3723 = vmatmul.mubr.bf16.gmra.mrb[0].mxu0 %v3055
          %v3724 = vpop.f32.mrb[0].mxu0
          %v3725 = vadd.f32 %v3436, %v3724
          %v3726 = vpop.f32.mrb[0].mxu0
          %v3727 = vpop.f32.mrb[0].mxu0
          %v3728 = vadd.f32 %v3439, %v3727
          %v3729 = vpop.f32.mrb[0].mxu0
          %3730 = vmatprep.mubr.bf16.mxu0 %v3060
          %3731 = vmatmul.mubr.bf16.gmra.mrb[0].mxu0 %v3059
          %v3732 = vpop.f32.mrb[0].mxu0
          %v3733 = vadd.f32 %v3444, %v3732
          %v3734 = vpop.f32.mrb[0].mxu0
          %v3735 = vpop.f32.mrb[0].mxu0
          %v3736 = vadd.f32 %v3447, %v3735
          %v3737 = vpop.f32.mrb[0].mxu0
          %3738 = vmatprep.mubr.bf16.mxu0 %v3064
          %3739 = vmatmul.mubr.bf16.gmra.mrb[0].mxu0 %v3063
          %v3740 = vpop.f32.mrb[0].mxu0
          %v3741 = vadd.f32 %v3452, %v3740
          %v3742 = vpop.f32.mrb[0].mxu0
          %v3743 = vpop.f32.mrb[0].mxu0
          %v3744 = vadd.f32 %v3455, %v3743
          %v3745 = vpop.f32.mrb[0].mxu0
          %3746 = vmatprep.mubr.bf16.mxu0 %v3068
          %3747 = vmatmul.mubr.bf16.gmra.mrb[0].mxu0 %v3067
          %v3748 = vpop.f32.mrb[0].mxu0
          %v3749 = vadd.f32 %v3460, %v3748
          %v3750 = vpop.f32.mrb[0].mxu0
          %v3751 = vpop.f32.mrb[0].mxu0
          %v3752 = vadd.f32 %v3463, %v3751
          %v3753 = vpop.f32.mrb[0].mxu0
          %3754 = vmatprep.mubr.bf16.mxu0 %v3072
          %3755 = vmatmul.mubr.bf16.gmra.mrb[0].mxu0 %v3071
          %v3756 = vpop.f32.mrb[0].mxu0
          %v3757 = vadd.f32 %v3468, %v3756
          %v3758 = vpop.f32.mrb[0].mxu0
          %v3759 = vpop.f32.mrb[0].mxu0
          %v3760 = vadd.f32 %v3471, %v3759
          %v3761 = vpop.f32.mrb[0].mxu0
          %3762 = vmatprep.mubr.bf16.mxu0 %v3076
          %3763 = vmatmul.mubr.bf16.gmra.mrb[0].mxu0 %v3075
          %v3764 = vpop.f32.mrb[0].mxu0
          %v3765 = vadd.f32 %v3476, %v3764
          %v3766 = vpop.f32.mrb[0].mxu0
          %v3767 = vpop.f32.mrb[0].mxu0
          %v3768 = vadd.f32 %v3479, %v3767
          %v3769 = vpop.f32.mrb[0].mxu0
          %3770 = vmatprep.mubr.bf16.mxu0 %v3080
          %3771 = vmatmul.mubr.bf16.gmra.mrb[0].mxu0 %v3079
          %v3772 = vpop.f32.mrb[0].mxu0
          %v3773 = vadd.f32 %v3484, %v3772
          %v3774 = vpop.f32.mrb[0].mxu0
          %v3775 = vpop.f32.mrb[0].mxu0
          %v3776 = vadd.f32 %v3487, %v3775
          %v3777 = vpop.f32.mrb[0].mxu0
          %3778 = vmatprep.mubr.bf16.mxu0 %v3084
          %3779 = vmatmul.mubr.bf16.gmra.mrb[0].mxu0 %v3083
          %v3780 = vpop.f32.mrb[0].mxu0
          %v3781 = vadd.f32 %v3492, %v3780
          %v3782 = vpop.f32.mrb[0].mxu0
          %v3783 = vpop.f32.mrb[0].mxu0
          %v3784 = vadd.f32 %v3495, %v3783
          %v3785 = vpop.f32.mrb[0].mxu0
          %3786 = vmatprep.mubr.bf16.mxu0 %v3088
          %3787 = vmatmul.mubr.bf16.gmra.mrb[0].mxu0 %v3087
          %v3788 = vpop.f32.mrb[0].mxu0
          %v3789 = vadd.f32 %v3500, %v3788
          %v3790 = vpop.f32.mrb[0].mxu0
          %v3791 = vpop.f32.mrb[0].mxu0
          %v3792 = vadd.f32 %v3503, %v3791
          %v3793 = vpop.f32.mrb[0].mxu0
          %3794 = vdwg.mxu0
          %v3795 = vpack.c.bf16 %v3544, %v3541
          %v3796 = vpack.c.bf16 %v3552, %v3549
          %v3797 = vpack.c.bf16 %v3560, %v3557
          %v3798 = vpack.c.bf16 %v3568, %v3565
          %v3799 = vpack.c.bf16 %v3576, %v3573
          %v3800 = vpack.c.bf16 %v3584, %v3581
          %v3801 = vpack.c.bf16 %v3592, %v3589
          %v3802 = vpack.c.bf16 %v3600, %v3597
          %v3803 = vpack.c.bf16 %v3608, %v3605
          %v3804 = vpack.c.bf16 %v3616, %v3613
          %v3805 = vpack.c.bf16 %v3624, %v3621
          %v3806 = vpack.c.bf16 %v3632, %v3629
          %v3807 = vpack.c.bf16 %v3640, %v3637
          %v3808 = vpack.c.bf16 %v3648, %v3645
          %v3809 = vpack.c.bf16 %v3656, %v3653
          %v3810 = vpack.c.bf16 %v3664, %v3661
          %v3811 = vpack.c.bf16 %v3672, %v3669
          %v3812 = vpack.c.bf16 %v3680, %v3677
          %v3813 = vpack.c.bf16 %v3688, %v3685
          %v3814 = vpack.c.bf16 %v3696, %v3693
          %v3815 = vpack.c.bf16 %v3704, %v3701
          %v3816 = vpack.c.bf16 %v3712, %v3709
          %v3817 = vpack.c.bf16 %v3720, %v3717
          %v3818 = vpack.c.bf16 %v3728, %v3725
          %v3819 = vpack.c.bf16 %v3736, %v3733
          %v3820 = vpack.c.bf16 %v3744, %v3741
          %v3821 = vpack.c.bf16 %v3752, %v3749
          %v3822 = vpack.c.bf16 %v3760, %v3757
          %v3823 = vpack.c.bf16 %v3768, %v3765
          %v3824 = vpack.c.bf16 %v3776, %v3773
          %v3825 = vpack.c.bf16 %v3784, %v3781
          %v3826 = vpack.c.bf16 %v3792, %v3789
          %s3827 = sshra.s32 %s202, 4
          %s3828 = sand.u32 %s202, 15
          %s3829 = smul.addr %s3827, 8
          %s3830 = scalar_lea.vmem [#allocation2], %s3829
          %3831 = vst [vmem:[%s3830] sm:$0xff] %v3795
          %3832 = vst [vmem:[%s3830 + $0x8] sm:$0xff] %v3796
          %3833 = vst [vmem:[%s3830 + $0x10] sm:$0xff] %v3797
          %3834 = vst [vmem:[%s3830 + $0x18] sm:$0xff] %v3798
          %3835 = vst [vmem:[%s3830 + $0x20] sm:$0xff] %v3799
          %3836 = vst [vmem:[%s3830 + $0x28] sm:$0xff] %v3800
          %3837 = vst [vmem:[%s3830 + $0x30] sm:$0xff] %v3801
          %3838 = vst [vmem:[%s3830 + $0x38] sm:$0xff] %v3802
          %3839 = vst [vmem:[%s3830 + $0x40] sm:$0xff] %v3803
          %3840 = vst [vmem:[%s3830 + $0x48] sm:$0xff] %v3804
          %3841 = vst [vmem:[%s3830 + $0x50] sm:$0xff] %v3805
          %3842 = vst [vmem:[%s3830 + $0x58] sm:$0xff] %v3806
          %3843 = vst [vmem:[%s3830 + $0x60] sm:$0xff] %v3807
          %3844 = vst [vmem:[%s3830 + $0x68] sm:$0xff] %v3808
          %3845 = vst [vmem:[%s3830 + $0x70] sm:$0xff] %v3809
          %3846 = vst [vmem:[%s3830 + $0x78] sm:$0xff] %v3810
          %3847 = vst [vmem:[%s3830 + $0x80] sm:$0xff] %v3811
          %3848 = vst [vmem:[%s3830 + $0x88] sm:$0xff] %v3812
          %3849 = vst [vmem:[%s3830 + $0x90] sm:$0xff] %v3813
          %3850 = vst [vmem:[%s3830 + $0x98] sm:$0xff] %v3814
          %3851 = vst [vmem:[%s3830 + $0xa0] sm:$0xff] %v3815
          %3852 = vst [vmem:[%s3830 + $0xa8] sm:$0xff] %v3816
          %3853 = vst [vmem:[%s3830 + $0xb0] sm:$0xff] %v3817
          %3854 = vst [vmem:[%s3830 + $0xb8] sm:$0xff] %v3818
          %3855 = vst [vmem:[%s3830 + $0xc0] sm:$0xff] %v3819
          %3856 = vst [vmem:[%s3830 + $0xc8] sm:$0xff] %v3820
          %3857 = vst [vmem:[%s3830 + $0xd0] sm:$0xff] %v3821
          %3858 = vst [vmem:[%s3830 + $0xd8] sm:$0xff] %v3822
          %3859 = vst [vmem:[%s3830 + $0xe0] sm:$0xff] %v3823
          %3860 = vst [vmem:[%s3830 + $0xe8] sm:$0xff] %v3824
          %3861 = vst [vmem:[%s3830 + $0xf0] sm:$0xff] %v3825
          %3862 = vst [vmem:[%s3830 + $0xf8] sm:$0xff] %v3826
          %s3863 = scalar_lea.vmem [#allocation11], %s202
          %v3864 = vld [vmem:[%s3863] sm:$0xff]
          %v3865 = vld [vmem:[%s3863 + $0x8] sm:$0xff]
          %v3866 = vld [vmem:[%s3863 + $0x10] sm:$0xff]
          %v3867 = vld [vmem:[%s3863 + $0x18] sm:$0xff]
          %v3868 = vld [vmem:[%s3863 + $0x20] sm:$0xff]
          %v3869 = vld [vmem:[%s3863 + $0x28] sm:$0xff]
          %v3870 = vld [vmem:[%s3863 + $0x30] sm:$0xff]
          %v3871 = vld [vmem:[%s3863 + $0x38] sm:$0xff]
          %v3872 = vld [vmem:[%s3863 + $0x40] sm:$0xff]
          %v3873 = vld [vmem:[%s3863 + $0x48] sm:$0xff]
          %v3874 = vld [vmem:[%s3863 + $0x50] sm:$0xff]
          %v3875 = vld [vmem:[%s3863 + $0x58] sm:$0xff]
          %v3876 = vld [vmem:[%s3863 + $0x60] sm:$0xff]
          %v3877 = vld [vmem:[%s3863 + $0x68] sm:$0xff]
          %v3878 = vld [vmem:[%s3863 + $0x70] sm:$0xff]
          %v3879 = vld [vmem:[%s3863 + $0x78] sm:$0xff]
          %v3880 = vld [vmem:[%s3863 + $0x80] sm:$0xff]
          %v3881 = vld [vmem:[%s3863 + $0x88] sm:$0xff]
          %v3882 = vld [vmem:[%s3863 + $0x90] sm:$0xff]
          %v3883 = vld [vmem:[%s3863 + $0x98] sm:$0xff]
          %v3884 = vld [vmem:[%s3863 + $0xa0] sm:$0xff]
          %v3885 = vld [vmem:[%s3863 + $0xa8] sm:$0xff]
          %v3886 = vld [vmem:[%s3863 + $0xb0] sm:$0xff]
          %v3887 = vld [vmem:[%s3863 + $0xb8] sm:$0xff]
          %v3888 = vld [vmem:[%s3863 + $0xc0] sm:$0xff]
          %v3889 = vld [vmem:[%s3863 + $0xc8] sm:$0xff]
          %v3890 = vld [vmem:[%s3863 + $0xd0] sm:$0xff]
          %v3891 = vld [vmem:[%s3863 + $0xd8] sm:$0xff]
          %v3892 = vld [vmem:[%s3863 + $0xe0] sm:$0xff]
          %v3893 = vld [vmem:[%s3863 + $0xe8] sm:$0xff]
          %v3894 = vld [vmem:[%s3863 + $0xf0] sm:$0xff]
          %v3895 = vld [vmem:[%s3863 + $0xf8] sm:$0xff]
          %v3896 = vld [vmem:[%s3863 + $0x100] sm:$0xff]
          %v3897 = vld [vmem:[%s3863 + $0x108] sm:$0xff]
          %v3898 = vld [vmem:[%s3863 + $0x110] sm:$0xff]
          %v3899 = vld [vmem:[%s3863 + $0x118] sm:$0xff]
          %v3900 = vld [vmem:[%s3863 + $0x120] sm:$0xff]
          %v3901 = vld [vmem:[%s3863 + $0x128] sm:$0xff]
          %v3902 = vld [vmem:[%s3863 + $0x130] sm:$0xff]
          %v3903 = vld [vmem:[%s3863 + $0x138] sm:$0xff]
          %v3904 = vld [vmem:[%s3863 + $0x140] sm:$0xff]
          %v3905 = vld [vmem:[%s3863 + $0x148] sm:$0xff]
          %v3906 = vld [vmem:[%s3863 + $0x150] sm:$0xff]
          %v3907 = vld [vmem:[%s3863 + $0x158] sm:$0xff]
          %v3908 = vld [vmem:[%s3863 + $0x160] sm:$0xff]
          %v3909 = vld [vmem:[%s3863 + $0x168] sm:$0xff]
          %v3910 = vld [vmem:[%s3863 + $0x170] sm:$0xff]
          %v3911 = vld [vmem:[%s3863 + $0x178] sm:$0xff]
          %v3912 = vld [vmem:[%s3863 + $0x180] sm:$0xff]
          %v3913 = vld [vmem:[%s3863 + $0x188] sm:$0xff]
          %v3914 = vld [vmem:[%s3863 + $0x190] sm:$0xff]
          %v3915 = vld [vmem:[%s3863 + $0x198] sm:$0xff]
          %v3916 = vld [vmem:[%s3863 + $0x1a0] sm:$0xff]
          %v3917 = vld [vmem:[%s3863 + $0x1a8] sm:$0xff]
          %v3918 = vld [vmem:[%s3863 + $0x1b0] sm:$0xff]
          %v3919 = vld [vmem:[%s3863 + $0x1b8] sm:$0xff]
          %v3920 = vld [vmem:[%s3863 + $0x1c0] sm:$0xff]
          %v3921 = vld [vmem:[%s3863 + $0x1c8] sm:$0xff]
          %v3922 = vld [vmem:[%s3863 + $0x1d0] sm:$0xff]
          %v3923 = vld [vmem:[%s3863 + $0x1d8] sm:$0xff]
          %v3924 = vld [vmem:[%s3863 + $0x1e0] sm:$0xff]
          %v3925 = vld [vmem:[%s3863 + $0x1e8] sm:$0xff]
          %v3926 = vld [vmem:[%s3863 + $0x1f0] sm:$0xff]
          %v3927 = vld [vmem:[%s3863 + $0x1f8] sm:$0xff]
          %s3928 = sadd.s32 %s22, 1
          %s3929 = sld [smem:[#allocation4 + %s3928]]
          %v3930 = vstv %s3929
          %v3931 = vmul.f32 %v3930, %v3541
          %v3932 = vmul.f32 %v3930, %v3544
          %v3933 = vmul.f32 %v3930, %v3549
          %v3934 = vmul.f32 %v3930, %v3552
          %v3935 = vmul.f32 %v3930, %v3557
          %v3936 = vmul.f32 %v3930, %v3560
          %v3937 = vmul.f32 %v3930, %v3565
          %v3938 = vmul.f32 %v3930, %v3568
          %v3939 = vmul.f32 %v3930, %v3573
          %v3940 = vmul.f32 %v3930, %v3576
          %v3941 = vmul.f32 %v3930, %v3581
          %v3942 = vmul.f32 %v3930, %v3584
          %v3943 = vmul.f32 %v3930, %v3589
          %v3944 = vmul.f32 %v3930, %v3592
          %v3945 = vmul.f32 %v3930, %v3597
          %v3946 = vmul.f32 %v3930, %v3600
          %v3947 = vmul.f32 %v3930, %v3605
          %v3948 = vmul.f32 %v3930, %v3608
          %v3949 = vmul.f32 %v3930, %v3613
          %v3950 = vmul.f32 %v3930, %v3616
          %v3951 = vmul.f32 %v3930, %v3621
          %v3952 = vmul.f32 %v3930, %v3624
          %v3953 = vmul.f32 %v3930, %v3629
          %v3954 = vmul.f32 %v3930, %v3632
          %v3955 = vmul.f32 %v3930, %v3637
          %v3956 = vmul.f32 %v3930, %v3640
          %v3957 = vmul.f32 %v3930, %v3645
          %v3958 = vmul.f32 %v3930, %v3648
          %v3959 = vmul.f32 %v3930, %v3653
          %v3960 = vmul.f32 %v3930, %v3656
          %v3961 = vmul.f32 %v3930, %v3661
          %v3962 = vmul.f32 %v3930, %v3664
          %v3963 = vmul.f32 %v3930, %v3669
          %v3964 = vmul.f32 %v3930, %v3672
          %v3965 = vmul.f32 %v3930, %v3677
          %v3966 = vmul.f32 %v3930, %v3680
          %v3967 = vmul.f32 %v3930, %v3685
          %v3968 = vmul.f32 %v3930, %v3688
          %v3969 = vmul.f32 %v3930, %v3693
          %v3970 = vmul.f32 %v3930, %v3696
          %v3971 = vmul.f32 %v3930, %v3701
          %v3972 = vmul.f32 %v3930, %v3704
          %v3973 = vmul.f32 %v3930, %v3709
          %v3974 = vmul.f32 %v3930, %v3712
          %v3975 = vmul.f32 %v3930, %v3717
          %v3976 = vmul.f32 %v3930, %v3720
          %v3977 = vmul.f32 %v3930, %v3725
          %v3978 = vmul.f32 %v3930, %v3728
          %v3979 = vmul.f32 %v3930, %v3733
          %v3980 = vmul.f32 %v3930, %v3736
          %v3981 = vmul.f32 %v3930, %v3741
          %v3982 = vmul.f32 %v3930, %v3744
          %v3983 = vmul.f32 %v3930, %v3749
          %v3984 = vmul.f32 %v3930, %v3752
          %v3985 = vmul.f32 %v3930, %v3757
          %v3986 = vmul.f32 %v3930, %v3760
          %v3987 = vmul.f32 %v3930, %v3765
          %v3988 = vmul.f32 %v3930, %v3768
          %v3989 = vmul.f32 %v3930, %v3773
          %v3990 = vmul.f32 %v3930, %v3776
          %v3991 = vmul.f32 %v3930, %v3781
          %v3992 = vmul.f32 %v3930, %v3784
          %v3993 = vmul.f32 %v3930, %v3789
          %v3994 = vmul.f32 %v3930, %v3792
          %v3995 = vadd.f32 %v3864, %v3931
          %v3996 = vadd.f32 %v3865, %v3932
          %v3997 = vadd.f32 %v3866, %v3933
          %v3998 = vadd.f32 %v3867, %v3934
          %v3999 = vadd.f32 %v3868, %v3935
          %v4000 = vadd.f32 %v3869, %v3936
          %v4001 = vadd.f32 %v3870, %v3937
          %v4002 = vadd.f32 %v3871, %v3938
          %v4003 = vadd.f32 %v3872, %v3939
          %v4004 = vadd.f32 %v3873, %v3940
          %v4005 = vadd.f32 %v3874, %v3941
          %v4006 = vadd.f32 %v3875, %v3942
          %v4007 = vadd.f32 %v3876, %v3943
          %v4008 = vadd.f32 %v3877, %v3944
          %v4009 = vadd.f32 %v3878, %v3945
          %v4010 = vadd.f32 %v3879, %v3946
          %v4011 = vadd.f32 %v3880, %v3947
          %v4012 = vadd.f32 %v3881, %v3948
          %v4013 = vadd.f32 %v3882, %v3949
          %v4014 = vadd.f32 %v3883, %v3950
          %v4015 = vadd.f32 %v3884, %v3951
          %v4016 = vadd.f32 %v3885, %v3952
          %v4017 = vadd.f32 %v3886, %v3953
          %v4018 = vadd.f32 %v3887, %v3954
          %v4019 = vadd.f32 %v3888, %v3955
          %v4020 = vadd.f32 %v3889, %v3956
          %v4021 = vadd.f32 %v3890, %v3957
          %v4022 = vadd.f32 %v3891, %v3958
          %v4023 = vadd.f32 %v3892, %v3959
          %v4024 = vadd.f32 %v3893, %v3960
          %v4025 = vadd.f32 %v3894, %v3961
          %v4026 = vadd.f32 %v3895, %v3962
          %v4027 = vadd.f32 %v3896, %v3963
          %v4028 = vadd.f32 %v3897, %v3964
          %v4029 = vadd.f32 %v3898, %v3965
          %v4030 = vadd.f32 %v3899, %v3966
          %v4031 = vadd.f32 %v3900, %v3967
          %v4032 = vadd.f32 %v3901, %v3968
          %v4033 = vadd.f32 %v3902, %v3969
          %v4034 = vadd.f32 %v3903, %v3970
          %v4035 = vadd.f32 %v3904, %v3971
          %v4036 = vadd.f32 %v3905, %v3972
          %v4037 = vadd.f32 %v3906, %v3973
          %v4038 = vadd.f32 %v3907, %v3974
          %v4039 = vadd.f32 %v3908, %v3975
          %v4040 = vadd.f32 %v3909, %v3976
          %v4041 = vadd.f32 %v3910, %v3977
          %v4042 = vadd.f32 %v3911, %v3978
          %v4043 = vadd.f32 %v3912, %v3979
          %v4044 = vadd.f32 %v3913, %v3980
          %v4045 = vadd.f32 %v3914, %v3981
          %v4046 = vadd.f32 %v3915, %v3982
          %v4047 = vadd.f32 %v3916, %v3983
          %v4048 = vadd.f32 %v3917, %v3984
          %v4049 = vadd.f32 %v3918, %v3985
          %v4050 = vadd.f32 %v3919, %v3986
          %v4051 = vadd.f32 %v3920, %v3987
          %v4052 = vadd.f32 %v3921, %v3988
          %v4053 = vadd.f32 %v3922, %v3989
          %v4054 = vadd.f32 %v3923, %v3990
          %v4055 = vadd.f32 %v3924, %v3991
          %v4056 = vadd.f32 %v3925, %v3992
          %v4057 = vadd.f32 %v3926, %v3993
          %v4058 = vadd.f32 %v3927, %v3994
          %4059 = vst [vmem:[%s3863] sm:$0xff] %v3995
          %4060 = vst [vmem:[%s3863 + $0x8] sm:$0xff] %v3996
          %4061 = vst [vmem:[%s3863 + $0x10] sm:$0xff] %v3997
          %4062 = vst [vmem:[%s3863 + $0x18] sm:$0xff] %v3998
          %4063 = vst [vmem:[%s3863 + $0x20] sm:$0xff] %v3999
          %4064 = vst [vmem:[%s3863 + $0x28] sm:$0xff] %v4000
          %4065 = vst [vmem:[%s3863 + $0x30] sm:$0xff] %v4001
          %4066 = vst [vmem:[%s3863 + $0x38] sm:$0xff] %v4002
          %4067 = vst [vmem:[%s3863 + $0x40] sm:$0xff] %v4003
          %4068 = vst [vmem:[%s3863 + $0x48] sm:$0xff] %v4004
          %4069 = vst [vmem:[%s3863 + $0x50] sm:$0xff] %v4005
          %4070 = vst [vmem:[%s3863 + $0x58] sm:$0xff] %v4006
          %4071 = vst [vmem:[%s3863 + $0x60] sm:$0xff] %v4007
          %4072 = vst [vmem:[%s3863 + $0x68] sm:$0xff] %v4008
          %4073 = vst [vmem:[%s3863 + $0x70] sm:$0xff] %v4009
          %4074 = vst [vmem:[%s3863 + $0x78] sm:$0xff] %v4010
          %4075 = vst [vmem:[%s3863 + $0x80] sm:$0xff] %v4011
          %4076 = vst [vmem:[%s3863 + $0x88] sm:$0xff] %v4012
          %4077 = vst [vmem:[%s3863 + $0x90] sm:$0xff] %v4013
          %4078 = vst [vmem:[%s3863 + $0x98] sm:$0xff] %v4014
          %4079 = vst [vmem:[%s3863 + $0xa0] sm:$0xff] %v4015
          %4080 = vst [vmem:[%s3863 + $0xa8] sm:$0xff] %v4016
          %4081 = vst [vmem:[%s3863 + $0xb0] sm:$0xff] %v4017
          %4082 = vst [vmem:[%s3863 + $0xb8] sm:$0xff] %v4018
          %4083 = vst [vmem:[%s3863 + $0xc0] sm:$0xff] %v4019
          %4084 = vst [vmem:[%s3863 + $0xc8] sm:$0xff] %v4020
          %4085 = vst [vmem:[%s3863 + $0xd0] sm:$0xff] %v4021
          %4086 = vst [vmem:[%s3863 + $0xd8] sm:$0xff] %v4022
          %4087 = vst [vmem:[%s3863 + $0xe0] sm:$0xff] %v4023
          %4088 = vst [vmem:[%s3863 + $0xe8] sm:$0xff] %v4024
          %4089 = vst [vmem:[%s3863 + $0xf0] sm:$0xff] %v4025
          %4090 = vst [vmem:[%s3863 + $0xf8] sm:$0xff] %v4026
          %4091 = vst [vmem:[%s3863 + $0x100] sm:$0xff] %v4027
          %4092 = vst [vmem:[%s3863 + $0x108] sm:$0xff] %v4028
          %4093 = vst [vmem:[%s3863 + $0x110] sm:$0xff] %v4029
          %4094 = vst [vmem:[%s3863 + $0x118] sm:$0xff] %v4030
          %4095 = vst [vmem:[%s3863 + $0x120] sm:$0xff] %v4031
          %4096 = vst [vmem:[%s3863 + $0x128] sm:$0xff] %v4032
          %4097 = vst [vmem:[%s3863 + $0x130] sm:$0xff] %v4033
          %4098 = vst [vmem:[%s3863 + $0x138] sm:$0xff] %v4034
          %4099 = vst [vmem:[%s3863 + $0x140] sm:$0xff] %v4035
          %4100 = vst [vmem:[%s3863 + $0x148] sm:$0xff] %v4036
          %4101 = vst [vmem:[%s3863 + $0x150] sm:$0xff] %v4037
          %4102 = vst [vmem:[%s3863 + $0x158] sm:$0xff] %v4038
          %4103 = vst [vmem:[%s3863 + $0x160] sm:$0xff] %v4039
          %4104 = vst [vmem:[%s3863 + $0x168] sm:$0xff] %v4040
          %4105 = vst [vmem:[%s3863 + $0x170] sm:$0xff] %v4041
          %4106 = vst [vmem:[%s3863 + $0x178] sm:$0xff] %v4042
          %4107 = vst [vmem:[%s3863 + $0x180] sm:$0xff] %v4043
          %4108 = vst [vmem:[%s3863 + $0x188] sm:$0xff] %v4044
          %4109 = vst [vmem:[%s3863 + $0x190] sm:$0xff] %v4045
          %4110 = vst [vmem:[%s3863 + $0x198] sm:$0xff] %v4046
          %4111 = vst [vmem:[%s3863 + $0x1a0] sm:$0xff] %v4047
          %4112 = vst [vmem:[%s3863 + $0x1a8] sm:$0xff] %v4048
          %4113 = vst [vmem:[%s3863 + $0x1b0] sm:$0xff] %v4049
          %4114 = vst [vmem:[%s3863 + $0x1b8] sm:$0xff] %v4050
          %4115 = vst [vmem:[%s3863 + $0x1c0] sm:$0xff] %v4051
          %4116 = vst [vmem:[%s3863 + $0x1c8] sm:$0xff] %v4052
          %4117 = vst [vmem:[%s3863 + $0x1d0] sm:$0xff] %v4053
          %4118 = vst [vmem:[%s3863 + $0x1d8] sm:$0xff] %v4054
          %4119 = vst [vmem:[%s3863 + $0x1e0] sm:$0xff] %v4055
          %4120 = vst [vmem:[%s3863 + $0x1e8] sm:$0xff] %v4056
          %4121 = vst [vmem:[%s3863 + $0x1f0] sm:$0xff] %v4057
          %4122 = vst [vmem:[%s3863 + $0x1f8] sm:$0xff] %v4058
        $region56: #{tpu_custom_call.1} parent=31 // pred_fallthru
          _
        // Predicated region
        $region57: #{tpu_custom_call.1} parent=31 // pred_check
          %p4123 = pneg %p111
        $region58: #{tpu_custom_call.1} parent=31 // pred_check_branch
          %4125 = sbr.rel (%p4123) target = $region60
        $region59: #{tpu_custom_call.1} parent=31 // pred_region
          %s4127 = ssub.s32 8192, 8192
          %4128 = vsyncadd [#allocation6], %s4127
          %s4129 = sshll.u32 [#allocation11], 4
          %s4130 = int_to_ptr.vmem [resolvable:$true] %s4129
          %4135 = dma.vmem_to_hbm [thread:$0]  %s4130, 8192, %s3, [#allocation6], 128, 128, 8
        $region60: #{tpu_custom_call.1} parent=31 // pred_fallthru
          _
        // Predicated region
        $region61: #{tpu_custom_call.1} parent=31 // pred_check
          %p4136 = pneg %p111
        $region62: #{tpu_custom_call.1} parent=31 // pred_check_branch
          %4138 = sbr.rel (%p4136) target = $region64
        $region63: #{tpu_custom_call.1} parent=31 // pred_region
          %4139 = dma.done [#allocation6], 8192
        $region64: #{tpu_custom_call.1} parent=31 // pred_fallthru
          _
      $region32: #{tpu_custom_call.1} parent=5 // pred_fallthru
        _
      %p4140 = scmp.le.s32.totalorder 2, %s13
      // Predicated region
      $region65: #{tpu_custom_call.1} parent=5 // pred_check
        %p4141 = pneg %p4140
      $region66: #{tpu_custom_call.1} parent=5 // pred_check_branch
        %4143 = sbr.rel (%p4141) target = $region68
      $region67: #{tpu_custom_call.1} parent=5 // pred_region
        %s4144 = ssub.s32 %s13, 2
      $region68: #{tpu_custom_call.1} parent=5 // pred_fallthru
        _
    $region6: #{tpu_custom_call.1} parent=1 // loop_footer
      %s17 = sadd.s32 1, %s13
    $region7: #{tpu_custom_call.1} parent=1 // loop_footer_branch
      %12 = sbr.rel target = $region3
    $region8: #{tpu_custom_call.1} parent=1 // loop_exit
      _
    %4145 = vsyncpa [#allocation5], 1
    %s4146 = scalar_lea.sflag [#allocation5], 1
    %4147 = vsyncpa %s4146, 1
    %4148 = vsyncpa [#allocation10], 1
    %4149 = vsyncpa [#allocation6], 1
    %s4150 = scalar_lea.sflag [#allocation6], 1
    %4151 = vsyncpa %s4150, 1
    %4152 = vsyncpa [#allocation7], 1
    %s4153 = scalar_lea.sflag [#allocation7], 1
    %4154 = vsyncpa %s4153, 1

</llo_original>
